<compile_context>
chip_gen: v7x
topology: tpu7x:2x2x1
jax: 0.10.0
libtpu: 0.0.40
codegen_flags: <defaults>
</compile_context>

<pallas_src>
import functools
import math

import numpy as np
import jax
import jax.numpy as jnp
from jax import lax
from jax.experimental import pallas as pl
from jax.experimental.pallas import tpu as pltpu


def _round_up(x, m):
    return ((x + m - 1) // m) * m


def _linear_upsample(x, scale):
    """F.interpolate(x, scale_factor=scale, mode='linear', align_corners=False).

    x: (N, C, L) -> (N, C, L*scale).  Tiny ((N,1,L)->(N,1,T)); done in plain JAX.
    """
    _, _, L = x.shape
    T = L * scale
    pos = (jnp.arange(T, dtype=jnp.float32) + 0.5) / scale - 0.5
    pos = jnp.maximum(pos, 0.0)
    i0 = jnp.minimum(jnp.floor(pos).astype(jnp.int32), L - 1)
    i1 = jnp.minimum(i0 + 1, L - 1)
    w = pos - i0.astype(jnp.float32)
    return x[:, :, i0] * (1.0 - w) + x[:, :, i1] * w


# ----------------------------------------------------------------------------
# Pallas kernel
# ----------------------------------------------------------------------------
def _harmonic_kernel(f0_ref, rstart_ref, noise_ref, phi_ref, w_ref, o_ref, *,
                     sample_rate, min_frequency, noise_scale, num_harmonics):
    # f0_ref:     (R, 128)    f32   upsampled f0; time = rows x 128 lanes
    # rstart_ref: (R, 1)      f32   exclusive per-row phase start, mod 1
    # noise_ref:  (H, R, 128) bf16  gaussian noise
    # phi_ref:    (H,)        f32   SMEM: random initial phase per harmonic
    # w_ref:      (H,)        f32   SMEM: softmax(weights)
    # o_ref:      (R, 128)    f32   summed source signal
    f0 = f0_ref[...]                                     # (R, 128)

    # --- within-row (128-sample) inclusive prefix sum on the MXU -------------
    # bf16 hi/lo split keeps the result f32-accurate regardless of how the
    # f32 matmul is decomposed on the MXU.
    inc = f0 * (1.0 / sample_rate)                       # (R, 128)
    inc_hi = inc.astype(jnp.bfloat16).astype(jnp.float32)
    inc_lo = inc - inc_hi
    row = lax.broadcasted_iota(jnp.int32, (128, 128), 0)
    col = lax.broadcasted_iota(jnp.int32, (128, 128), 1)
    tri = (row <= col).astype(jnp.float32)               # inclusive prefix operator
    within = (jnp.dot(inc_hi, tri, preferred_element_type=jnp.float32)
              + jnp.dot(inc_lo, tri, preferred_element_type=jnp.float32))

    base = within + rstart_ref[...]                      # (R,128) + (R,1)
    base = base - jnp.floor(base)                        # mod 1; exact for integer harmonics

    voiced = f0 >= min_frequency
    vmask = voiced.astype(jnp.float32)                   # (R, 128)
    # source = vmask*sin + noise*coef  with  coef = vmask ? 2*ns : 0.333
    ncoef = jnp.where(voiced, 2.0 * noise_scale, 0.333)  # (R, 128)

    two_pi = 2.0 * math.pi
    sin_acc = None
    noise_acc = None
    for h in range(num_harmonics):
        w_h = w_ref[h]
        # sin(2*pi*((h+1)*base + phi_h)) == sin(2*pi*(((h+1)*integ + phi_h) % 1))
        ang = (two_pi * (h + 1)) * base + (two_pi * phi_ref[h])
        s_term = w_h * jnp.sin(ang)
        n_term = w_h * noise_ref[h].astype(jnp.float32)
        sin_acc = s_term if sin_acc is None else sin_acc + s_term
        noise_acc = n_term if noise_acc is None else noise_acc + n_term

    o_ref[...] = (vmask * sin_acc + ncoef * noise_acc).astype(o_ref.dtype)


def harmonic_oscillator_pallas(f0, weights, phi, noise, *, sample_rate=24000,
                               frame_size=480, min_frequency=20.0,
                               noise_scale=0.03, tile_t=32768):
    """f0: (N,1,L) frame-rate pitch [Hz].  weights: (1,H,1) module parameter.
    phi: (1,H,1) uniform [0,1) phases.  noise: (N,H,L*frame_size) gaussian
    (bf16 recommended).  Returns (N, 1, L*frame_size) float32."""
    N, _, L = f0.shape
    H = noise.shape[1]
    T = L * frame_size
    assert noise.shape == (N, H, T), noise.shape

    # Effective time tile: multiple of 1024 (so R = tile_t/128 is a multiple
    # of 8 and every (R,128) block tiles perfectly into (8,128) vregs),
    # clamped to the (rounded-up) signal length.
    tile_t = max(1024, _round_up(min(tile_t, _round_up(T, 1024)), 1024))
    t_pad = _round_up(T, tile_t)
    n_t = t_pad // tile_t
    R = tile_t // 128
    n_rows = t_pad // 128

    # Frame-rate -> sample-rate upsample (tiny); everything downstream is fused
    # in the Pallas kernel so no (N, H, T) intermediate ever hits HBM.
    f0_up = _linear_upsample(f0.astype(jnp.float32), frame_size)      # (N,1,T)
    if t_pad != T:
        # Padded tail: f0=0 -> unvoiced, noise=0 -> zero output; phase only
        # flows forward, so real samples are unaffected; tail sliced off below.
        f0_up = jnp.pad(f0_up, ((0, 0), (0, 0), (0, t_pad - T)))
        noise = jnp.pad(noise, ((0, 0), (0, 0), (0, t_pad - T)))

    # Per-128-sample-row exclusive phase starts (mod 1), precomputed once in
    # plain JAX (t_pad/128 scalars per batch).  This removes the in-kernel
    # carry so both grid axes can be "parallel".
    f0_rows = f0_up.reshape(N, n_rows, 128)
    row_sums = jnp.sum(f0_rows, axis=-1) * (1.0 / sample_rate)        # (N, n_rows)
    row_starts = jnp.cumsum(row_sums, axis=-1) - row_sums             # exclusive
    row_starts = row_starts - jnp.floor(row_starts)                   # mod 1 (exact)

    # Free host-side reshapes to the lane-dense (rows x 128) layout.
    f0_k = f0_up.reshape(N, n_t, R, 128)
    rstart_k = row_starts.reshape(N, n_t, R, 1)
    noise_k = noise.reshape(N * H, n_t, R, 128)
    phi_k = phi.astype(jnp.float32).reshape(H)
    w_k = jax.nn.softmax(weights.astype(jnp.float32), axis=1).reshape(H)

    kernel = functools.partial(
        _harmonic_kernel,
        sample_rate=float(sample_rate),
        min_frequency=float(min_frequency),
        noise_scale=float(noise_scale),
        num_harmonics=H)

    out = pl.pallas_call(
        kernel,
        out_shape=jax.ShapeDtypeStruct((N, n_t, R, 128), jnp.float32),
        grid_spec=pltpu.PrefetchScalarGridSpec(
            num_scalar_prefetch=0,
            grid=(N, n_t),
            in_specs=[
                pl.BlockSpec((None, None, R, 128), lambda n, t: (n, t, 0, 0)),
                pl.BlockSpec((None, None, R, 1), lambda n, t: (n, t, 0, 0)),
                pl.BlockSpec((H, None, R, 128), lambda n, t: (n, t, 0, 0)),
                pl.BlockSpec(memory_space=pltpu.MemorySpace.SMEM),
                pl.BlockSpec(memory_space=pltpu.MemorySpace.SMEM),
            ],
            out_specs=pl.BlockSpec((None, None, R, 128), lambda n, t: (n, t, 0, 0)),
        ),
        compiler_params=pltpu.CompilerParams(
            # no cross-tile carry anymore -> both axes parallel (megacore/v7x)
            dimension_semantics=("parallel", "parallel"),
            vmem_limit_bytes=32 * 1024 * 1024,
        ),
    )(f0_k, rstart_k, noise_k, phi_k, w_k)

    return out.reshape(N, 1, t_pad)[:, :, :T]


# ----------------------------------------------------------------------------
# float64 NumPy reference (mirrors the PyTorch forward) for verification
# ----------------------------------------------------------------------------
def harmonic_oscillator_ref_np(f0, weights, phi, noise, *, sample_rate=24000,
                               frame_size=480, min_frequency=20.0,
                               noise_scale=0.03):
    f0 = np.asarray(f0, np.float64)
    noise = np.asarray(noise, np.float64)
    phi = np.asarray(phi, np.float64)
    weights = np.asarray(weights, np.float64)
    N, _, L = f0.shape
    H = noise.shape[1]
    T = L * frame_size
    pos = (np.arange(T, dtype=np.float64) + 0.5) / frame_size - 0.5
    pos = np.maximum(pos, 0.0)
    i0 = np.minimum(np.floor(pos).astype(np.int64), L - 1)
    i1 = np.minimum(i0 + 1, L - 1)
    w = pos - i0
    f0_up = f0[:, :, i0] * (1.0 - w) + f0[:, :, i1] * w               # (N,1,T)
    vmask = (f0_up >= min_frequency).astype(np.float64)
    mul = (np.arange(H, dtype=np.float64) + 1.0).reshape(1, H, 1)
    integ = np.cumsum(f0_up * mul / sample_rate, axis=2)
    rad = 2.0 * np.pi * ((integ + phi) % 1.0)
    harmonics = np.sin(rad) * vmask + noise * noise_scale
    voiced_part = harmonics + noise * noise_scale
    unvoiced_part = noise * 0.333
    source = voiced_part * vmask + unvoiced_part * (1.0 - vmask)
    wts = np.exp(weights - weights.max(axis=1, keepdims=True))
    wts = wts / wts.sum(axis=1, keepdims=True)                        # softmax
    return np.sum(source * wts, axis=1, keepdims=True)


# ----------------------------------------------------------------------------
if __name__ == "__main__":
    SAMPLE_RATE = 24000
    FRAME_SIZE = 480
    NUM_HARMONICS = 8
    MIN_FREQUENCY = 20.0
    NOISE_SCALE = 0.03

    N, L = 2, 8                       # batch, f0 frames
    T = L * FRAME_SIZE                # 3840 output samples

    key = jax.random.PRNGKey(0)
    kf, kphi, kn = jax.random.split(key, 3)

    # Frame-rate f0 in Hz; mix of voiced and (< min_frequency) unvoiced frames.
    f0 = jax.random.uniform(kf, (N, 1, L), jnp.float32, minval=0.0, maxval=200.0)
    weights = jnp.ones((1, NUM_HARMONICS, 1), jnp.float32)            # module init
    phi = jax.random.uniform(kphi, (1, NUM_HARMONICS, 1), jnp.float32)
    noise_bf16 = jax.random.normal(
        kn, (N, NUM_HARMONICS, T), jnp.float32).astype(jnp.bfloat16)

    out = harmonic_oscillator_pallas(
        f0, weights, phi, noise_bf16,
        sample_rate=SAMPLE_RATE, frame_size=FRAME_SIZE,
        min_frequency=MIN_FREQUENCY, noise_scale=NOISE_SCALE)
    out = jax.block_until_ready(out)

    ref = harmonic_oscillator_ref_np(
        np.asarray(f0), np.asarray(weights), np.asarray(phi),
        np.asarray(noise_bf16.astype(jnp.float32)),   # same bf16-rounded noise
        sample_rate=SAMPLE_RATE, frame_size=FRAME_SIZE,
        min_frequency=MIN_FREQUENCY, noise_scale=NOISE_SCALE)

    out_np = np.asarray(out)
    assert out_np.shape == (N, 1, T)
    # Tight tolerance against a float64 reference (per review): remaining
    # differences are f32 phase-accumulation rounding and TPU sin accuracy.
    np.testing.assert_allclose(out_np, ref, rtol=0, atol=5e-3)
    print("KERNEL_OK")
</pallas_src>

<mosaic_0001>
module attributes {stable_mosaic.version = 11 : i64} {
  func.func @_harmonic_kernel(%arg0: i32, %arg1: i32, %arg2: memref<1x1x32x128xf32, #tpu.memory_space<vmem>>, %arg3: memref<1x1x32x1xf32, #tpu.memory_space<vmem>>, %arg4: memref<8x1x32x128xbf16, #tpu.memory_space<vmem>>, %arg5: memref<8xf32, #tpu.memory_space<smem>>, %arg6: memref<8xf32, #tpu.memory_space<smem>>, %arg7: memref<1x1x32x128xf32, #tpu.memory_space<vmem>>) attributes {dimension_semantics = [#tpu.dimension_semantics<parallel>, #tpu.dimension_semantics<parallel>], iteration_bounds = array<i64: 2, 1>, scalar_prefetch = 0 : i64, scratch_operands = 0 : i64, tpu.core_type = #tpu.core_type<tc>, window_params = [{transform_indices = @transform_0, window_bounds = array<i64: 1, 1, 32, 128>}, {transform_indices = @transform_1, window_bounds = array<i64: 1, 1, 32, 1>}, {transform_indices = @transform_2, window_bounds = array<i64: 8, 1, 32, 128>}, {transform_indices = @transform_3, window_bounds = array<i64: 8>}, {transform_indices = @transform_4, window_bounds = array<i64: 8>}, {transform_indices = @transform_5, window_bounds = array<i64: 1, 1, 32, 128>}]} {
    %c0 = arith.constant 0 : index
    %c0_0 = arith.constant 0 : index
    %c0_1 = arith.constant 0 : index
    %c0_2 = arith.constant 0 : index
    %0 = vector.load %arg2[%c0, %c0_0, %c0_1, %c0_2] : memref<1x1x32x128xf32, #tpu.memory_space<vmem>>, vector<1x1x32x128xf32>
    %1 = vector.shape_cast %0 : vector<1x1x32x128xf32> to vector<32x128xf32>
    %cst = arith.constant 4.16666662E-5 : f32
    %2 = vector.broadcast %cst : f32 to vector<32x128xf32>
    %3 = arith.mulf %1, %2 : vector<32x128xf32>
    %4 = arith.truncf %3 : vector<32x128xf32> to vector<32x128xbf16>
    %5 = arith.extf %4 : vector<32x128xbf16> to vector<32x128xf32>
    %6 = arith.subf %3, %5 : vector<32x128xf32>
    %7 = tpu.iota {dimensions = array<i32: 0>} : vector<128x128xi32>
    %8 = tpu.iota {dimensions = array<i32: 1>} : vector<128x128xi32>
    %9 = arith.cmpi sle, %7, %8 : vector<128x128xi32>
    %10 = arith.extui %9 : vector<128x128xi1> to vector<128x128xi32>
    %11 = arith.sitofp %10 : vector<128x128xi32> to vector<128x128xf32>
    %cst_3 = arith.constant dense<0.000000e+00> : vector<32x128xf32>
    %12 = tpu.matmul %5, %11, %cst_3 {dimension_numbers = #tpu.dot_dimension_numbers<[1], [0], [0], [1], [0, 0, 1, 1], [], []>} : vector<32x128xf32>, vector<128x128xf32>, vector<32x128xf32> -> vector<32x128xf32>
    %cst_4 = arith.constant dense<0.000000e+00> : vector<32x128xf32>
    %13 = tpu.matmul %6, %11, %cst_4 {dimension_numbers = #tpu.dot_dimension_numbers<[1], [0], [0], [1], [0, 0, 1, 1], [], []>} : vector<32x128xf32>, vector<128x128xf32>, vector<32x128xf32> -> vector<32x128xf32>
    %14 = arith.addf %12, %13 : vector<32x128xf32>
    %c0_5 = arith.constant 0 : index
    %c0_6 = arith.constant 0 : index
    %c0_7 = arith.constant 0 : index
    %c0_8 = arith.constant 0 : index
    %15 = vector.load %arg3[%c0_5, %c0_6, %c0_7, %c0_8] : memref<1x1x32x1xf32, #tpu.memory_space<vmem>>, vector<1x1x32x1xf32>
    %16 = vector.shape_cast %15 : vector<1x1x32x1xf32> to vector<32x1xf32>
    %17 = vector.broadcast %16 : vector<32x1xf32> to vector<32x128xf32>
    %18 = arith.addf %14, %17 : vector<32x128xf32>
    %19 = math.floor %18 : vector<32x128xf32>
    %20 = arith.subf %18, %19 : vector<32x128xf32>
    %cst_9 = arith.constant 2.000000e+01 : f32
    %21 = vector.broadcast %cst_9 : f32 to vector<32x128xf32>
    %22 = arith.cmpf oge, %1, %21 : vector<32x128xf32>
    %23 = arith.extui %22 : vector<32x128xi1> to vector<32x128xi32>
    %24 = arith.sitofp %23 : vector<32x128xi32> to vector<32x128xf32>
    %cst_10 = arith.constant 6.000000e-02 : f32
    %cst_11 = arith.constant 3.330000e-01 : f32
    %25 = vector.broadcast %cst_10 : f32 to vector<32x128xf32>
    %26 = vector.broadcast %cst_11 : f32 to vector<32x128xf32>
    %27 = arith.select %22, %25, %26 : vector<32x128xi1>, vector<32x128xf32>
    %c0_12 = arith.constant 0 : index
    %28 = memref.load %arg6[%c0_12] : memref<8xf32, #tpu.memory_space<smem>>
    %cst_13 = arith.constant 6.28318548 : f32
    %29 = vector.broadcast %cst_13 : f32 to vector<32x128xf32>
    %30 = arith.mulf %29, %20 : vector<32x128xf32>
    %c0_14 = arith.constant 0 : index
    %31 = memref.load %arg5[%c0_14] : memref<8xf32, #tpu.memory_space<smem>>
    %cst_15 = arith.constant 6.28318548 : f32
    %32 = arith.mulf %cst_15, %31 : f32
    %33 = vector.broadcast %32 : f32 to vector<32x128xf32>
    %34 = arith.addf %30, %33 : vector<32x128xf32>
    %35 = math.sin %34 : vector<32x128xf32>
    %36 = vector.broadcast %28 : f32 to vector<32x128xf32>
    %37 = arith.mulf %36, %35 : vector<32x128xf32>
    %c0_16 = arith.constant 0 : index
    %c0_17 = arith.constant 0 : index
    %c0_18 = arith.constant 0 : index
    %c0_19 = arith.constant 0 : index
    %38 = vector.load %arg4[%c0_16, %c0_17, %c0_18, %c0_19] : memref<8x1x32x128xbf16, #tpu.memory_space<vmem>>, vector<1x1x32x128xbf16>
    %39 = vector.shape_cast %38 : vector<1x1x32x128xbf16> to vector<32x128xbf16>
    %40 = arith.extf %39 : vector<32x128xbf16> to vector<32x128xf32>
    %41 = vector.broadcast %28 : f32 to vector<32x128xf32>
    %42 = arith.mulf %41, %40 : vector<32x128xf32>
    %c1 = arith.constant 1 : index
    %43 = memref.load %arg6[%c1] : memref<8xf32, #tpu.memory_space<smem>>
    %cst_20 = arith.constant 12.566371 : f32
    %44 = vector.broadcast %cst_20 : f32 to vector<32x128xf32>
    %45 = arith.mulf %44, %20 : vector<32x128xf32>
    %c1_21 = arith.constant 1 : index
    %46 = memref.load %arg5[%c1_21] : memref<8xf32, #tpu.memory_space<smem>>
    %cst_22 = arith.constant 6.28318548 : f32
    %47 = arith.mulf %cst_22, %46 : f32
    %48 = vector.broadcast %47 : f32 to vector<32x128xf32>
    %49 = arith.addf %45, %48 : vector<32x128xf32>
    %50 = math.sin %49 : vector<32x128xf32>
    %51 = vector.broadcast %43 : f32 to vector<32x128xf32>
    %52 = arith.mulf %51, %50 : vector<32x128xf32>
    %c1_23 = arith.constant 1 : index
    %c0_24 = arith.constant 0 : index
    %c0_25 = arith.constant 0 : index
    %c0_26 = arith.constant 0 : index
    %53 = vector.load %arg4[%c1_23, %c0_24, %c0_25, %c0_26] : memref<8x1x32x128xbf16, #tpu.memory_space<vmem>>, vector<1x1x32x128xbf16>
    %54 = vector.shape_cast %53 : vector<1x1x32x128xbf16> to vector<32x128xbf16>
    %55 = arith.extf %54 : vector<32x128xbf16> to vector<32x128xf32>
    %56 = vector.broadcast %43 : f32 to vector<32x128xf32>
    %57 = arith.mulf %56, %55 : vector<32x128xf32>
    %58 = arith.addf %37, %52 : vector<32x128xf32>
    %59 = arith.addf %42, %57 : vector<32x128xf32>
    %c2 = arith.constant 2 : index
    %60 = memref.load %arg6[%c2] : memref<8xf32, #tpu.memory_space<smem>>
    %cst_27 = arith.constant 18.849556 : f32
    %61 = vector.broadcast %cst_27 : f32 to vector<32x128xf32>
    %62 = arith.mulf %61, %20 : vector<32x128xf32>
    %c2_28 = arith.constant 2 : index
    %63 = memref.load %arg5[%c2_28] : memref<8xf32, #tpu.memory_space<smem>>
    %cst_29 = arith.constant 6.28318548 : f32
    %64 = arith.mulf %cst_29, %63 : f32
    %65 = vector.broadcast %64 : f32 to vector<32x128xf32>
    %66 = arith.addf %62, %65 : vector<32x128xf32>
    %67 = math.sin %66 : vector<32x128xf32>
    %68 = vector.broadcast %60 : f32 to vector<32x128xf32>
    %69 = arith.mulf %68, %67 : vector<32x128xf32>
    %c2_30 = arith.constant 2 : index
    %c0_31 = arith.constant 0 : index
    %c0_32 = arith.constant 0 : index
    %c0_33 = arith.constant 0 : index
    %70 = vector.load %arg4[%c2_30, %c0_31, %c0_32, %c0_33] : memref<8x1x32x128xbf16, #tpu.memory_space<vmem>>, vector<1x1x32x128xbf16>
    %71 = vector.shape_cast %70 : vector<1x1x32x128xbf16> to vector<32x128xbf16>
    %72 = arith.extf %71 : vector<32x128xbf16> to vector<32x128xf32>
    %73 = vector.broadcast %60 : f32 to vector<32x128xf32>
    %74 = arith.mulf %73, %72 : vector<32x128xf32>
    %75 = arith.addf %58, %69 : vector<32x128xf32>
    %76 = arith.addf %59, %74 : vector<32x128xf32>
    %c3 = arith.constant 3 : index
    %77 = memref.load %arg6[%c3] : memref<8xf32, #tpu.memory_space<smem>>
    %cst_34 = arith.constant 25.1327419 : f32
    %78 = vector.broadcast %cst_34 : f32 to vector<32x128xf32>
    %79 = arith.mulf %78, %20 : vector<32x128xf32>
    %c3_35 = arith.constant 3 : index
    %80 = memref.load %arg5[%c3_35] : memref<8xf32, #tpu.memory_space<smem>>
    %cst_36 = arith.constant 6.28318548 : f32
    %81 = arith.mulf %cst_36, %80 : f32
    %82 = vector.broadcast %81 : f32 to vector<32x128xf32>
    %83 = arith.addf %79, %82 : vector<32x128xf32>
    %84 = math.sin %83 : vector<32x128xf32>
    %85 = vector.broadcast %77 : f32 to vector<32x128xf32>
    %86 = arith.mulf %85, %84 : vector<32x128xf32>
    %c3_37 = arith.constant 3 : index
    %c0_38 = arith.constant 0 : index
    %c0_39 = arith.constant 0 : index
    %c0_40 = arith.constant 0 : index
    %87 = vector.load %arg4[%c3_37, %c0_38, %c0_39, %c0_40] : memref<8x1x32x128xbf16, #tpu.memory_space<vmem>>, vector<1x1x32x128xbf16>
    %88 = vector.shape_cast %87 : vector<1x1x32x128xbf16> to vector<32x128xbf16>
    %89 = arith.extf %88 : vector<32x128xbf16> to vector<32x128xf32>
    %90 = vector.broadcast %77 : f32 to vector<32x128xf32>
    %91 = arith.mulf %90, %89 : vector<32x128xf32>
    %92 = arith.addf %75, %86 : vector<32x128xf32>
    %93 = arith.addf %76, %91 : vector<32x128xf32>
    %c4 = arith.constant 4 : index
    %94 = memref.load %arg6[%c4] : memref<8xf32, #tpu.memory_space<smem>>
    %cst_41 = arith.constant 31.415926 : f32
    %95 = vector.broadcast %cst_41 : f32 to vector<32x128xf32>
    %96 = arith.mulf %95, %20 : vector<32x128xf32>
    %c4_42 = arith.constant 4 : index
    %97 = memref.load %arg5[%c4_42] : memref<8xf32, #tpu.memory_space<smem>>
    %cst_43 = arith.constant 6.28318548 : f32
    %98 = arith.mulf %cst_43, %97 : f32
    %99 = vector.broadcast %98 : f32 to vector<32x128xf32>
    %100 = arith.addf %96, %99 : vector<32x128xf32>
    %101 = math.sin %100 : vector<32x128xf32>
    %102 = vector.broadcast %94 : f32 to vector<32x128xf32>
    %103 = arith.mulf %102, %101 : vector<32x128xf32>
    %c4_44 = arith.constant 4 : index
    %c0_45 = arith.constant 0 : index
    %c0_46 = arith.constant 0 : index
    %c0_47 = arith.constant 0 : index
    %104 = vector.load %arg4[%c4_44, %c0_45, %c0_46, %c0_47] : memref<8x1x32x128xbf16, #tpu.memory_space<vmem>>, vector<1x1x32x128xbf16>
    %105 = vector.shape_cast %104 : vector<1x1x32x128xbf16> to vector<32x128xbf16>
    %106 = arith.extf %105 : vector<32x128xbf16> to vector<32x128xf32>
    %107 = vector.broadcast %94 : f32 to vector<32x128xf32>
    %108 = arith.mulf %107, %106 : vector<32x128xf32>
    %109 = arith.addf %92, %103 : vector<32x128xf32>
    %110 = arith.addf %93, %108 : vector<32x128xf32>
    %c5 = arith.constant 5 : index
    %111 = memref.load %arg6[%c5] : memref<8xf32, #tpu.memory_space<smem>>
    %cst_48 = arith.constant 37.6991119 : f32
    %112 = vector.broadcast %cst_48 : f32 to vector<32x128xf32>
    %113 = arith.mulf %112, %20 : vector<32x128xf32>
    %c5_49 = arith.constant 5 : index
    %114 = memref.load %arg5[%c5_49] : memref<8xf32, #tpu.memory_space<smem>>
    %cst_50 = arith.constant 6.28318548 : f32
    %115 = arith.mulf %cst_50, %114 : f32
    %116 = vector.broadcast %115 : f32 to vector<32x128xf32>
    %117 = arith.addf %113, %116 : vector<32x128xf32>
    %118 = math.sin %117 : vector<32x128xf32>
    %119 = vector.broadcast %111 : f32 to vector<32x128xf32>
    %120 = arith.mulf %119, %118 : vector<32x128xf32>
    %c5_51 = arith.constant 5 : index
    %c0_52 = arith.constant 0 : index
    %c0_53 = arith.constant 0 : index
    %c0_54 = arith.constant 0 : index
    %121 = vector.load %arg4[%c5_51, %c0_52, %c0_53, %c0_54] : memref<8x1x32x128xbf16, #tpu.memory_space<vmem>>, vector<1x1x32x128xbf16>
    %122 = vector.shape_cast %121 : vector<1x1x32x128xbf16> to vector<32x128xbf16>
    %123 = arith.extf %122 : vector<32x128xbf16> to vector<32x128xf32>
    %124 = vector.broadcast %111 : f32 to vector<32x128xf32>
    %125 = arith.mulf %124, %123 : vector<32x128xf32>
    %126 = arith.addf %109, %120 : vector<32x128xf32>
    %127 = arith.addf %110, %125 : vector<32x128xf32>
    %c6 = arith.constant 6 : index
    %128 = memref.load %arg6[%c6] : memref<8xf32, #tpu.memory_space<smem>>
    %cst_55 = arith.constant 43.982296 : f32
    %129 = vector.broadcast %cst_55 : f32 to vector<32x128xf32>
    %130 = arith.mulf %129, %20 : vector<32x128xf32>
    %c6_56 = arith.constant 6 : index
    %131 = memref.load %arg5[%c6_56] : memref<8xf32, #tpu.memory_space<smem>>
    %cst_57 = arith.constant 6.28318548 : f32
    %132 = arith.mulf %cst_57, %131 : f32
    %133 = vector.broadcast %132 : f32 to vector<32x128xf32>
    %134 = arith.addf %130, %133 : vector<32x128xf32>
    %135 = math.sin %134 : vector<32x128xf32>
    %136 = vector.broadcast %128 : f32 to vector<32x128xf32>
    %137 = arith.mulf %136, %135 : vector<32x128xf32>
    %c6_58 = arith.constant 6 : index
    %c0_59 = arith.constant 0 : index
    %c0_60 = arith.constant 0 : index
    %c0_61 = arith.constant 0 : index
    %138 = vector.load %arg4[%c6_58, %c0_59, %c0_60, %c0_61] : memref<8x1x32x128xbf16, #tpu.memory_space<vmem>>, vector<1x1x32x128xbf16>
    %139 = vector.shape_cast %138 : vector<1x1x32x128xbf16> to vector<32x128xbf16>
    %140 = arith.extf %139 : vector<32x128xbf16> to vector<32x128xf32>
    %141 = vector.broadcast %128 : f32 to vector<32x128xf32>
    %142 = arith.mulf %141, %140 : vector<32x128xf32>
    %143 = arith.addf %126, %137 : vector<32x128xf32>
    %144 = arith.addf %127, %142 : vector<32x128xf32>
    %c7 = arith.constant 7 : index
    %145 = memref.load %arg6[%c7] : memref<8xf32, #tpu.memory_space<smem>>
    %cst_62 = arith.constant 50.2654839 : f32
    %146 = vector.broadcast %cst_62 : f32 to vector<32x128xf32>
    %147 = arith.mulf %146, %20 : vector<32x128xf32>
    %c7_63 = arith.constant 7 : index
    %148 = memref.load %arg5[%c7_63] : memref<8xf32, #tpu.memory_space<smem>>
    %cst_64 = arith.constant 6.28318548 : f32
    %149 = arith.mulf %cst_64, %148 : f32
    %150 = vector.broadcast %149 : f32 to vector<32x128xf32>
    %151 = arith.addf %147, %150 : vector<32x128xf32>
    %152 = math.sin %151 : vector<32x128xf32>
    %153 = vector.broadcast %145 : f32 to vector<32x128xf32>
    %154 = arith.mulf %153, %152 : vector<32x128xf32>
    %c7_65 = arith.constant 7 : index
    %c0_66 = arith.constant 0 : index
    %c0_67 = arith.constant 0 : index
    %c0_68 = arith.constant 0 : index
    %155 = vector.load %arg4[%c7_65, %c0_66, %c0_67, %c0_68] : memref<8x1x32x128xbf16, #tpu.memory_space<vmem>>, vector<1x1x32x128xbf16>
    %156 = vector.shape_cast %155 : vector<1x1x32x128xbf16> to vector<32x128xbf16>
    %157 = arith.extf %156 : vector<32x128xbf16> to vector<32x128xf32>
    %158 = vector.broadcast %145 : f32 to vector<32x128xf32>
    %159 = arith.mulf %158, %157 : vector<32x128xf32>
    %160 = arith.addf %143, %154 : vector<32x128xf32>
    %161 = arith.addf %144, %159 : vector<32x128xf32>
    %162 = arith.mulf %24, %160 : vector<32x128xf32>
    %163 = arith.mulf %27, %161 : vector<32x128xf32>
    %164 = arith.addf %162, %163 : vector<32x128xf32>
    %c0_69 = arith.constant 0 : index
    %c0_70 = arith.constant 0 : index
    %c0_71 = arith.constant 0 : index
    %c0_72 = arith.constant 0 : index
    %165 = vector.load %arg7[%c0_69, %c0_70, %c0_71, %c0_72] : memref<1x1x32x128xf32, #tpu.memory_space<vmem>>, vector<1x1x32x128xf32>
    %166 = vector.shape_cast %165 : vector<1x1x32x128xf32> to vector<32x128xf32>
    %167 = vector.shape_cast %164 : vector<32x128xf32> to vector<1x1x32x128xf32>
    tpu.vector_store %arg7[%c0_69, %c0_70, %c0_71, %c0_72], %167 {strides = array<i32>} : memref<1x1x32x128xf32, #tpu.memory_space<vmem>>, vector<1x1x32x128xf32>,
    return
  }
  func.func @transform_0(%arg0: i32, %arg1: i32) -> (i32, i32, i32, i32) {
    %c0_i32 = arith.constant 0 : i32
    %c0_i32_0 = arith.constant 0 : i32
    %c0_i32_1 = arith.constant 0 : i32
    return %arg0, %arg1, %c0_i32, %c0_i32_0 : i32, i32, i32, i32
  }
  func.func @transform_1(%arg0: i32, %arg1: i32) -> (i32, i32, i32, i32) {
    %c0_i32 = arith.constant 0 : i32
    %c0_i32_0 = arith.constant 0 : i32
    %c0_i32_1 = arith.constant 0 : i32
    return %arg0, %arg1, %c0_i32, %c0_i32_0 : i32, i32, i32, i32
  }
  func.func @transform_2(%arg0: i32, %arg1: i32) -> (i32, i32, i32, i32) {
    %c0_i32 = arith.constant 0 : i32
    %c0_i32_0 = arith.constant 0 : i32
    %c0_i32_1 = arith.constant 0 : i32
    return %arg0, %arg1, %c0_i32, %c0_i32_0 : i32, i32, i32, i32
  }
  func.func @transform_3(%arg0: i32, %arg1: i32) -> i32 {
    %c0_i32 = arith.constant 0 : i32
    %c0_i32_0 = arith.constant 0 : i32
    return %c0_i32 : i32
  }
  func.func @transform_4(%arg0: i32, %arg1: i32) -> i32 {
    %c0_i32 = arith.constant 0 : i32
    %c0_i32_0 = arith.constant 0 : i32
    return %c0_i32 : i32
  }
  func.func @transform_5(%arg0: i32, %arg1: i32) -> (i32, i32, i32, i32) {
    %c0_i32 = arith.constant 0 : i32
    %c0_i32_0 = arith.constant 0 : i32
    %c0_i32_1 = arith.constant 0 : i32
    return %arg0, %arg1, %c0_i32, %c0_i32_0 : i32, i32, i32, i32
  }
}

</mosaic_0001>

<llo_original>
// kernel: tpu_custom_call.1
$region0: #{tpu_custom_call.1}
  #allocation0 [shape = 'u32[]', space=smem, size = 0x4, offset = 0x4, fixed_abs, tag = 'smem constant byte address 0x4 - core index']
  #allocation1 [shape = 'u32[144,128]{1,0:T(1,128)}', space=vmem, size = 0x12000, scoped, tag = 'internal scratch']
  %s0 = inlined_call_operand.vmem [shape: f32[2,1,32,128], index: 0, kind: input, shape index: {}]
  %s1 = inlined_call_operand.vmem [shape: f32[2,1,32,1], index: 1, kind: input, shape index: {}]
  %s2 = inlined_call_operand.hbm [shape: bf16[16,1,32,128], index: 2, kind: input, shape index: {}]
  %s3 = inlined_call_operand.vmem [shape: f32[8], index: 3, kind: input, shape index: {}]
  %s4 = inlined_call_operand.vmem [shape: f32[8], index: 4, kind: input, shape index: {}]
  %s5 = inlined_call_operand.hbm [shape: f32[2,1,32,128], index: 5, kind: output, shape index: {}]
  %s6 = sld [smem:[#allocation0]]
  $region65: #{tpu_custom_call.1} parent=0
    _
  %s8 = ssub.s32 1, %s6
  %s9 = scalar_select 0, %s8, %s6
  $region1: #{tpu_custom_call.1} parent=0
    #allocation2 [shape = 'u8[131072]{0}', space=vmem, size = 0x20000, scoped, tag = 'input window, operand 2']
    #allocation3 [shape = 's32[2]{0}', space=sflag, size = 0x8, scoped, tag = 'scoped memory for tpu_custom_call.1']
    #allocation4 [shape = 's32[2]{0}', space=sflag, size = 0x8, scoped, tag = 'scoped memory for tpu_custom_call.1']
    #allocation5 [shape = 's32[2]{0}', space=sflag, size = 0x8, scoped, tag = 'scoped memory for tpu_custom_call.1']
    #allocation6 [shape = 'u8[512]{0}', space=smem, size = 0x200, scoped, tag = 'input window, operand 3, single buffered']
    #allocation7 [shape = 'u8[512]{0}', space=smem, size = 0x200, scoped, tag = 'input window, operand 4, single buffered']
    #allocation8 [shape = 's32[1]{0}', space=sflag, size = 0x4, scoped, tag = 'scoped memory for tpu_custom_call.1']
    #allocation9 [shape = 'u8[32768]{0}', space=vmem, size = 0x8000, scoped, tag = 'output window, operand 0']
    %10 = vsyncpa [#allocation3], 0
    %s11 = scalar_lea.sflag [#allocation3], 1
    %12 = vsyncpa %s11, 0
    %13 = vsyncpa [#allocation5], 0
    %14 = vsyncpa [#allocation8], 0
    %15 = vsyncpa [#allocation4], 0
    %s16 = scalar_lea.sflag [#allocation4], 1
    %17 = vsyncpa %s16, 0
    loop: start=0, step=1, limit=4
    $region2: #{tpu_custom_call.1} parent=1 // loop_pre_header
      _
    $region3: #{tpu_custom_call.1} parent=1 // loop_header
      %s19 = sphi 0, %s23
      %p20 = scmp.ge.s32.totalorder %s19, 4
      %s26 = sphi 0, %s38
      %s27 = sphi 0, %s34
      %s28 = sphi 0, %s26
      %s29 = sphi 0, %s27
      %s30 = sphi 0, %s28
      %s31 = sphi 0, %s29
      %s43 = sphi 0, %s45
      %s46 = sphi 0, %s43
      %s47 = sphi 0, %s46
      %s63 = sphi 0, %s47
      %s71 = sphi 0, %s73
      %s74 = sphi 0, %s71
      %s75 = sphi 0, %s74
      %s91 = sphi 0, %s75
      %s99 = sphi 0, %s101
      %s102 = sphi 0, %s99
      %s103 = sphi 0, %s102
      %s119 = sphi 0, %s103
      %s123 = sphi 0, %s123
      %s125 = sphi 0, %s123
      %s126 = sphi 0, %s125
      %s140 = sphi 0, %s126
      %s144 = sphi 0, %s144
      %s146 = sphi 0, %s144
      %s147 = sphi 0, %s146
      %s161 = sphi 0, %s147
      %s169 = sphi 0, %s171
      %s172 = sphi 0, %s169
      %s173 = sphi 0, %s172
      %s189 = sphi 0, %s173
    $region4: #{tpu_custom_call.1} parent=1 // loop_header_branch
      %22 = sbr.rel (%p20) target = $region8
    $region5: #{tpu_custom_call.1} parent=1 // loop_body
      %s24 = ssub.s32 %s19, 1
      %s25 = ssub.s32 %s19, 2
      %s32 = sadd.s32 1, %s27
      %p33 = scmp.ge.s32.totalorder %s32, 1
      %s34 = scalar_select %p33, 0, %s32
      %s35 = sadd.s32 1, %s26
      %s36 = scalar_select %p33, %s35, %s26
      %p37 = scmp.ge.s32.totalorder %s36, 2
      %s38 = scalar_select %p37, 0, %s36
      %s39 = ssub.s32 %s26, %s38
      %s40 = ssub.s32 %s27, %s34
      %s41 = sor.u32 %s39, %s40
      %p42 = scmp.eq.s32.totalorder %s41, 0
      %s44 = sadd.s32 %s43, 1
      %s45 = scalar_select %p42, %s43, %s44
      %p48 = pneg %p42
      %p49 = scmp.eq.s32.totalorder %s19, 1
      %p50 = por %p48, %p49
      %p51 = scmp.ne.s32.totalorder %s43, %s46
      %p52 = scmp.eq.s32.totalorder %s19, 0
      %p53 = por %p51, %p52
      %p54 = scmp.ne.s32.totalorder %s43, %s46
      %p55 = scmp.eq.s32.totalorder %s24, 1
      %p56 = por %p54, %p55
      %p57 = scmp.ne.s32.totalorder %s46, %s47
      %p58 = scmp.eq.s32.totalorder %s24, 0
      %p59 = por %p57, %p58
      %p60 = scmp.ne.s32.totalorder %s46, %s47
      %p61 = scmp.eq.s32.totalorder %s25, 1
      %p62 = por %p60, %p61
      %p64 = scmp.ne.s32.totalorder %s47, %s63
      %p65 = scmp.eq.s32.totalorder %s25, 0
      %p66 = por %p64, %p65
      %s67 = ssub.s32 %s26, %s38
      %s68 = ssub.s32 %s27, %s34
      %s69 = sor.u32 %s67, %s68
      %p70 = scmp.eq.s32.totalorder %s69, 0
      %s72 = sadd.s32 %s71, 1
      %s73 = scalar_select %p70, %s71, %s72
      %p76 = pneg %p70
      %p77 = scmp.eq.s32.totalorder %s19, 1
      %p78 = por %p76, %p77
      %p79 = scmp.ne.s32.totalorder %s71, %s74
      %p80 = scmp.eq.s32.totalorder %s19, 0
      %p81 = por %p79, %p80
      %p82 = scmp.ne.s32.totalorder %s71, %s74
      %p83 = scmp.eq.s32.totalorder %s24, 1
      %p84 = por %p82, %p83
      %p85 = scmp.ne.s32.totalorder %s74, %s75
      %p86 = scmp.eq.s32.totalorder %s24, 0
      %p87 = por %p85, %p86
      %p88 = scmp.ne.s32.totalorder %s74, %s75
      %p89 = scmp.eq.s32.totalorder %s25, 1
      %p90 = por %p88, %p89
      %p92 = scmp.ne.s32.totalorder %s75, %s91
      %p93 = scmp.eq.s32.totalorder %s25, 0
      %p94 = por %p92, %p93
      %s95 = ssub.s32 %s26, %s38
      %s96 = ssub.s32 %s27, %s34
      %s97 = sor.u32 %s95, %s96
      %p98 = scmp.eq.s32.totalorder %s97, 0
      %s100 = sadd.s32 %s99, 1
      %s101 = scalar_select %p98, %s99, %s100
      %p104 = pneg %p98
      %p105 = scmp.eq.s32.totalorder %s19, 1
      %p106 = por %p104, %p105
      %p107 = scmp.ne.s32.totalorder %s99, %s102
      %p108 = scmp.eq.s32.totalorder %s19, 0
      %p109 = por %p107, %p108
      %p110 = scmp.ne.s32.totalorder %s99, %s102
      %p111 = scmp.eq.s32.totalorder %s24, 1
      %p112 = por %p110, %p111
      %p113 = scmp.ne.s32.totalorder %s102, %s103
      %p114 = scmp.eq.s32.totalorder %s24, 0
      %p115 = por %p113, %p114
      %p116 = scmp.ne.s32.totalorder %s102, %s103
      %p117 = scmp.eq.s32.totalorder %s25, 1
      %p118 = por %p116, %p117
      %p120 = scmp.ne.s32.totalorder %s103, %s119
      %p121 = scmp.eq.s32.totalorder %s25, 0
      %p122 = por %p120, %p121
      %s124 = sadd.s32 %s123, 1
      %p127 = scmp.eq.s32.totalorder %s19, 1
      %p128 = scmp.ne.s32.totalorder %s123, %s125
      %p129 = scmp.eq.s32.totalorder %s19, 0
      %p130 = por %p128, %p129
      %p131 = scmp.ne.s32.totalorder %s123, %s125
      %p132 = scmp.eq.s32.totalorder %s24, 1
      %p133 = por %p131, %p132
      %p134 = scmp.ne.s32.totalorder %s125, %s126
      %p135 = scmp.eq.s32.totalorder %s24, 0
      %p136 = por %p134, %p135
      %p137 = scmp.ne.s32.totalorder %s125, %s126
      %p138 = scmp.eq.s32.totalorder %s25, 1
      %p139 = por %p137, %p138
      %p141 = scmp.ne.s32.totalorder %s126, %s140
      %p142 = scmp.eq.s32.totalorder %s25, 0
      %p143 = por %p141, %p142
      %s145 = sadd.s32 %s144, 1
      %p148 = scmp.eq.s32.totalorder %s19, 1
      %p149 = scmp.ne.s32.totalorder %s144, %s146
      %p150 = scmp.eq.s32.totalorder %s19, 0
      %p151 = por %p149, %p150
      %p152 = scmp.ne.s32.totalorder %s144, %s146
      %p153 = scmp.eq.s32.totalorder %s24, 1
      %p154 = por %p152, %p153
      %p155 = scmp.ne.s32.totalorder %s146, %s147
      %p156 = scmp.eq.s32.totalorder %s24, 0
      %p157 = por %p155, %p156
      %p158 = scmp.ne.s32.totalorder %s146, %s147
      %p159 = scmp.eq.s32.totalorder %s25, 1
      %p160 = por %p158, %p159
      %p162 = scmp.ne.s32.totalorder %s147, %s161
      %p163 = scmp.eq.s32.totalorder %s25, 0
      %p164 = por %p162, %p163
      %s165 = ssub.s32 %s26, %s38
      %s166 = ssub.s32 %s27, %s34
      %s167 = sor.u32 %s165, %s166
      %p168 = scmp.eq.s32.totalorder %s167, 0
      %s170 = sadd.s32 %s169, 1
      %s171 = scalar_select %p168, %s169, %s170
      %p174 = pneg %p168
      %p175 = scmp.eq.s32.totalorder %s19, 1
      %p176 = por %p174, %p175
      %p177 = scmp.ne.s32.totalorder %s169, %s172
      %p178 = scmp.eq.s32.totalorder %s19, 0
      %p179 = por %p177, %p178
      %p180 = scmp.ne.s32.totalorder %s169, %s172
      %p181 = scmp.eq.s32.totalorder %s24, 1
      %p182 = por %p180, %p181
      %p183 = scmp.ne.s32.totalorder %s172, %s173
      %p184 = scmp.eq.s32.totalorder %s24, 0
      %p185 = por %p183, %p184
      %p186 = scmp.ne.s32.totalorder %s172, %s173
      %p187 = scmp.eq.s32.totalorder %s25, 1
      %p188 = por %p186, %p187
      %p190 = scmp.ne.s32.totalorder %s173, %s189
      %p191 = scmp.eq.s32.totalorder %s25, 0
      %p192 = por %p190, %p191
      %p193 = scmp.le.s32.totalorder 1, %s19
      %p194 = scmp.lt.s32.totalorder %s19, 3
      %p195 = pnand %p193, %p194
      %p196 = pneg %p195
      // Predicated region
      $region9: #{tpu_custom_call.1} parent=5 // pred_check
        _
      $region10: #{tpu_custom_call.1} parent=5 // pred_check_branch
        %198 = sbr.rel (%p195) target = $region12
      $region11: #{tpu_custom_call.1} parent=5 // pred_region
        %s199 = ssub.s32 %s19, 1
        // Predicated region
        $region13: #{tpu_custom_call.1} parent=11 // pred_check
          %p200 = pneg %p136
        $region14: #{tpu_custom_call.1} parent=11 // pred_check_branch
          %202 = sbr.rel (%p200) target = $region16
        $region15: #{tpu_custom_call.1} parent=11 // pred_region
          %s204 = ssub.s32 16, 16
          %205 = vsyncadd [#allocation5], %s204
          %s207 = sshll.u32 %s3, 4
          %s208 = int_to_ptr.vmem [resolvable:$true] %s207
          %210 = dma.vmem_to_smem %s208, 16, [#allocation6], [#allocation5]
        $region16: #{tpu_custom_call.1} parent=11 // pred_fallthru
          _
        // Predicated region
        $region17: #{tpu_custom_call.1} parent=11 // pred_check
          %p211 = pneg %p157
        $region18: #{tpu_custom_call.1} parent=11 // pred_check_branch
          %213 = sbr.rel (%p211) target = $region20
        $region19: #{tpu_custom_call.1} parent=11 // pred_region
          %s215 = ssub.s32 16, 16
          %216 = vsyncadd [#allocation8], %s215
          %s218 = sshll.u32 %s4, 4
          %s219 = int_to_ptr.vmem [resolvable:$true] %s218
          %221 = dma.vmem_to_smem %s219, 16, [#allocation7], [#allocation8]
        $region20: #{tpu_custom_call.1} parent=11 // pred_fallthru
          _
      $region12: #{tpu_custom_call.1} parent=5 // pred_fallthru
        _
      %p222 = scmp.lt.s32.totalorder %s19, 2
      // Predicated region
      $region21: #{tpu_custom_call.1} parent=5 // pred_check
        %p223 = pneg %p222
      $region22: #{tpu_custom_call.1} parent=5 // pred_check_branch
        %225 = sbr.rel (%p223) target = $region24
      $region23: #{tpu_custom_call.1} parent=5 // pred_region
        // Predicated region
        $region25: #{tpu_custom_call.1} parent=23 // pred_check
          %p226 = pneg %p53
        $region26: #{tpu_custom_call.1} parent=23 // pred_check_branch
          %228 = sbr.rel (%p226) target = $region28
        $region27: #{tpu_custom_call.1} parent=23 // pred_region
          %p229 = scmp.lt.s32.totalorder %s26, 1
          %s230 = scalar_select %p229, %s26, 1
          %p231 = scmp.lt.s32.totalorder %s27, 0
          %s232 = scalar_select %p231, %s27, 0
          %s233 = smul.addr %s232, 4
          %s234 = smul.addr %s230, 4
          %s235 = sadd.s32 %s233, %s234
          %s236 = smul.addr %s235, 8
          %s237 = scalar_lea.vmem %s0, %s236
        $region28: #{tpu_custom_call.1} parent=23 // pred_fallthru
          _
        // Predicated region
        $region29: #{tpu_custom_call.1} parent=23 // pred_check
          %p238 = pneg %p81
        $region30: #{tpu_custom_call.1} parent=23 // pred_check_branch
          %240 = sbr.rel (%p238) target = $region32
        $region31: #{tpu_custom_call.1} parent=23 // pred_region
          %p241 = scmp.lt.s32.totalorder %s26, 1
          %s242 = scalar_select %p241, %s26, 1
          %p243 = scmp.lt.s32.totalorder %s27, 0
          %s244 = scalar_select %p243, %s27, 0
          %s245 = smul.addr %s244, 4
          %s246 = smul.addr %s242, 4
          %s247 = sadd.s32 %s245, %s246
          %s248 = smul.addr %s247, 8
          %s249 = scalar_lea.vmem %s1, %s248
        $region32: #{tpu_custom_call.1} parent=23 // pred_fallthru
          _
        // Predicated region
        $region33: #{tpu_custom_call.1} parent=23 // pred_check
          %p250 = pneg %p109
        $region34: #{tpu_custom_call.1} parent=23 // pred_check_branch
          %252 = sbr.rel (%p250) target = $region36
        $region35: #{tpu_custom_call.1} parent=23 // pred_region
          %s253 = sand.u32 %s99, 1
          %s254 = scalar_lea.sflag [#allocation3], %s253
          %s255 = sand.u32 %s99, 1
          %s256 = smul.addr %s255, 128
          %s257 = scalar_lea.vmem [#allocation2], %s256
          %s258 = smul.u32 8, %s26
          %s260 = ssub.s32 2048, 2048
          %261 = vsyncadd %s254, %s260
          %s262 = smul.addr %s27, 4
          %s263 = smul.addr %s258, 4
          %s264 = sadd.s32 %s262, %s263
          %s265 = smul.addr %s264, 64
          %s266 = scalar_lea.hbm %s2, %s265
          %s267 = sshll.u32 %s257, 4
          %s268 = int_to_ptr.vmem [resolvable:$true] %s267
          %273 = dma.hbm_to_vmem [thread:$0]  %s266, 2048, %s268, %s254, 64, 64, 4
        $region36: #{tpu_custom_call.1} parent=23 // pred_fallthru
          _
      $region24: #{tpu_custom_call.1} parent=5 // pred_fallthru
        _
      %p274 = scmp.le.s32.totalorder 1, %s19
      %p275 = scmp.lt.s32.totalorder %s19, 3
      %p276 = pnand %p274, %p275
      %p277 = pneg %p276
      // Predicated region
      $region37: #{tpu_custom_call.1} parent=5 // pred_check
        _
      $region38: #{tpu_custom_call.1} parent=5 // pred_check_branch
        %279 = sbr.rel (%p276) target = $region40
      $region39: #{tpu_custom_call.1} parent=5 // pred_region
        %s280 = ssub.s32 %s19, 1
        %s281 = sand.u32 %s102, 1
        %s282 = scalar_lea.sflag [#allocation3], %s281
        %s283 = sand.u32 %s102, 1
        %s284 = smul.addr %s283, 128
        %s285 = scalar_lea.vmem [#allocation2], %s284
        // Predicated region
        $region41: #{tpu_custom_call.1} parent=39 // pred_check
          %p286 = pneg %p115
        $region42: #{tpu_custom_call.1} parent=39 // pred_check_branch
          %288 = sbr.rel (%p286) target = $region44
        $region43: #{tpu_custom_call.1} parent=39 // pred_region
          %289 = dma.done %s282, 2048
        $region44: #{tpu_custom_call.1} parent=39 // pred_fallthru
          _
        // Predicated region
        $region45: #{tpu_custom_call.1} parent=39 // pred_check
          %p290 = pneg %p136
        $region46: #{tpu_custom_call.1} parent=39 // pred_check_branch
          %292 = sbr.rel (%p290) target = $region48
        $region47: #{tpu_custom_call.1} parent=39 // pred_region
          %293 = dma.done [#allocation5], 16
        $region48: #{tpu_custom_call.1} parent=39 // pred_fallthru
          _
        // Predicated region
        $region49: #{tpu_custom_call.1} parent=39 // pred_check
          %p294 = pneg %p157
        $region50: #{tpu_custom_call.1} parent=39 // pred_check_branch
          %296 = sbr.rel (%p294) target = $region52
        $region51: #{tpu_custom_call.1} parent=39 // pred_region
          %297 = dma.done [#allocation8], 16
        $region52: #{tpu_custom_call.1} parent=39 // pred_fallthru
          _
        %298 = sfence
        %p299 = scmp.lt.s32.totalorder %s28, 1
        %s300 = scalar_select %p299, %s28, 1
        %p301 = scmp.lt.s32.totalorder %s29, 0
        %s302 = scalar_select %p301, %s29, 0
        %s303 = smul.addr %s302, 4
        %s304 = smul.addr %s300, 4
        %s305 = sadd.s32 %s303, %s304
        %s306 = smul.addr %s305, 8
        %s307 = scalar_lea.vmem %s0, %s306
        %p308 = pneg %p59
        %p309 = pneg %p56
        %p310 = scmp.lt.s32.totalorder %s28, 1
        %s311 = scalar_select %p310, %s28, 1
        %p312 = scmp.lt.s32.totalorder %s29, 0
        %s313 = scalar_select %p312, %s29, 0
        %s314 = smul.addr %s313, 4
        %s315 = smul.addr %s311, 4
        %s316 = sadd.s32 %s314, %s315
        %s317 = smul.addr %s316, 8
        %s318 = scalar_lea.vmem %s1, %s317
        %p319 = pneg %p87
        %p320 = pneg %p84
        %s321 = sand.u32 %s102, 1
        %s322 = scalar_lea.sflag [#allocation3], %s321
        %s323 = sand.u32 %s102, 1
        %s324 = smul.addr %s323, 128
        %s325 = scalar_lea.vmem [#allocation2], %s324
        %p326 = pneg %p115
        %p327 = pneg %p112
        %p328 = pneg %p136
        %p329 = pneg %p133
        %p330 = pneg %p157
        %p331 = pneg %p154
        %p332 = pneg %p185
        %p333 = pneg %p182
        %s334 = sand.u32 %s172, 1
        %s335 = scalar_lea.sflag [#allocation4], %s334
        %s336 = sand.u32 %s172, 1
        %s337 = smul.addr %s336, 32
        %s338 = scalar_lea.vmem [#allocation9], %s337
        %p339 = scmp.lt.s32.totalorder %s28, 1
        %s340 = scalar_select %p339, %s28, 1
        %p341 = scmp.lt.s32.totalorder %s29, 0
        %s342 = scalar_select %p341, %s29, 0
        %s343 = smul.addr %s342, 4
        %s344 = smul.addr %s340, 4
        %s345 = sadd.s32 %s343, %s344
        %s346 = smul.addr %s345, 8
        %s347 = scalar_lea.vmem %s0, %s346
        %p348 = scmp.lt.s32.totalorder %s28, 1
        %s349 = scalar_select %p348, %s28, 1
        %p350 = scmp.lt.s32.totalorder %s29, 0
        %s351 = scalar_select %p350, %s29, 0
        %s352 = smul.addr %s351, 4
        %s353 = smul.addr %s349, 4
        %s354 = sadd.s32 %s352, %s353
        %s355 = smul.addr %s354, 8
        %s356 = scalar_lea.vmem %s1, %s355
        %s357 = smul.u32 8, %s28
        %v358 = vld [vmem:[%s347] sm:$0xff]
        %v359 = vld [vmem:[%s347 + $0x8] sm:$0xff]
        %v360 = vld [vmem:[%s347 + $0x10] sm:$0xff]
        %v361 = vld [vmem:[%s347 + $0x18] sm:$0xff]
        %v362 = vmul.f32 %v358, 4.1666666e-05
        %v363 = vmul.f32 %v359, 4.1666666e-05
        %v364 = vmul.f32 %v360, 4.1666666e-05
        %v365 = vmul.f32 %v361, 4.1666666e-05
        %v366 = vpack.c.bf16 %v363, %v362
        %v367 = vpack.c.bf16 %v365, %v364
        %v368 = vunpack.c.l.bf16 %v366
        %v369 = vunpack.c.h.bf16 %v366
        %v370 = vunpack.c.l.bf16 %v367
        %v371 = vunpack.c.h.bf16 %v367
        %v372 = vsub.f32 %v362, %v368
        %v373 = vsub.f32 %v363, %v369
        %v374 = vsub.f32 %v364, %v370
        %v375 = vsub.f32 %v365, %v371
        %v376 = vlaneseq
        %v377 = vshrl.u32 %v376, 7
        %v378 = vadd.s32 %v377, 8
        %v379 = vadd.s32 %v377, 16
        %v380 = vadd.s32 %v377, 24
        %v381 = vadd.s32 %v377, 32
        %v382 = vadd.s32 %v377, 40
        %v383 = vadd.s32 %v377, 48
        %v384 = vadd.s32 %v377, 56
        %v385 = vadd.s32 %v377, 64
        %v386 = vadd.s32 %v377, 72
        %v387 = vadd.s32 %v377, 80
        %v388 = vadd.s32 %v377, 88
        %v389 = vadd.s32 %v377, 96
        %v390 = vadd.s32 %v377, 104
        %v391 = vadd.s32 %v377, 112
        %v392 = vadd.s32 %v377, 120
        %v393 = vlaneseq
        %v394 = vand.u32 %v393, 127
        %vm395 = vcmp.le.s32.totalorder %v377, %v394
        %vm396 = vcmp.le.s32.totalorder %v378, %v394
        %vm397 = vcmp.le.s32.totalorder %v379, %v394
        %vm398 = vcmp.le.s32.totalorder %v380, %v394
        %vm399 = vcmp.le.s32.totalorder %v381, %v394
        %vm400 = vcmp.le.s32.totalorder %v382, %v394
        %vm401 = vcmp.le.s32.totalorder %v383, %v394
        %vm402 = vcmp.le.s32.totalorder %v384, %v394
        %vm403 = vcmp.le.s32.totalorder %v385, %v394
        %vm404 = vcmp.le.s32.totalorder %v386, %v394
        %vm405 = vcmp.le.s32.totalorder %v387, %v394
        %vm406 = vcmp.le.s32.totalorder %v388, %v394
        %vm407 = vcmp.le.s32.totalorder %v389, %v394
        %vm408 = vcmp.le.s32.totalorder %v390, %v394
        %vm409 = vcmp.le.s32.totalorder %v391, %v394
        %vm410 = vcmp.le.s32.totalorder %v392, %v394
        %v411 = vsel %vm395, 1, 0
        %v412 = vsel %vm396, 1, 0
        %v413 = vsel %vm397, 1, 0
        %v414 = vsel %vm398, 1, 0
        %v415 = vsel %vm399, 1, 0
        %v416 = vsel %vm400, 1, 0
        %v417 = vsel %vm401, 1, 0
        %v418 = vsel %vm402, 1, 0
        %v419 = vsel %vm403, 1, 0
        %v420 = vsel %vm404, 1, 0
        %v421 = vsel %vm405, 1, 0
        %v422 = vsel %vm406, 1, 0
        %v423 = vsel %vm407, 1, 0
        %v424 = vsel %vm408, 1, 0
        %v425 = vsel %vm409, 1, 0
        %v426 = vsel %vm410, 1, 0
        %v427 = vcvt.s32.f32 %v411
        %v428 = vcvt.s32.f32 %v412
        %v429 = vcvt.s32.f32 %v413
        %v430 = vcvt.s32.f32 %v414
        %v431 = vcvt.s32.f32 %v415
        %v432 = vcvt.s32.f32 %v416
        %v433 = vcvt.s32.f32 %v417
        %v434 = vcvt.s32.f32 %v418
        %v435 = vcvt.s32.f32 %v419
        %v436 = vcvt.s32.f32 %v420
        %v437 = vcvt.s32.f32 %v421
        %v438 = vcvt.s32.f32 %v422
        %v439 = vcvt.s32.f32 %v423
        %v440 = vcvt.s32.f32 %v424
        %v441 = vcvt.s32.f32 %v425
        %v442 = vcvt.s32.f32 %v426
        %443 = vmatprep.subr.mxu0 0.0
        %444 = vmatpush1.msra.mxu0 %v427
        %445 = vmatprep.subr.mxu0 0.0
        %446 = vmatpush1.msra.mxu0 %v428
        %447 = vmatprep.subr.mxu0 0.0
        %448 = vmatpush1.msra.mxu0 %v429
        %449 = vmatprep.subr.mxu0 0.0
        %450 = vmatpush1.msra.mxu0 %v430
        %451 = vmatprep.subr.mxu0 0.0
        %452 = vmatpush1.msra.mxu0 %v431
        %453 = vmatprep.subr.mxu0 0.0
        %454 = vmatpush1.msra.mxu0 %v432
        %455 = vmatprep.subr.mxu0 0.0
        %456 = vmatpush1.msra.mxu0 %v433
        %457 = vmatprep.subr.mxu0 0.0
        %458 = vmatpush1.msra.mxu0 %v434
        %459 = vmatprep.subr.mxu0 0.0
        %460 = vmatpush1.msra.mxu0 %v435
        %461 = vmatprep.subr.mxu0 0.0
        %462 = vmatpush1.msra.mxu0 %v436
        %463 = vmatprep.subr.mxu0 0.0
        %464 = vmatpush1.msra.mxu0 %v437
        %465 = vmatprep.subr.mxu0 0.0
        %466 = vmatpush1.msra.mxu0 %v438
        %467 = vmatprep.subr.mxu0 0.0
        %468 = vmatpush1.msra.mxu0 %v439
        %469 = vmatprep.subr.mxu0 0.0
        %470 = vmatpush1.msra.mxu0 %v440
        %471 = vmatprep.subr.mxu0 0.0
        %472 = vmatpush1.msra.mxu0 %v441
        %473 = vmatprep.subr.mxu0 0.0
        %474 = vmatpush1.msra.mxu0 %v442
        %475 = vmatprep.subr.mxu0 0.0
        %476 = vmatpush1.msra.mxu0 0.0
        %477 = vmatprep.subr.mxu0 0.0
        %478 = vmatpush1.msra.mxu0 0.0
        %479 = vmatprep.subr.mxu0 0.0
        %480 = vmatpush1.msra.mxu0 0.0
        %481 = vmatprep.subr.mxu0 0.0
        %482 = vmatpush1.msra.mxu0 0.0
        %483 = vmatprep.subr.mxu0 0.0
        %484 = vmatpush1.msra.mxu0 0.0
        %485 = vmatprep.subr.mxu0 0.0
        %486 = vmatpush1.msra.mxu0 0.0
        %487 = vmatprep.subr.mxu0 0.0
        %488 = vmatpush1.msra.mxu0 0.0
        %489 = vmatprep.subr.mxu0 0.0
        %490 = vmatpush1.msra.mxu0 0.0
        %491 = vmatprep.subr.mxu0 0.0
        %492 = vmatpush1.msra.mxu0 0.0
        %493 = vmatprep.subr.mxu0 0.0
        %494 = vmatpush1.msra.mxu0 0.0
        %495 = vmatprep.subr.mxu0 0.0
        %496 = vmatpush1.msra.mxu0 0.0
        %497 = vmatprep.subr.mxu0 0.0
        %498 = vmatpush1.msra.mxu0 0.0
        %499 = vmatprep.subr.mxu0 0.0
        %500 = vmatpush1.msra.mxu0 0.0
        %501 = vmatprep.subr.mxu0 0.0
        %502 = vmatpush1.msra.mxu0 0.0
        %503 = vmatprep.subr.mxu0 0.0
        %504 = vmatpush1.msra.mxu0 0.0
        %505 = vmatprep.subr.mxu0 0.0
        %506 = vmatpush1.msra.mxu0 0.0
        %507 = vmatprep.mubr.f32.mxu0 0.0
        %508 = vmatmul.mubr.f32.gmra.mrb[0].mxu0 %v372
        %v509 = vpop.f32.mrb[0].mxu0
        %v510 = vadd.f32 0.0, %v509
        %v511 = vpop.f32.mrb[0].mxu0
        %512 = vmatprep.mubr.f32.mxu0 0.0
        %513 = vmatmul.mubr.f32.gmra.mrb[0].mxu0 %v373
        %v514 = vpop.f32.mrb[0].mxu0
        %v515 = vadd.f32 0.0, %v514
        %v516 = vpop.f32.mrb[0].mxu0
        %517 = vmatprep.mubr.f32.mxu0 0.0
        %518 = vmatmul.mubr.f32.gmra.mrb[0].mxu0 %v374
        %v519 = vpop.f32.mrb[0].mxu0
        %v520 = vadd.f32 0.0, %v519
        %v521 = vpop.f32.mrb[0].mxu0
        %522 = vmatprep.mubr.f32.mxu0 0.0
        %523 = vmatmul.mubr.f32.gmra.mrb[0].mxu0 %v375
        %v524 = vpop.f32.mrb[0].mxu0
        %v525 = vadd.f32 0.0, %v524
        %v526 = vpop.f32.mrb[0].mxu0
        %527 = vdwg.mxu0
        %528 = vmatprep.subr.mxu0 0.0
        %529 = vmatpush1.msra.mxu0 %v427
        %530 = vmatprep.subr.mxu0 0.0
        %531 = vmatpush1.msra.mxu0 %v428
        %532 = vmatprep.subr.mxu0 0.0
        %533 = vmatpush1.msra.mxu0 %v429
        %534 = vmatprep.subr.mxu0 0.0
        %535 = vmatpush1.msra.mxu0 %v430
        %536 = vmatprep.subr.mxu0 0.0
        %537 = vmatpush1.msra.mxu0 %v431
        %538 = vmatprep.subr.mxu0 0.0
        %539 = vmatpush1.msra.mxu0 %v432
        %540 = vmatprep.subr.mxu0 0.0
        %541 = vmatpush1.msra.mxu0 %v433
        %542 = vmatprep.subr.mxu0 0.0
        %543 = vmatpush1.msra.mxu0 %v434
        %544 = vmatprep.subr.mxu0 0.0
        %545 = vmatpush1.msra.mxu0 %v435
        %546 = vmatprep.subr.mxu0 0.0
        %547 = vmatpush1.msra.mxu0 %v436
        %548 = vmatprep.subr.mxu0 0.0
        %549 = vmatpush1.msra.mxu0 %v437
        %550 = vmatprep.subr.mxu0 0.0
        %551 = vmatpush1.msra.mxu0 %v438
        %552 = vmatprep.subr.mxu0 0.0
        %553 = vmatpush1.msra.mxu0 %v439
        %554 = vmatprep.subr.mxu0 0.0
        %555 = vmatpush1.msra.mxu0 %v440
        %556 = vmatprep.subr.mxu0 0.0
        %557 = vmatpush1.msra.mxu0 %v441
        %558 = vmatprep.subr.mxu0 0.0
        %559 = vmatpush1.msra.mxu0 %v442
        %560 = vmatprep.subr.mxu0 0.0
        %561 = vmatpush1.msra.mxu0 0.0
        %562 = vmatprep.subr.mxu0 0.0
        %563 = vmatpush1.msra.mxu0 0.0
        %564 = vmatprep.subr.mxu0 0.0
        %565 = vmatpush1.msra.mxu0 0.0
        %566 = vmatprep.subr.mxu0 0.0
        %567 = vmatpush1.msra.mxu0 0.0
        %568 = vmatprep.subr.mxu0 0.0
        %569 = vmatpush1.msra.mxu0 0.0
        %570 = vmatprep.subr.mxu0 0.0
        %571 = vmatpush1.msra.mxu0 0.0
        %572 = vmatprep.subr.mxu0 0.0
        %573 = vmatpush1.msra.mxu0 0.0
        %574 = vmatprep.subr.mxu0 0.0
        %575 = vmatpush1.msra.mxu0 0.0
        %576 = vmatprep.subr.mxu0 0.0
        %577 = vmatpush1.msra.mxu0 0.0
        %578 = vmatprep.subr.mxu0 0.0
        %579 = vmatpush1.msra.mxu0 0.0
        %580 = vmatprep.subr.mxu0 0.0
        %581 = vmatpush1.msra.mxu0 0.0
        %582 = vmatprep.subr.mxu0 0.0
        %583 = vmatpush1.msra.mxu0 0.0
        %584 = vmatprep.subr.mxu0 0.0
        %585 = vmatpush1.msra.mxu0 0.0
        %586 = vmatprep.subr.mxu0 0.0
        %587 = vmatpush1.msra.mxu0 0.0
        %588 = vmatprep.subr.mxu0 0.0
        %589 = vmatpush1.msra.mxu0 0.0
        %590 = vmatprep.subr.mxu0 0.0
        %591 = vmatpush1.msra.mxu0 0.0
        %592 = vmatprep.mubr.f32.mxu0 0.0
        %593 = vmatmul.mubr.f32.gmra.mrb[0].mxu0 %v368
        %v594 = vpop.f32.mrb[0].mxu0
        %v595 = vadd.f32 %v510, %v594
        %v596 = vpop.f32.mrb[0].mxu0
        %597 = vmatprep.mubr.f32.mxu0 0.0
        %598 = vmatmul.mubr.f32.gmra.mrb[0].mxu0 %v369
        %v599 = vpop.f32.mrb[0].mxu0
        %v600 = vadd.f32 %v515, %v599
        %v601 = vpop.f32.mrb[0].mxu0
        %602 = vmatprep.mubr.f32.mxu0 0.0
        %603 = vmatmul.mubr.f32.gmra.mrb[0].mxu0 %v370
        %v604 = vpop.f32.mrb[0].mxu0
        %v605 = vadd.f32 %v520, %v604
        %v606 = vpop.f32.mrb[0].mxu0
        %607 = vmatprep.mubr.f32.mxu0 0.0
        %608 = vmatmul.mubr.f32.gmra.mrb[0].mxu0 %v371
        %v609 = vpop.f32.mrb[0].mxu0
        %v610 = vadd.f32 %v525, %v609
        %v611 = vpop.f32.mrb[0].mxu0
        %612 = vdwg.mxu0
        %v613 = vld [vmem:[%s356] sm:$0xff]
        %v614 = vld [vmem:[%s356 + $0x8] sm:$0xff]
        %v615 = vld [vmem:[%s356 + $0x10] sm:$0xff]
        %v616 = vld [vmem:[%s356 + $0x18] sm:$0xff]
        %618 = vset.pattern.permute.xlu0 0
        %619 = vperm.xlu0 %618, %v613
        %v620 = vpop.permute.xlu0 %619
        %623 = vset.pattern.permute.xlu0 0
        %624 = vperm.xlu0 %623, %v614
        %v625 = vpop.permute.xlu0 %624
        %628 = vset.pattern.permute.xlu0 0
        %629 = vperm.xlu0 %628, %v615
        %v630 = vpop.permute.xlu0 %629
        %633 = vset.pattern.permute.xlu0 0
        %634 = vperm.xlu0 %633, %v616
        %v635 = vpop.permute.xlu0 %634
        %v637 = vadd.f32 %v595, %v620
        %v638 = vadd.f32 %v600, %v625
        %v639 = vadd.f32 %v605, %v630
        %v640 = vadd.f32 %v610, %v635
        %v641 = vfloor.f32 %v637
        %v642 = vfloor.f32 %v638
        %v643 = vfloor.f32 %v639
        %v644 = vfloor.f32 %v640
        %v645 = vsub.f32 %v637, %v641
        %v646 = vsub.f32 %v638, %v642
        %v647 = vsub.f32 %v639, %v643
        %v648 = vsub.f32 %v640, %v644
        %vm649 = vcmp.ge.f32.partialorder %v358, 20.0
        %vm650 = vcmp.ge.f32.partialorder %v359, 20.0
        %vm651 = vcmp.ge.f32.partialorder %v360, 20.0
        %vm652 = vcmp.ge.f32.partialorder %v361, 20.0
        %v653 = vsel %vm649, 1, 0
        %v654 = vsel %vm650, 1, 0
        %v655 = vsel %vm651, 1, 0
        %v656 = vsel %vm652, 1, 0
        %v657 = vcvt.s32.f32 %v653
        %v658 = vcvt.s32.f32 %v654
        %v659 = vcvt.s32.f32 %v655
        %v660 = vcvt.s32.f32 %v656
        %v661 = vsel %vm649, 0.06, 0.333
        %v662 = vsel %vm650, 0.06, 0.333
        %v663 = vsel %vm651, 0.06, 0.333
        %v664 = vsel %vm652, 0.06, 0.333
        %s665 = sld [smem:[#allocation7]]
        %v666 = vmul.f32 %v645, 6.2831855
        %v667 = vmul.f32 %v646, 6.2831855
        %v668 = vmul.f32 %v647, 6.2831855
        %v669 = vmul.f32 %v648, 6.2831855
        %s670 = sld [smem:[#allocation6]]
        %s671 = smul.f32 %s670, 6.2831855
        %v672 = vstv %s671
        %v673 = vadd.f32 %v666, %v672
        %v674 = vadd.f32 %v667, %v672
        %v675 = vadd.f32 %v668, %v672
        %v676 = vadd.f32 %v669, %v672
        %v677 = vand.u32 2147483647, %v673
        %vm678 = vcmp.le.f32.partialorder %v677, 0.7853982
        %vm679 = vcmp.lt.s32.totalorder %v673, 0
        %v680 = vand.u32 %v673, 2139095040
        %v681 = vshrl.u32 %v680, 23
        %v682 = vsub.s32 %v681, 127
        %v683 = vand.u32 2147483647, %v673
        %v684 = vand.u32 %v683, 8388607
        %v685 = vor.u32 %v684, 8388608
        %v686 = vsub.s32 0, %v685
        %v687 = vadd.s32 %v682, 1
        %vm688 = vcmp.gt.s32.totalorder %v687, 0
        %v689 = vsel %vm688, %v687, 0
        %v690 = vshrl.u32 %v689, 5
        %v691 = vand.u32 %v689, 31
        %v692 = vsub.s32 32, %v691
        %v693 = vshrl.u32 683565275, %v692
        %v694 = vshll.u32 683565275, %v691
        %v695 = vshrl.u32 2475754826, %v692
        %v696 = vor.u32 %v694, %v695
        %v697 = vshll.u32 2475754826, %v691
        %v698 = vshrl.u32 2131351028, %v692
        %v699 = vor.u32 %v697, %v698
        %v700 = vshll.u32 2131351028, %v691
        %v701 = vshrl.u32 2102212464, %v692
        %v702 = vor.u32 %v700, %v701
        %v703 = vshll.u32 2102212464, %v691
        %v704 = vshrl.u32 920167782, %v692
        %v705 = vor.u32 %v703, %v704
        %v706 = vshll.u32 920167782, %v691
        %v707 = vshrl.u32 1326507024, %v692
        %v708 = vor.u32 %v706, %v707
        %vm709 = vcmp.lt.s32.totalorder %v690, 1
        %vm710 = vcmp.lt.s32.totalorder %v690, 2
        %vm711 = vcmp.lt.s32.totalorder %v690, 3
        %vm712 = vcmp.lt.s32.totalorder %v690, 4
        %v713 = vsel %vm709, %v693, %v696
        %v714 = vsel %vm712, %v702, 2102212464
        %v715 = vsel %vm711, %v699, %v714
        %v716 = vsel %vm710, %v713, %v715
        %v717 = vsel %vm709, %v696, %v699
        %v718 = vsel %vm712, %v705, 920167782
        %v719 = vsel %vm711, %v702, %v718
        %v720 = vsel %vm710, %v717, %v719
        %v721 = vsel %vm709, %v699, %v702
        %v722 = vsel %vm712, %v708, 1326507024
        %v723 = vsel %vm711, %v705, %v722
        %v724 = vsel %vm710, %v721, %v723
        %v725 = vshll.u32 %v685, 8
        %v726 = vmul.u32.u64.compose %v725, %v724
        %v727 = vextract.low.u32 %v726
        %v728 = vextract.high.u32 %v726
        %v729 = vmul.u32.u64.compose %v725, %v720
        %v730 = vextract.low.u32 %v729
        %v731 = vextract.high.u32 %v729
        %v732 = vmul.u32 %v725, %v716
        %v733 = vadd.s32 %v728, %v730
        %vm734 = vc.u32 %v728, %v730
        %v735 = vadd.s32 %v731, 1
        %v736 = vsel %vm734, %v735, %v731
        %v737 = vadd.s32 %v732, %v736
        %v738 = vadd.s32 %v737, 536870912
        %v739 = vshrl.u32 %v738, 30
        %v740 = vshll.u32 %v739, 30
        %v741 = vsub.s32 %v737, %v740
        %vm742 = vcmp.lt.s32.totalorder %v741, 0
        %v743 = vsub.s32 0, %v741
        %v744 = vsel %vm742, %v743, %v741
        %v745 = vclz %v744
        %v746 = vsub.s32 %v745, 2
        %vm747 = vcmp.gt.s32.totalorder 0, %v746
        %v748 = vsel %vm747, 0, %v746
        %v749 = vsub.s32 32, %v748
        %v750 = vshll.u32 %v741, %v748
        %v751 = vshrl.u32 %v733, %v749
        %v752 = vor.u32 %v750, %v751
        %v753 = vsub.s32 4294967266, %v748
        %v754 = vadd.s32 %v753, 127
        %v755 = vshll.u32 %v754, 23
        %v756 = vor.u32 4788187, %v755
        %v757 = vand.u32 2147483647, %v756
        %v759 = vcvt.s32.f32 %v752
        %v760 = vmul.f32 %v759, %v757
        %v761 = vxor.u32 %v760, 2147483648
        %v762 = vsel %vm679, %v761, %v760
        %v763 = vsub.s32 4, %v739
        %v764 = vsel %vm679, %v763, %v739
        %v765 = vsel %vm678, %v673, %v762
        %v766 = vsel %vm678, 0, %v764
        %v767 = vcosq.f32.pop %v765
        %v768 = vsinq.f32.pop %v765
        %vm769 = vweird.f32 %v673
        %v770 = vadd.s32 %v766, 3
        %v771 = vand.u32 %v770, 3
        %vm772 = vcmp.lt.s32.totalorder %v771, 2
        %vm773 = vcmp.eq.s32.totalorder %v771, 0
        %v774 = vxor.u32 %v768, 2147483648
        %v775 = vsel %vm773, %v767, %v774
        %vm776 = vcmp.eq.s32.totalorder %v771, 2
        %v777 = vxor.u32 %v767, 2147483648
        %v778 = vsel %vm776, %v777, %v768
        %v779 = vsel %vm772, %v775, %v778
        %v780 = vsel %vm769, nan, %v779
        %v781 = vand.u32 2147483647, %v674
        %vm782 = vcmp.le.f32.partialorder %v781, 0.7853982
        %vm783 = vcmp.lt.s32.totalorder %v674, 0
        %v784 = vand.u32 %v674, 2139095040
        %v785 = vshrl.u32 %v784, 23
        %v786 = vsub.s32 %v785, 127
        %v787 = vand.u32 2147483647, %v674
        %v788 = vand.u32 %v787, 8388607
        %v789 = vor.u32 %v788, 8388608
        %v790 = vsub.s32 0, %v789
        %v791 = vadd.s32 %v786, 1
        %vm792 = vcmp.gt.s32.totalorder %v791, 0
        %v793 = vsel %vm792, %v791, 0
        %v794 = vshrl.u32 %v793, 5
        %v795 = vand.u32 %v793, 31
        %v796 = vsub.s32 32, %v795
        %v797 = vshrl.u32 683565275, %v796
        %v798 = vshll.u32 683565275, %v795
        %v799 = vshrl.u32 2475754826, %v796
        %v800 = vor.u32 %v798, %v799
        %v801 = vshll.u32 2475754826, %v795
        %v802 = vshrl.u32 2131351028, %v796
        %v803 = vor.u32 %v801, %v802
        %v804 = vshll.u32 2131351028, %v795
        %v805 = vshrl.u32 2102212464, %v796
        %v806 = vor.u32 %v804, %v805
        %v807 = vshll.u32 2102212464, %v795
        %v808 = vshrl.u32 920167782, %v796
        %v809 = vor.u32 %v807, %v808
        %v810 = vshll.u32 920167782, %v795
        %v811 = vshrl.u32 1326507024, %v796
        %v812 = vor.u32 %v810, %v811
        %vm813 = vcmp.lt.s32.totalorder %v794, 1
        %vm814 = vcmp.lt.s32.totalorder %v794, 2
        %vm815 = vcmp.lt.s32.totalorder %v794, 3
        %vm816 = vcmp.lt.s32.totalorder %v794, 4
        %v817 = vsel %vm813, %v797, %v800
        %v818 = vsel %vm816, %v806, 2102212464
        %v819 = vsel %vm815, %v803, %v818
        %v820 = vsel %vm814, %v817, %v819
        %v821 = vsel %vm813, %v800, %v803
        %v822 = vsel %vm816, %v809, 920167782
        %v823 = vsel %vm815, %v806, %v822
        %v824 = vsel %vm814, %v821, %v823
        %v825 = vsel %vm813, %v803, %v806
        %v826 = vsel %vm816, %v812, 1326507024
        %v827 = vsel %vm815, %v809, %v826
        %v828 = vsel %vm814, %v825, %v827
        %v829 = vshll.u32 %v789, 8
        %v830 = vmul.u32.u64.compose %v829, %v828
        %v831 = vextract.low.u32 %v830
        %v832 = vextract.high.u32 %v830
        %v833 = vmul.u32.u64.compose %v829, %v824
        %v834 = vextract.low.u32 %v833
        %v835 = vextract.high.u32 %v833
        %v836 = vmul.u32 %v829, %v820
        %v837 = vadd.s32 %v832, %v834
        %vm838 = vc.u32 %v832, %v834
        %v839 = vadd.s32 %v835, 1
        %v840 = vsel %vm838, %v839, %v835
        %v841 = vadd.s32 %v836, %v840
        %v842 = vadd.s32 %v841, 536870912
        %v843 = vshrl.u32 %v842, 30
        %v844 = vshll.u32 %v843, 30
        %v845 = vsub.s32 %v841, %v844
        %vm846 = vcmp.lt.s32.totalorder %v845, 0
        %v847 = vsub.s32 0, %v845
        %v848 = vsel %vm846, %v847, %v845
        %v849 = vclz %v848
        %v850 = vsub.s32 %v849, 2
        %vm851 = vcmp.gt.s32.totalorder 0, %v850
        %v852 = vsel %vm851, 0, %v850
        %v853 = vsub.s32 32, %v852
        %v854 = vshll.u32 %v845, %v852
        %v855 = vshrl.u32 %v837, %v853
        %v856 = vor.u32 %v854, %v855
        %v857 = vsub.s32 4294967266, %v852
        %v858 = vadd.s32 %v857, 127
        %v859 = vshll.u32 %v858, 23
        %v860 = vor.u32 4788187, %v859
        %v861 = vand.u32 2147483647, %v860
        %v863 = vcvt.s32.f32 %v856
        %v864 = vmul.f32 %v863, %v861
        %v865 = vxor.u32 %v864, 2147483648
        %v866 = vsel %vm783, %v865, %v864
        %v867 = vsub.s32 4, %v843
        %v868 = vsel %vm783, %v867, %v843
        %v869 = vsel %vm782, %v674, %v866
        %v870 = vsel %vm782, 0, %v868
        %v871 = vcosq.f32.pop %v869
        %v872 = vsinq.f32.pop %v869
        %vm873 = vweird.f32 %v674
        %v874 = vadd.s32 %v870, 3
        %v875 = vand.u32 %v874, 3
        %vm876 = vcmp.lt.s32.totalorder %v875, 2
        %vm877 = vcmp.eq.s32.totalorder %v875, 0
        %v878 = vxor.u32 %v872, 2147483648
        %v879 = vsel %vm877, %v871, %v878
        %vm880 = vcmp.eq.s32.totalorder %v875, 2
        %v881 = vxor.u32 %v871, 2147483648
        %v882 = vsel %vm880, %v881, %v872
        %v883 = vsel %vm876, %v879, %v882
        %v884 = vsel %vm873, nan, %v883
        %v885 = vand.u32 2147483647, %v675
        %vm886 = vcmp.le.f32.partialorder %v885, 0.7853982
        %vm887 = vcmp.lt.s32.totalorder %v675, 0
        %v888 = vand.u32 %v675, 2139095040
        %v889 = vshrl.u32 %v888, 23
        %v890 = vsub.s32 %v889, 127
        %v891 = vand.u32 2147483647, %v675
        %v892 = vand.u32 %v891, 8388607
        %v893 = vor.u32 %v892, 8388608
        %v894 = vsub.s32 0, %v893
        %v895 = vadd.s32 %v890, 1
        %vm896 = vcmp.gt.s32.totalorder %v895, 0
        %v897 = vsel %vm896, %v895, 0
        %v898 = vshrl.u32 %v897, 5
        %v899 = vand.u32 %v897, 31
        %v900 = vsub.s32 32, %v899
        %v901 = vshrl.u32 683565275, %v900
        %v902 = vshll.u32 683565275, %v899
        %v903 = vshrl.u32 2475754826, %v900
        %v904 = vor.u32 %v902, %v903
        %v905 = vshll.u32 2475754826, %v899
        %v906 = vshrl.u32 2131351028, %v900
        %v907 = vor.u32 %v905, %v906
        %v908 = vshll.u32 2131351028, %v899
        %v909 = vshrl.u32 2102212464, %v900
        %v910 = vor.u32 %v908, %v909
        %v911 = vshll.u32 2102212464, %v899
        %v912 = vshrl.u32 920167782, %v900
        %v913 = vor.u32 %v911, %v912
        %v914 = vshll.u32 920167782, %v899
        %v915 = vshrl.u32 1326507024, %v900
        %v916 = vor.u32 %v914, %v915
        %vm917 = vcmp.lt.s32.totalorder %v898, 1
        %vm918 = vcmp.lt.s32.totalorder %v898, 2
        %vm919 = vcmp.lt.s32.totalorder %v898, 3
        %vm920 = vcmp.lt.s32.totalorder %v898, 4
        %v921 = vsel %vm917, %v901, %v904
        %v922 = vsel %vm920, %v910, 2102212464
        %v923 = vsel %vm919, %v907, %v922
        %v924 = vsel %vm918, %v921, %v923
        %v925 = vsel %vm917, %v904, %v907
        %v926 = vsel %vm920, %v913, 920167782
        %v927 = vsel %vm919, %v910, %v926
        %v928 = vsel %vm918, %v925, %v927
        %v929 = vsel %vm917, %v907, %v910
        %v930 = vsel %vm920, %v916, 1326507024
        %v931 = vsel %vm919, %v913, %v930
        %v932 = vsel %vm918, %v929, %v931
        %v933 = vshll.u32 %v893, 8
        %v934 = vmul.u32.u64.compose %v933, %v932
        %v935 = vextract.low.u32 %v934
        %v936 = vextract.high.u32 %v934
        %v937 = vmul.u32.u64.compose %v933, %v928
        %v938 = vextract.low.u32 %v937
        %v939 = vextract.high.u32 %v937
        %v940 = vmul.u32 %v933, %v924
        %v941 = vadd.s32 %v936, %v938
        %vm942 = vc.u32 %v936, %v938
        %v943 = vadd.s32 %v939, 1
        %v944 = vsel %vm942, %v943, %v939
        %v945 = vadd.s32 %v940, %v944
        %v946 = vadd.s32 %v945, 536870912
        %v947 = vshrl.u32 %v946, 30
        %v948 = vshll.u32 %v947, 30
        %v949 = vsub.s32 %v945, %v948
        %vm950 = vcmp.lt.s32.totalorder %v949, 0
        %v951 = vsub.s32 0, %v949
        %v952 = vsel %vm950, %v951, %v949
        %v953 = vclz %v952
        %v954 = vsub.s32 %v953, 2
        %vm955 = vcmp.gt.s32.totalorder 0, %v954
        %v956 = vsel %vm955, 0, %v954
        %v957 = vsub.s32 32, %v956
        %v958 = vshll.u32 %v949, %v956
        %v959 = vshrl.u32 %v941, %v957
        %v960 = vor.u32 %v958, %v959
        %v961 = vsub.s32 4294967266, %v956
        %v962 = vadd.s32 %v961, 127
        %v963 = vshll.u32 %v962, 23
        %v964 = vor.u32 4788187, %v963
        %v965 = vand.u32 2147483647, %v964
        %v967 = vcvt.s32.f32 %v960
        %v968 = vmul.f32 %v967, %v965
        %v969 = vxor.u32 %v968, 2147483648
        %v970 = vsel %vm887, %v969, %v968
        %v971 = vsub.s32 4, %v947
        %v972 = vsel %vm887, %v971, %v947
        %v973 = vsel %vm886, %v675, %v970
        %v974 = vsel %vm886, 0, %v972
        %v975 = vcosq.f32.pop %v973
        %v976 = vsinq.f32.pop %v973
        %vm977 = vweird.f32 %v675
        %v978 = vadd.s32 %v974, 3
        %v979 = vand.u32 %v978, 3
        %vm980 = vcmp.lt.s32.totalorder %v979, 2
        %vm981 = vcmp.eq.s32.totalorder %v979, 0
        %v982 = vxor.u32 %v976, 2147483648
        %v983 = vsel %vm981, %v975, %v982
        %vm984 = vcmp.eq.s32.totalorder %v979, 2
        %v985 = vxor.u32 %v975, 2147483648
        %v986 = vsel %vm984, %v985, %v976
        %v987 = vsel %vm980, %v983, %v986
        %v988 = vsel %vm977, nan, %v987
        %v989 = vand.u32 2147483647, %v676
        %vm990 = vcmp.le.f32.partialorder %v989, 0.7853982
        %vm991 = vcmp.lt.s32.totalorder %v676, 0
        %v992 = vand.u32 %v676, 2139095040
        %v993 = vshrl.u32 %v992, 23
        %v994 = vsub.s32 %v993, 127
        %v995 = vand.u32 2147483647, %v676
        %v996 = vand.u32 %v995, 8388607
        %v997 = vor.u32 %v996, 8388608
        %v998 = vsub.s32 0, %v997
        %v999 = vadd.s32 %v994, 1
        %vm1000 = vcmp.gt.s32.totalorder %v999, 0
        %v1001 = vsel %vm1000, %v999, 0
        %v1002 = vshrl.u32 %v1001, 5
        %v1003 = vand.u32 %v1001, 31
        %v1004 = vsub.s32 32, %v1003
        %v1005 = vshrl.u32 683565275, %v1004
        %v1006 = vshll.u32 683565275, %v1003
        %v1007 = vshrl.u32 2475754826, %v1004
        %v1008 = vor.u32 %v1006, %v1007
        %v1009 = vshll.u32 2475754826, %v1003
        %v1010 = vshrl.u32 2131351028, %v1004
        %v1011 = vor.u32 %v1009, %v1010
        %v1012 = vshll.u32 2131351028, %v1003
        %v1013 = vshrl.u32 2102212464, %v1004
        %v1014 = vor.u32 %v1012, %v1013
        %v1015 = vshll.u32 2102212464, %v1003
        %v1016 = vshrl.u32 920167782, %v1004
        %v1017 = vor.u32 %v1015, %v1016
        %v1018 = vshll.u32 920167782, %v1003
        %v1019 = vshrl.u32 1326507024, %v1004
        %v1020 = vor.u32 %v1018, %v1019
        %vm1021 = vcmp.lt.s32.totalorder %v1002, 1
        %vm1022 = vcmp.lt.s32.totalorder %v1002, 2
        %vm1023 = vcmp.lt.s32.totalorder %v1002, 3
        %vm1024 = vcmp.lt.s32.totalorder %v1002, 4
        %v1025 = vsel %vm1021, %v1005, %v1008
        %v1026 = vsel %vm1024, %v1014, 2102212464
        %v1027 = vsel %vm1023, %v1011, %v1026
        %v1028 = vsel %vm1022, %v1025, %v1027
        %v1029 = vsel %vm1021, %v1008, %v1011
        %v1030 = vsel %vm1024, %v1017, 920167782
        %v1031 = vsel %vm1023, %v1014, %v1030
        %v1032 = vsel %vm1022, %v1029, %v1031
        %v1033 = vsel %vm1021, %v1011, %v1014
        %v1034 = vsel %vm1024, %v1020, 1326507024
        %v1035 = vsel %vm1023, %v1017, %v1034
        %v1036 = vsel %vm1022, %v1033, %v1035
        %v1037 = vshll.u32 %v997, 8
        %v1038 = vmul.u32.u64.compose %v1037, %v1036
        %v1039 = vextract.low.u32 %v1038
        %v1040 = vextract.high.u32 %v1038
        %v1041 = vmul.u32.u64.compose %v1037, %v1032
        %v1042 = vextract.low.u32 %v1041
        %v1043 = vextract.high.u32 %v1041
        %v1044 = vmul.u32 %v1037, %v1028
        %v1045 = vadd.s32 %v1040, %v1042
        %vm1046 = vc.u32 %v1040, %v1042
        %v1047 = vadd.s32 %v1043, 1
        %v1048 = vsel %vm1046, %v1047, %v1043
        %v1049 = vadd.s32 %v1044, %v1048
        %v1050 = vadd.s32 %v1049, 536870912
        %v1051 = vshrl.u32 %v1050, 30
        %v1052 = vshll.u32 %v1051, 30
        %v1053 = vsub.s32 %v1049, %v1052
        %vm1054 = vcmp.lt.s32.totalorder %v1053, 0
        %v1055 = vsub.s32 0, %v1053
        %v1056 = vsel %vm1054, %v1055, %v1053
        %v1057 = vclz %v1056
        %v1058 = vsub.s32 %v1057, 2
        %vm1059 = vcmp.gt.s32.totalorder 0, %v1058
        %v1060 = vsel %vm1059, 0, %v1058
        %v1061 = vsub.s32 32, %v1060
        %v1062 = vshll.u32 %v1053, %v1060
        %v1063 = vshrl.u32 %v1045, %v1061
        %v1064 = vor.u32 %v1062, %v1063
        %v1065 = vsub.s32 4294967266, %v1060
        %v1066 = vadd.s32 %v1065, 127
        %v1067 = vshll.u32 %v1066, 23
        %v1068 = vor.u32 4788187, %v1067
        %v1069 = vand.u32 2147483647, %v1068
        %v1071 = vcvt.s32.f32 %v1064
        %v1072 = vmul.f32 %v1071, %v1069
        %v1073 = vxor.u32 %v1072, 2147483648
        %v1074 = vsel %vm991, %v1073, %v1072
        %v1075 = vsub.s32 4, %v1051
        %v1076 = vsel %vm991, %v1075, %v1051
        %v1077 = vsel %vm990, %v676, %v1074
        %v1078 = vsel %vm990, 0, %v1076
        %v1079 = vcosq.f32.pop %v1077
        %v1080 = vsinq.f32.pop %v1077
        %vm1081 = vweird.f32 %v676
        %v1082 = vadd.s32 %v1078, 3
        %v1083 = vand.u32 %v1082, 3
        %vm1084 = vcmp.lt.s32.totalorder %v1083, 2
        %vm1085 = vcmp.eq.s32.totalorder %v1083, 0
        %v1086 = vxor.u32 %v1080, 2147483648
        %v1087 = vsel %vm1085, %v1079, %v1086
        %vm1088 = vcmp.eq.s32.totalorder %v1083, 2
        %v1089 = vxor.u32 %v1079, 2147483648
        %v1090 = vsel %vm1088, %v1089, %v1080
        %v1091 = vsel %vm1084, %v1087, %v1090
        %v1092 = vsel %vm1081, nan, %v1091
        %v1093 = vstv %s665
        %v1094 = vmul.f32 %v1093, %v780
        %v1095 = vmul.f32 %v1093, %v884
        %v1096 = vmul.f32 %v1093, %v988
        %v1097 = vmul.f32 %v1093, %v1092
        %v1098 = vld [vmem:[%s285] sm:$0xf]
        %v1099 = vld [vmem:[%s285 + $0x4] sm:$0xf]
        %v1100 = vld [vmem:[%s285 + $0x8] sm:$0xf]
        %v1101 = vld [vmem:[%s285 + $0xc] sm:$0xf]
        %v1102 = vunpack.c.l.bf16 %v1098
        %v1103 = vunpack.c.l.bf16 %v1099
        %v1104 = vunpack.c.l.bf16 %v1100
        %v1105 = vunpack.c.l.bf16 %v1101
        %v1106 = vmul.f32 %v1093, %v1102
        %v1107 = vmul.f32 %v1093, %v1103
        %v1108 = vmul.f32 %v1093, %v1104
        %v1109 = vmul.f32 %v1093, %v1105
        %s1110 = sld [smem:[#allocation7 + $0x1]]
        %v1111 = vmul.f32 %v645, 12.566371
        %v1112 = vmul.f32 %v646, 12.566371
        %v1113 = vmul.f32 %v647, 12.566371
        %v1114 = vmul.f32 %v648, 12.566371
        %s1115 = sld [smem:[#allocation6 + $0x1]]
        %s1116 = smul.f32 %s1115, 6.2831855
        %v1117 = vstv %s1116
        %v1118 = vadd.f32 %v1111, %v1117
        %v1119 = vadd.f32 %v1112, %v1117
        %v1120 = vadd.f32 %v1113, %v1117
        %v1121 = vadd.f32 %v1114, %v1117
        %v1122 = vand.u32 2147483647, %v1118
        %vm1123 = vcmp.le.f32.partialorder %v1122, 0.7853982
        %vm1124 = vcmp.lt.s32.totalorder %v1118, 0
        %v1125 = vand.u32 %v1118, 2139095040
        %v1126 = vshrl.u32 %v1125, 23
        %v1127 = vsub.s32 %v1126, 127
        %v1128 = vand.u32 2147483647, %v1118
        %v1129 = vand.u32 %v1128, 8388607
        %v1130 = vor.u32 %v1129, 8388608
        %v1131 = vsub.s32 0, %v1130
        %v1132 = vadd.s32 %v1127, 1
        %vm1133 = vcmp.gt.s32.totalorder %v1132, 0
        %v1134 = vsel %vm1133, %v1132, 0
        %v1135 = vshrl.u32 %v1134, 5
        %v1136 = vand.u32 %v1134, 31
        %v1137 = vsub.s32 32, %v1136
        %v1138 = vshrl.u32 683565275, %v1137
        %v1139 = vshll.u32 683565275, %v1136
        %v1140 = vshrl.u32 2475754826, %v1137
        %v1141 = vor.u32 %v1139, %v1140
        %v1142 = vshll.u32 2475754826, %v1136
        %v1143 = vshrl.u32 2131351028, %v1137
        %v1144 = vor.u32 %v1142, %v1143
        %v1145 = vshll.u32 2131351028, %v1136
        %v1146 = vshrl.u32 2102212464, %v1137
        %v1147 = vor.u32 %v1145, %v1146
        %v1148 = vshll.u32 2102212464, %v1136
        %v1149 = vshrl.u32 920167782, %v1137
        %v1150 = vor.u32 %v1148, %v1149
        %v1151 = vshll.u32 920167782, %v1136
        %v1152 = vshrl.u32 1326507024, %v1137
        %v1153 = vor.u32 %v1151, %v1152
        %vm1154 = vcmp.lt.s32.totalorder %v1135, 1
        %vm1155 = vcmp.lt.s32.totalorder %v1135, 2
        %vm1156 = vcmp.lt.s32.totalorder %v1135, 3
        %vm1157 = vcmp.lt.s32.totalorder %v1135, 4
        %v1158 = vsel %vm1154, %v1138, %v1141
        %v1159 = vsel %vm1157, %v1147, 2102212464
        %v1160 = vsel %vm1156, %v1144, %v1159
        %v1161 = vsel %vm1155, %v1158, %v1160
        %v1162 = vsel %vm1154, %v1141, %v1144
        %v1163 = vsel %vm1157, %v1150, 920167782
        %v1164 = vsel %vm1156, %v1147, %v1163
        %v1165 = vsel %vm1155, %v1162, %v1164
        %v1166 = vsel %vm1154, %v1144, %v1147
        %v1167 = vsel %vm1157, %v1153, 1326507024
        %v1168 = vsel %vm1156, %v1150, %v1167
        %v1169 = vsel %vm1155, %v1166, %v1168
        %v1170 = vshll.u32 %v1130, 8
        %v1171 = vmul.u32.u64.compose %v1170, %v1169
        %v1172 = vextract.low.u32 %v1171
        %v1173 = vextract.high.u32 %v1171
        %v1174 = vmul.u32.u64.compose %v1170, %v1165
        %v1175 = vextract.low.u32 %v1174
        %v1176 = vextract.high.u32 %v1174
        %v1177 = vmul.u32 %v1170, %v1161
        %v1178 = vadd.s32 %v1173, %v1175
        %vm1179 = vc.u32 %v1173, %v1175
        %v1180 = vadd.s32 %v1176, 1
        %v1181 = vsel %vm1179, %v1180, %v1176
        %v1182 = vadd.s32 %v1177, %v1181
        %v1183 = vadd.s32 %v1182, 536870912
        %v1184 = vshrl.u32 %v1183, 30
        %v1185 = vshll.u32 %v1184, 30
        %v1186 = vsub.s32 %v1182, %v1185
        %vm1187 = vcmp.lt.s32.totalorder %v1186, 0
        %v1188 = vsub.s32 0, %v1186
        %v1189 = vsel %vm1187, %v1188, %v1186
        %v1190 = vclz %v1189
        %v1191 = vsub.s32 %v1190, 2
        %vm1192 = vcmp.gt.s32.totalorder 0, %v1191
        %v1193 = vsel %vm1192, 0, %v1191
        %v1194 = vsub.s32 32, %v1193
        %v1195 = vshll.u32 %v1186, %v1193
        %v1196 = vshrl.u32 %v1178, %v1194
        %v1197 = vor.u32 %v1195, %v1196
        %v1198 = vsub.s32 4294967266, %v1193
        %v1199 = vadd.s32 %v1198, 127
        %v1200 = vshll.u32 %v1199, 23
        %v1201 = vor.u32 4788187, %v1200
        %v1202 = vand.u32 2147483647, %v1201
        %v1204 = vcvt.s32.f32 %v1197
        %v1205 = vmul.f32 %v1204, %v1202
        %v1206 = vxor.u32 %v1205, 2147483648
        %v1207 = vsel %vm1124, %v1206, %v1205
        %v1208 = vsub.s32 4, %v1184
        %v1209 = vsel %vm1124, %v1208, %v1184
        %v1210 = vsel %vm1123, %v1118, %v1207
        %v1211 = vsel %vm1123, 0, %v1209
        %v1212 = vcosq.f32.pop %v1210
        %v1213 = vsinq.f32.pop %v1210
        %vm1214 = vweird.f32 %v1118
        %v1215 = vadd.s32 %v1211, 3
        %v1216 = vand.u32 %v1215, 3
        %vm1217 = vcmp.lt.s32.totalorder %v1216, 2
        %vm1218 = vcmp.eq.s32.totalorder %v1216, 0
        %v1219 = vxor.u32 %v1213, 2147483648
        %v1220 = vsel %vm1218, %v1212, %v1219
        %vm1221 = vcmp.eq.s32.totalorder %v1216, 2
        %v1222 = vxor.u32 %v1212, 2147483648
        %v1223 = vsel %vm1221, %v1222, %v1213
        %v1224 = vsel %vm1217, %v1220, %v1223
        %v1225 = vsel %vm1214, nan, %v1224
        %v1226 = vand.u32 2147483647, %v1119
        %vm1227 = vcmp.le.f32.partialorder %v1226, 0.7853982
        %vm1228 = vcmp.lt.s32.totalorder %v1119, 0
        %v1229 = vand.u32 %v1119, 2139095040
        %v1230 = vshrl.u32 %v1229, 23
        %v1231 = vsub.s32 %v1230, 127
        %v1232 = vand.u32 2147483647, %v1119
        %v1233 = vand.u32 %v1232, 8388607
        %v1234 = vor.u32 %v1233, 8388608
        %v1235 = vsub.s32 0, %v1234
        %v1236 = vadd.s32 %v1231, 1
        %vm1237 = vcmp.gt.s32.totalorder %v1236, 0
        %v1238 = vsel %vm1237, %v1236, 0
        %v1239 = vshrl.u32 %v1238, 5
        %v1240 = vand.u32 %v1238, 31
        %v1241 = vsub.s32 32, %v1240
        %v1242 = vshrl.u32 683565275, %v1241
        %v1243 = vshll.u32 683565275, %v1240
        %v1244 = vshrl.u32 2475754826, %v1241
        %v1245 = vor.u32 %v1243, %v1244
        %v1246 = vshll.u32 2475754826, %v1240
        %v1247 = vshrl.u32 2131351028, %v1241
        %v1248 = vor.u32 %v1246, %v1247
        %v1249 = vshll.u32 2131351028, %v1240
        %v1250 = vshrl.u32 2102212464, %v1241
        %v1251 = vor.u32 %v1249, %v1250
        %v1252 = vshll.u32 2102212464, %v1240
        %v1253 = vshrl.u32 920167782, %v1241
        %v1254 = vor.u32 %v1252, %v1253
        %v1255 = vshll.u32 920167782, %v1240
        %v1256 = vshrl.u32 1326507024, %v1241
        %v1257 = vor.u32 %v1255, %v1256
        %vm1258 = vcmp.lt.s32.totalorder %v1239, 1
        %vm1259 = vcmp.lt.s32.totalorder %v1239, 2
        %vm1260 = vcmp.lt.s32.totalorder %v1239, 3
        %vm1261 = vcmp.lt.s32.totalorder %v1239, 4
        %v1262 = vsel %vm1258, %v1242, %v1245
        %v1263 = vsel %vm1261, %v1251, 2102212464
        %v1264 = vsel %vm1260, %v1248, %v1263
        %v1265 = vsel %vm1259, %v1262, %v1264
        %v1266 = vsel %vm1258, %v1245, %v1248
        %v1267 = vsel %vm1261, %v1254, 920167782
        %v1268 = vsel %vm1260, %v1251, %v1267
        %v1269 = vsel %vm1259, %v1266, %v1268
        %v1270 = vsel %vm1258, %v1248, %v1251
        %v1271 = vsel %vm1261, %v1257, 1326507024
        %v1272 = vsel %vm1260, %v1254, %v1271
        %v1273 = vsel %vm1259, %v1270, %v1272
        %v1274 = vshll.u32 %v1234, 8
        %v1275 = vmul.u32.u64.compose %v1274, %v1273
        %v1276 = vextract.low.u32 %v1275
        %v1277 = vextract.high.u32 %v1275
        %v1278 = vmul.u32.u64.compose %v1274, %v1269
        %v1279 = vextract.low.u32 %v1278
        %v1280 = vextract.high.u32 %v1278
        %v1281 = vmul.u32 %v1274, %v1265
        %v1282 = vadd.s32 %v1277, %v1279
        %vm1283 = vc.u32 %v1277, %v1279
        %v1284 = vadd.s32 %v1280, 1
        %v1285 = vsel %vm1283, %v1284, %v1280
        %v1286 = vadd.s32 %v1281, %v1285
        %v1287 = vadd.s32 %v1286, 536870912
        %v1288 = vshrl.u32 %v1287, 30
        %v1289 = vshll.u32 %v1288, 30
        %v1290 = vsub.s32 %v1286, %v1289
        %vm1291 = vcmp.lt.s32.totalorder %v1290, 0
        %v1292 = vsub.s32 0, %v1290
        %v1293 = vsel %vm1291, %v1292, %v1290
        %v1294 = vclz %v1293
        %v1295 = vsub.s32 %v1294, 2
        %vm1296 = vcmp.gt.s32.totalorder 0, %v1295
        %v1297 = vsel %vm1296, 0, %v1295
        %v1298 = vsub.s32 32, %v1297
        %v1299 = vshll.u32 %v1290, %v1297
        %v1300 = vshrl.u32 %v1282, %v1298
        %v1301 = vor.u32 %v1299, %v1300
        %v1302 = vsub.s32 4294967266, %v1297
        %v1303 = vadd.s32 %v1302, 127
        %v1304 = vshll.u32 %v1303, 23
        %v1305 = vor.u32 4788187, %v1304
        %v1306 = vand.u32 2147483647, %v1305
        %v1308 = vcvt.s32.f32 %v1301
        %v1309 = vmul.f32 %v1308, %v1306
        %v1310 = vxor.u32 %v1309, 2147483648
        %v1311 = vsel %vm1228, %v1310, %v1309
        %v1312 = vsub.s32 4, %v1288
        %v1313 = vsel %vm1228, %v1312, %v1288
        %v1314 = vsel %vm1227, %v1119, %v1311
        %v1315 = vsel %vm1227, 0, %v1313
        %v1316 = vcosq.f32.pop %v1314
        %v1317 = vsinq.f32.pop %v1314
        %vm1318 = vweird.f32 %v1119
        %v1319 = vadd.s32 %v1315, 3
        %v1320 = vand.u32 %v1319, 3
        %vm1321 = vcmp.lt.s32.totalorder %v1320, 2
        %vm1322 = vcmp.eq.s32.totalorder %v1320, 0
        %v1323 = vxor.u32 %v1317, 2147483648
        %v1324 = vsel %vm1322, %v1316, %v1323
        %vm1325 = vcmp.eq.s32.totalorder %v1320, 2
        %v1326 = vxor.u32 %v1316, 2147483648
        %v1327 = vsel %vm1325, %v1326, %v1317
        %v1328 = vsel %vm1321, %v1324, %v1327
        %v1329 = vsel %vm1318, nan, %v1328
        %v1330 = vand.u32 2147483647, %v1120
        %vm1331 = vcmp.le.f32.partialorder %v1330, 0.7853982
        %vm1332 = vcmp.lt.s32.totalorder %v1120, 0
        %v1333 = vand.u32 %v1120, 2139095040
        %v1334 = vshrl.u32 %v1333, 23
        %v1335 = vsub.s32 %v1334, 127
        %v1336 = vand.u32 2147483647, %v1120
        %v1337 = vand.u32 %v1336, 8388607
        %v1338 = vor.u32 %v1337, 8388608
        %v1339 = vsub.s32 0, %v1338
        %v1340 = vadd.s32 %v1335, 1
        %vm1341 = vcmp.gt.s32.totalorder %v1340, 0
        %v1342 = vsel %vm1341, %v1340, 0
        %v1343 = vshrl.u32 %v1342, 5
        %v1344 = vand.u32 %v1342, 31
        %v1345 = vsub.s32 32, %v1344
        %v1346 = vshrl.u32 683565275, %v1345
        %v1347 = vshll.u32 683565275, %v1344
        %v1348 = vshrl.u32 2475754826, %v1345
        %v1349 = vor.u32 %v1347, %v1348
        %v1350 = vshll.u32 2475754826, %v1344
        %v1351 = vshrl.u32 2131351028, %v1345
        %v1352 = vor.u32 %v1350, %v1351
        %v1353 = vshll.u32 2131351028, %v1344
        %v1354 = vshrl.u32 2102212464, %v1345
        %v1355 = vor.u32 %v1353, %v1354
        %v1356 = vshll.u32 2102212464, %v1344
        %v1357 = vshrl.u32 920167782, %v1345
        %v1358 = vor.u32 %v1356, %v1357
        %v1359 = vshll.u32 920167782, %v1344
        %v1360 = vshrl.u32 1326507024, %v1345
        %v1361 = vor.u32 %v1359, %v1360
        %vm1362 = vcmp.lt.s32.totalorder %v1343, 1
        %vm1363 = vcmp.lt.s32.totalorder %v1343, 2
        %vm1364 = vcmp.lt.s32.totalorder %v1343, 3
        %vm1365 = vcmp.lt.s32.totalorder %v1343, 4
        %v1366 = vsel %vm1362, %v1346, %v1349
        %v1367 = vsel %vm1365, %v1355, 2102212464
        %v1368 = vsel %vm1364, %v1352, %v1367
        %v1369 = vsel %vm1363, %v1366, %v1368
        %v1370 = vsel %vm1362, %v1349, %v1352
        %v1371 = vsel %vm1365, %v1358, 920167782
        %v1372 = vsel %vm1364, %v1355, %v1371
        %v1373 = vsel %vm1363, %v1370, %v1372
        %v1374 = vsel %vm1362, %v1352, %v1355
        %v1375 = vsel %vm1365, %v1361, 1326507024
        %v1376 = vsel %vm1364, %v1358, %v1375
        %v1377 = vsel %vm1363, %v1374, %v1376
        %v1378 = vshll.u32 %v1338, 8
        %v1379 = vmul.u32.u64.compose %v1378, %v1377
        %v1380 = vextract.low.u32 %v1379
        %v1381 = vextract.high.u32 %v1379
        %v1382 = vmul.u32.u64.compose %v1378, %v1373
        %v1383 = vextract.low.u32 %v1382
        %v1384 = vextract.high.u32 %v1382
        %v1385 = vmul.u32 %v1378, %v1369
        %v1386 = vadd.s32 %v1381, %v1383
        %vm1387 = vc.u32 %v1381, %v1383
        %v1388 = vadd.s32 %v1384, 1
        %v1389 = vsel %vm1387, %v1388, %v1384
        %v1390 = vadd.s32 %v1385, %v1389
        %v1391 = vadd.s32 %v1390, 536870912
        %v1392 = vshrl.u32 %v1391, 30
        %v1393 = vshll.u32 %v1392, 30
        %v1394 = vsub.s32 %v1390, %v1393
        %vm1395 = vcmp.lt.s32.totalorder %v1394, 0
        %v1396 = vsub.s32 0, %v1394
        %v1397 = vsel %vm1395, %v1396, %v1394
        %v1398 = vclz %v1397
        %v1399 = vsub.s32 %v1398, 2
        %vm1400 = vcmp.gt.s32.totalorder 0, %v1399
        %v1401 = vsel %vm1400, 0, %v1399
        %v1402 = vsub.s32 32, %v1401
        %v1403 = vshll.u32 %v1394, %v1401
        %v1404 = vshrl.u32 %v1386, %v1402
        %v1405 = vor.u32 %v1403, %v1404
        %v1406 = vsub.s32 4294967266, %v1401
        %v1407 = vadd.s32 %v1406, 127
        %v1408 = vshll.u32 %v1407, 23
        %v1409 = vor.u32 4788187, %v1408
        %v1410 = vand.u32 2147483647, %v1409
        %v1412 = vcvt.s32.f32 %v1405
        %v1413 = vmul.f32 %v1412, %v1410
        %v1414 = vxor.u32 %v1413, 2147483648
        %v1415 = vsel %vm1332, %v1414, %v1413
        %v1416 = vsub.s32 4, %v1392
        %v1417 = vsel %vm1332, %v1416, %v1392
        %v1418 = vsel %vm1331, %v1120, %v1415
        %v1419 = vsel %vm1331, 0, %v1417
        %v1420 = vcosq.f32.pop %v1418
        %v1421 = vsinq.f32.pop %v1418
        %vm1422 = vweird.f32 %v1120
        %v1423 = vadd.s32 %v1419, 3
        %v1424 = vand.u32 %v1423, 3
        %vm1425 = vcmp.lt.s32.totalorder %v1424, 2
        %vm1426 = vcmp.eq.s32.totalorder %v1424, 0
        %v1427 = vxor.u32 %v1421, 2147483648
        %v1428 = vsel %vm1426, %v1420, %v1427
        %vm1429 = vcmp.eq.s32.totalorder %v1424, 2
        %v1430 = vxor.u32 %v1420, 2147483648
        %v1431 = vsel %vm1429, %v1430, %v1421
        %v1432 = vsel %vm1425, %v1428, %v1431
        %v1433 = vsel %vm1422, nan, %v1432
        %v1434 = vand.u32 2147483647, %v1121
        %vm1435 = vcmp.le.f32.partialorder %v1434, 0.7853982
        %vm1436 = vcmp.lt.s32.totalorder %v1121, 0
        %v1437 = vand.u32 %v1121, 2139095040
        %v1438 = vshrl.u32 %v1437, 23
        %v1439 = vsub.s32 %v1438, 127
        %v1440 = vand.u32 2147483647, %v1121
        %v1441 = vand.u32 %v1440, 8388607
        %v1442 = vor.u32 %v1441, 8388608
        %v1443 = vsub.s32 0, %v1442
        %v1444 = vadd.s32 %v1439, 1
        %vm1445 = vcmp.gt.s32.totalorder %v1444, 0
        %v1446 = vsel %vm1445, %v1444, 0
        %v1447 = vshrl.u32 %v1446, 5
        %v1448 = vand.u32 %v1446, 31
        %v1449 = vsub.s32 32, %v1448
        %v1450 = vshrl.u32 683565275, %v1449
        %v1451 = vshll.u32 683565275, %v1448
        %v1452 = vshrl.u32 2475754826, %v1449
        %v1453 = vor.u32 %v1451, %v1452
        %v1454 = vshll.u32 2475754826, %v1448
        %v1455 = vshrl.u32 2131351028, %v1449
        %v1456 = vor.u32 %v1454, %v1455
        %v1457 = vshll.u32 2131351028, %v1448
        %v1458 = vshrl.u32 2102212464, %v1449
        %v1459 = vor.u32 %v1457, %v1458
        %v1460 = vshll.u32 2102212464, %v1448
        %v1461 = vshrl.u32 920167782, %v1449
        %v1462 = vor.u32 %v1460, %v1461
        %v1463 = vshll.u32 920167782, %v1448
        %v1464 = vshrl.u32 1326507024, %v1449
        %v1465 = vor.u32 %v1463, %v1464
        %vm1466 = vcmp.lt.s32.totalorder %v1447, 1
        %vm1467 = vcmp.lt.s32.totalorder %v1447, 2
        %vm1468 = vcmp.lt.s32.totalorder %v1447, 3
        %vm1469 = vcmp.lt.s32.totalorder %v1447, 4
        %v1470 = vsel %vm1466, %v1450, %v1453
        %v1471 = vsel %vm1469, %v1459, 2102212464
        %v1472 = vsel %vm1468, %v1456, %v1471
        %v1473 = vsel %vm1467, %v1470, %v1472
        %v1474 = vsel %vm1466, %v1453, %v1456
        %v1475 = vsel %vm1469, %v1462, 920167782
        %v1476 = vsel %vm1468, %v1459, %v1475
        %v1477 = vsel %vm1467, %v1474, %v1476
        %v1478 = vsel %vm1466, %v1456, %v1459
        %v1479 = vsel %vm1469, %v1465, 1326507024
        %v1480 = vsel %vm1468, %v1462, %v1479
        %v1481 = vsel %vm1467, %v1478, %v1480
        %v1482 = vshll.u32 %v1442, 8
        %v1483 = vmul.u32.u64.compose %v1482, %v1481
        %v1484 = vextract.low.u32 %v1483
        %v1485 = vextract.high.u32 %v1483
        %v1486 = vmul.u32.u64.compose %v1482, %v1477
        %v1487 = vextract.low.u32 %v1486
        %v1488 = vextract.high.u32 %v1486
        %v1489 = vmul.u32 %v1482, %v1473
        %v1490 = vadd.s32 %v1485, %v1487
        %vm1491 = vc.u32 %v1485, %v1487
        %v1492 = vadd.s32 %v1488, 1
        %v1493 = vsel %vm1491, %v1492, %v1488
        %v1494 = vadd.s32 %v1489, %v1493
        %v1495 = vadd.s32 %v1494, 536870912
        %v1496 = vshrl.u32 %v1495, 30
        %v1497 = vshll.u32 %v1496, 30
        %v1498 = vsub.s32 %v1494, %v1497
        %vm1499 = vcmp.lt.s32.totalorder %v1498, 0
        %v1500 = vsub.s32 0, %v1498
        %v1501 = vsel %vm1499, %v1500, %v1498
        %v1502 = vclz %v1501
        %v1503 = vsub.s32 %v1502, 2
        %vm1504 = vcmp.gt.s32.totalorder 0, %v1503
        %v1505 = vsel %vm1504, 0, %v1503
        %v1506 = vsub.s32 32, %v1505
        %v1507 = vshll.u32 %v1498, %v1505
        %v1508 = vshrl.u32 %v1490, %v1506
        %v1509 = vor.u32 %v1507, %v1508
        %v1510 = vsub.s32 4294967266, %v1505
        %v1511 = vadd.s32 %v1510, 127
        %v1512 = vshll.u32 %v1511, 23
        %v1513 = vor.u32 4788187, %v1512
        %v1514 = vand.u32 2147483647, %v1513
        %v1516 = vcvt.s32.f32 %v1509
        %v1517 = vmul.f32 %v1516, %v1514
        %v1518 = vxor.u32 %v1517, 2147483648
        %v1519 = vsel %vm1436, %v1518, %v1517
        %v1520 = vsub.s32 4, %v1496
        %v1521 = vsel %vm1436, %v1520, %v1496
        %v1522 = vsel %vm1435, %v1121, %v1519
        %v1523 = vsel %vm1435, 0, %v1521
        %v1524 = vcosq.f32.pop %v1522
        %v1525 = vsinq.f32.pop %v1522
        %vm1526 = vweird.f32 %v1121
        %v1527 = vadd.s32 %v1523, 3
        %v1528 = vand.u32 %v1527, 3
        %vm1529 = vcmp.lt.s32.totalorder %v1528, 2
        %vm1530 = vcmp.eq.s32.totalorder %v1528, 0
        %v1531 = vxor.u32 %v1525, 2147483648
        %v1532 = vsel %vm1530, %v1524, %v1531
        %vm1533 = vcmp.eq.s32.totalorder %v1528, 2
        %v1534 = vxor.u32 %v1524, 2147483648
        %v1535 = vsel %vm1533, %v1534, %v1525
        %v1536 = vsel %vm1529, %v1532, %v1535
        %v1537 = vsel %vm1526, nan, %v1536
        %v1538 = vstv %s1110
        %v1539 = vmul.f32 %v1538, %v1225
        %v1540 = vmul.f32 %v1538, %v1329
        %v1541 = vmul.f32 %v1538, %v1433
        %v1542 = vmul.f32 %v1538, %v1537
        %s1543 = scalar_lea.vmem %s285, 16 [#allocation2]
        %v1544 = vld [vmem:[%s1543] sm:$0xf]
        %v1545 = vld [vmem:[%s1543 + $0x4] sm:$0xf]
        %v1546 = vld [vmem:[%s1543 + $0x8] sm:$0xf]
        %v1547 = vld [vmem:[%s1543 + $0xc] sm:$0xf]
        %v1548 = vunpack.c.l.bf16 %v1544
        %v1549 = vunpack.c.l.bf16 %v1545
        %v1550 = vunpack.c.l.bf16 %v1546
        %v1551 = vunpack.c.l.bf16 %v1547
        %v1552 = vmul.f32 %v1538, %v1548
        %v1553 = vmul.f32 %v1538, %v1549
        %v1554 = vmul.f32 %v1538, %v1550
        %v1555 = vmul.f32 %v1538, %v1551
        %v1556 = vadd.f32 %v1094, %v1539
        %v1557 = vadd.f32 %v1095, %v1540
        %v1558 = vadd.f32 %v1096, %v1541
        %v1559 = vadd.f32 %v1097, %v1542
        %v1560 = vadd.f32 %v1106, %v1552
        %v1561 = vadd.f32 %v1107, %v1553
        %v1562 = vadd.f32 %v1108, %v1554
        %v1563 = vadd.f32 %v1109, %v1555
        %s1564 = sld [smem:[#allocation7 + $0x2]]
        %v1565 = vmul.f32 %v645, 18.849556
        %v1566 = vmul.f32 %v646, 18.849556
        %v1567 = vmul.f32 %v647, 18.849556
        %v1568 = vmul.f32 %v648, 18.849556
        %s1569 = sld [smem:[#allocation6 + $0x2]]
        %s1570 = smul.f32 %s1569, 6.2831855
        %v1571 = vstv %s1570
        %v1572 = vadd.f32 %v1565, %v1571
        %v1573 = vadd.f32 %v1566, %v1571
        %v1574 = vadd.f32 %v1567, %v1571
        %v1575 = vadd.f32 %v1568, %v1571
        %v1576 = vand.u32 2147483647, %v1572
        %vm1577 = vcmp.le.f32.partialorder %v1576, 0.7853982
        %vm1578 = vcmp.lt.s32.totalorder %v1572, 0
        %v1579 = vand.u32 %v1572, 2139095040
        %v1580 = vshrl.u32 %v1579, 23
        %v1581 = vsub.s32 %v1580, 127
        %v1582 = vand.u32 2147483647, %v1572
        %v1583 = vand.u32 %v1582, 8388607
        %v1584 = vor.u32 %v1583, 8388608
        %v1585 = vsub.s32 0, %v1584
        %v1586 = vadd.s32 %v1581, 1
        %vm1587 = vcmp.gt.s32.totalorder %v1586, 0
        %v1588 = vsel %vm1587, %v1586, 0
        %v1589 = vshrl.u32 %v1588, 5
        %v1590 = vand.u32 %v1588, 31
        %v1591 = vsub.s32 32, %v1590
        %v1592 = vshrl.u32 683565275, %v1591
        %v1593 = vshll.u32 683565275, %v1590
        %v1594 = vshrl.u32 2475754826, %v1591
        %v1595 = vor.u32 %v1593, %v1594
        %v1596 = vshll.u32 2475754826, %v1590
        %v1597 = vshrl.u32 2131351028, %v1591
        %v1598 = vor.u32 %v1596, %v1597
        %v1599 = vshll.u32 2131351028, %v1590
        %v1600 = vshrl.u32 2102212464, %v1591
        %v1601 = vor.u32 %v1599, %v1600
        %v1602 = vshll.u32 2102212464, %v1590
        %v1603 = vshrl.u32 920167782, %v1591
        %v1604 = vor.u32 %v1602, %v1603
        %v1605 = vshll.u32 920167782, %v1590
        %v1606 = vshrl.u32 1326507024, %v1591
        %v1607 = vor.u32 %v1605, %v1606
        %vm1608 = vcmp.lt.s32.totalorder %v1589, 1
        %vm1609 = vcmp.lt.s32.totalorder %v1589, 2
        %vm1610 = vcmp.lt.s32.totalorder %v1589, 3
        %vm1611 = vcmp.lt.s32.totalorder %v1589, 4
        %v1612 = vsel %vm1608, %v1592, %v1595
        %v1613 = vsel %vm1611, %v1601, 2102212464
        %v1614 = vsel %vm1610, %v1598, %v1613
        %v1615 = vsel %vm1609, %v1612, %v1614
        %v1616 = vsel %vm1608, %v1595, %v1598
        %v1617 = vsel %vm1611, %v1604, 920167782
        %v1618 = vsel %vm1610, %v1601, %v1617
        %v1619 = vsel %vm1609, %v1616, %v1618
        %v1620 = vsel %vm1608, %v1598, %v1601
        %v1621 = vsel %vm1611, %v1607, 1326507024
        %v1622 = vsel %vm1610, %v1604, %v1621
        %v1623 = vsel %vm1609, %v1620, %v1622
        %v1624 = vshll.u32 %v1584, 8
        %v1625 = vmul.u32.u64.compose %v1624, %v1623
        %v1626 = vextract.low.u32 %v1625
        %v1627 = vextract.high.u32 %v1625
        %v1628 = vmul.u32.u64.compose %v1624, %v1619
        %v1629 = vextract.low.u32 %v1628
        %v1630 = vextract.high.u32 %v1628
        %v1631 = vmul.u32 %v1624, %v1615
        %v1632 = vadd.s32 %v1627, %v1629
        %vm1633 = vc.u32 %v1627, %v1629
        %v1634 = vadd.s32 %v1630, 1
        %v1635 = vsel %vm1633, %v1634, %v1630
        %v1636 = vadd.s32 %v1631, %v1635
        %v1637 = vadd.s32 %v1636, 536870912
        %v1638 = vshrl.u32 %v1637, 30
        %v1639 = vshll.u32 %v1638, 30
        %v1640 = vsub.s32 %v1636, %v1639
        %vm1641 = vcmp.lt.s32.totalorder %v1640, 0
        %v1642 = vsub.s32 0, %v1640
        %v1643 = vsel %vm1641, %v1642, %v1640
        %v1644 = vclz %v1643
        %v1645 = vsub.s32 %v1644, 2
        %vm1646 = vcmp.gt.s32.totalorder 0, %v1645
        %v1647 = vsel %vm1646, 0, %v1645
        %v1648 = vsub.s32 32, %v1647
        %v1649 = vshll.u32 %v1640, %v1647
        %v1650 = vshrl.u32 %v1632, %v1648
        %v1651 = vor.u32 %v1649, %v1650
        %v1652 = vsub.s32 4294967266, %v1647
        %v1653 = vadd.s32 %v1652, 127
        %v1654 = vshll.u32 %v1653, 23
        %v1655 = vor.u32 4788187, %v1654
        %v1656 = vand.u32 2147483647, %v1655
        %v1658 = vcvt.s32.f32 %v1651
        %v1659 = vmul.f32 %v1658, %v1656
        %v1660 = vxor.u32 %v1659, 2147483648
        %v1661 = vsel %vm1578, %v1660, %v1659
        %v1662 = vsub.s32 4, %v1638
        %v1663 = vsel %vm1578, %v1662, %v1638
        %v1664 = vsel %vm1577, %v1572, %v1661
        %v1665 = vsel %vm1577, 0, %v1663
        %v1666 = vcosq.f32.pop %v1664
        %v1667 = vsinq.f32.pop %v1664
        %vm1668 = vweird.f32 %v1572
        %v1669 = vadd.s32 %v1665, 3
        %v1670 = vand.u32 %v1669, 3
        %vm1671 = vcmp.lt.s32.totalorder %v1670, 2
        %vm1672 = vcmp.eq.s32.totalorder %v1670, 0
        %v1673 = vxor.u32 %v1667, 2147483648
        %v1674 = vsel %vm1672, %v1666, %v1673
        %vm1675 = vcmp.eq.s32.totalorder %v1670, 2
        %v1676 = vxor.u32 %v1666, 2147483648
        %v1677 = vsel %vm1675, %v1676, %v1667
        %v1678 = vsel %vm1671, %v1674, %v1677
        %v1679 = vsel %vm1668, nan, %v1678
        %v1680 = vand.u32 2147483647, %v1573
        %vm1681 = vcmp.le.f32.partialorder %v1680, 0.7853982
        %vm1682 = vcmp.lt.s32.totalorder %v1573, 0
        %v1683 = vand.u32 %v1573, 2139095040
        %v1684 = vshrl.u32 %v1683, 23
        %v1685 = vsub.s32 %v1684, 127
        %v1686 = vand.u32 2147483647, %v1573
        %v1687 = vand.u32 %v1686, 8388607
        %v1688 = vor.u32 %v1687, 8388608
        %v1689 = vsub.s32 0, %v1688
        %v1690 = vadd.s32 %v1685, 1
        %vm1691 = vcmp.gt.s32.totalorder %v1690, 0
        %v1692 = vsel %vm1691, %v1690, 0
        %v1693 = vshrl.u32 %v1692, 5
        %v1694 = vand.u32 %v1692, 31
        %v1695 = vsub.s32 32, %v1694
        %v1696 = vshrl.u32 683565275, %v1695
        %v1697 = vshll.u32 683565275, %v1694
        %v1698 = vshrl.u32 2475754826, %v1695
        %v1699 = vor.u32 %v1697, %v1698
        %v1700 = vshll.u32 2475754826, %v1694
        %v1701 = vshrl.u32 2131351028, %v1695
        %v1702 = vor.u32 %v1700, %v1701
        %v1703 = vshll.u32 2131351028, %v1694
        %v1704 = vshrl.u32 2102212464, %v1695
        %v1705 = vor.u32 %v1703, %v1704
        %v1706 = vshll.u32 2102212464, %v1694
        %v1707 = vshrl.u32 920167782, %v1695
        %v1708 = vor.u32 %v1706, %v1707
        %v1709 = vshll.u32 920167782, %v1694
        %v1710 = vshrl.u32 1326507024, %v1695
        %v1711 = vor.u32 %v1709, %v1710
        %vm1712 = vcmp.lt.s32.totalorder %v1693, 1
        %vm1713 = vcmp.lt.s32.totalorder %v1693, 2
        %vm1714 = vcmp.lt.s32.totalorder %v1693, 3
        %vm1715 = vcmp.lt.s32.totalorder %v1693, 4
        %v1716 = vsel %vm1712, %v1696, %v1699
        %v1717 = vsel %vm1715, %v1705, 2102212464
        %v1718 = vsel %vm1714, %v1702, %v1717
        %v1719 = vsel %vm1713, %v1716, %v1718
        %v1720 = vsel %vm1712, %v1699, %v1702
        %v1721 = vsel %vm1715, %v1708, 920167782
        %v1722 = vsel %vm1714, %v1705, %v1721
        %v1723 = vsel %vm1713, %v1720, %v1722
        %v1724 = vsel %vm1712, %v1702, %v1705
        %v1725 = vsel %vm1715, %v1711, 1326507024
        %v1726 = vsel %vm1714, %v1708, %v1725
        %v1727 = vsel %vm1713, %v1724, %v1726
        %v1728 = vshll.u32 %v1688, 8
        %v1729 = vmul.u32.u64.compose %v1728, %v1727
        %v1730 = vextract.low.u32 %v1729
        %v1731 = vextract.high.u32 %v1729
        %v1732 = vmul.u32.u64.compose %v1728, %v1723
        %v1733 = vextract.low.u32 %v1732
        %v1734 = vextract.high.u32 %v1732
        %v1735 = vmul.u32 %v1728, %v1719
        %v1736 = vadd.s32 %v1731, %v1733
        %vm1737 = vc.u32 %v1731, %v1733
        %v1738 = vadd.s32 %v1734, 1
        %v1739 = vsel %vm1737, %v1738, %v1734
        %v1740 = vadd.s32 %v1735, %v1739
        %v1741 = vadd.s32 %v1740, 536870912
        %v1742 = vshrl.u32 %v1741, 30
        %v1743 = vshll.u32 %v1742, 30
        %v1744 = vsub.s32 %v1740, %v1743
        %vm1745 = vcmp.lt.s32.totalorder %v1744, 0
        %v1746 = vsub.s32 0, %v1744
        %v1747 = vsel %vm1745, %v1746, %v1744
        %v1748 = vclz %v1747
        %v1749 = vsub.s32 %v1748, 2
        %vm1750 = vcmp.gt.s32.totalorder 0, %v1749
        %v1751 = vsel %vm1750, 0, %v1749
        %v1752 = vsub.s32 32, %v1751
        %v1753 = vshll.u32 %v1744, %v1751
        %v1754 = vshrl.u32 %v1736, %v1752
        %v1755 = vor.u32 %v1753, %v1754
        %v1756 = vsub.s32 4294967266, %v1751
        %v1757 = vadd.s32 %v1756, 127
        %v1758 = vshll.u32 %v1757, 23
        %v1759 = vor.u32 4788187, %v1758
        %v1760 = vand.u32 2147483647, %v1759
        %v1762 = vcvt.s32.f32 %v1755
        %v1763 = vmul.f32 %v1762, %v1760
        %v1764 = vxor.u32 %v1763, 2147483648
        %v1765 = vsel %vm1682, %v1764, %v1763
        %v1766 = vsub.s32 4, %v1742
        %v1767 = vsel %vm1682, %v1766, %v1742
        %v1768 = vsel %vm1681, %v1573, %v1765
        %v1769 = vsel %vm1681, 0, %v1767
        %v1770 = vcosq.f32.pop %v1768
        %v1771 = vsinq.f32.pop %v1768
        %vm1772 = vweird.f32 %v1573
        %v1773 = vadd.s32 %v1769, 3
        %v1774 = vand.u32 %v1773, 3
        %vm1775 = vcmp.lt.s32.totalorder %v1774, 2
        %vm1776 = vcmp.eq.s32.totalorder %v1774, 0
        %v1777 = vxor.u32 %v1771, 2147483648
        %v1778 = vsel %vm1776, %v1770, %v1777
        %vm1779 = vcmp.eq.s32.totalorder %v1774, 2
        %v1780 = vxor.u32 %v1770, 2147483648
        %v1781 = vsel %vm1779, %v1780, %v1771
        %v1782 = vsel %vm1775, %v1778, %v1781
        %v1783 = vsel %vm1772, nan, %v1782
        %v1784 = vand.u32 2147483647, %v1574
        %vm1785 = vcmp.le.f32.partialorder %v1784, 0.7853982
        %vm1786 = vcmp.lt.s32.totalorder %v1574, 0
        %v1787 = vand.u32 %v1574, 2139095040
        %v1788 = vshrl.u32 %v1787, 23
        %v1789 = vsub.s32 %v1788, 127
        %v1790 = vand.u32 2147483647, %v1574
        %v1791 = vand.u32 %v1790, 8388607
        %v1792 = vor.u32 %v1791, 8388608
        %v1793 = vsub.s32 0, %v1792
        %v1794 = vadd.s32 %v1789, 1
        %vm1795 = vcmp.gt.s32.totalorder %v1794, 0
        %v1796 = vsel %vm1795, %v1794, 0
        %v1797 = vshrl.u32 %v1796, 5
        %v1798 = vand.u32 %v1796, 31
        %v1799 = vsub.s32 32, %v1798
        %v1800 = vshrl.u32 683565275, %v1799
        %v1801 = vshll.u32 683565275, %v1798
        %v1802 = vshrl.u32 2475754826, %v1799
        %v1803 = vor.u32 %v1801, %v1802
        %v1804 = vshll.u32 2475754826, %v1798
        %v1805 = vshrl.u32 2131351028, %v1799
        %v1806 = vor.u32 %v1804, %v1805
        %v1807 = vshll.u32 2131351028, %v1798
        %v1808 = vshrl.u32 2102212464, %v1799
        %v1809 = vor.u32 %v1807, %v1808
        %v1810 = vshll.u32 2102212464, %v1798
        %v1811 = vshrl.u32 920167782, %v1799
        %v1812 = vor.u32 %v1810, %v1811
        %v1813 = vshll.u32 920167782, %v1798
        %v1814 = vshrl.u32 1326507024, %v1799
        %v1815 = vor.u32 %v1813, %v1814
        %vm1816 = vcmp.lt.s32.totalorder %v1797, 1
        %vm1817 = vcmp.lt.s32.totalorder %v1797, 2
        %vm1818 = vcmp.lt.s32.totalorder %v1797, 3
        %vm1819 = vcmp.lt.s32.totalorder %v1797, 4
        %v1820 = vsel %vm1816, %v1800, %v1803
        %v1821 = vsel %vm1819, %v1809, 2102212464
        %v1822 = vsel %vm1818, %v1806, %v1821
        %v1823 = vsel %vm1817, %v1820, %v1822
        %v1824 = vsel %vm1816, %v1803, %v1806
        %v1825 = vsel %vm1819, %v1812, 920167782
        %v1826 = vsel %vm1818, %v1809, %v1825
        %v1827 = vsel %vm1817, %v1824, %v1826
        %v1828 = vsel %vm1816, %v1806, %v1809
        %v1829 = vsel %vm1819, %v1815, 1326507024
        %v1830 = vsel %vm1818, %v1812, %v1829
        %v1831 = vsel %vm1817, %v1828, %v1830
        %v1832 = vshll.u32 %v1792, 8
        %v1833 = vmul.u32.u64.compose %v1832, %v1831
        %v1834 = vextract.low.u32 %v1833
        %v1835 = vextract.high.u32 %v1833
        %v1836 = vmul.u32.u64.compose %v1832, %v1827
        %v1837 = vextract.low.u32 %v1836
        %v1838 = vextract.high.u32 %v1836
        %v1839 = vmul.u32 %v1832, %v1823
        %v1840 = vadd.s32 %v1835, %v1837
        %vm1841 = vc.u32 %v1835, %v1837
        %v1842 = vadd.s32 %v1838, 1
        %v1843 = vsel %vm1841, %v1842, %v1838
        %v1844 = vadd.s32 %v1839, %v1843
        %v1845 = vadd.s32 %v1844, 536870912
        %v1846 = vshrl.u32 %v1845, 30
        %v1847 = vshll.u32 %v1846, 30
        %v1848 = vsub.s32 %v1844, %v1847
        %vm1849 = vcmp.lt.s32.totalorder %v1848, 0
        %v1850 = vsub.s32 0, %v1848
        %v1851 = vsel %vm1849, %v1850, %v1848
        %v1852 = vclz %v1851
        %v1853 = vsub.s32 %v1852, 2
        %vm1854 = vcmp.gt.s32.totalorder 0, %v1853
        %v1855 = vsel %vm1854, 0, %v1853
        %v1856 = vsub.s32 32, %v1855
        %v1857 = vshll.u32 %v1848, %v1855
        %v1858 = vshrl.u32 %v1840, %v1856
        %v1859 = vor.u32 %v1857, %v1858
        %v1860 = vsub.s32 4294967266, %v1855
        %v1861 = vadd.s32 %v1860, 127
        %v1862 = vshll.u32 %v1861, 23
        %v1863 = vor.u32 4788187, %v1862
        %v1864 = vand.u32 2147483647, %v1863
        %v1866 = vcvt.s32.f32 %v1859
        %v1867 = vmul.f32 %v1866, %v1864
        %v1868 = vxor.u32 %v1867, 2147483648
        %v1869 = vsel %vm1786, %v1868, %v1867
        %v1870 = vsub.s32 4, %v1846
        %v1871 = vsel %vm1786, %v1870, %v1846
        %v1872 = vsel %vm1785, %v1574, %v1869
        %v1873 = vsel %vm1785, 0, %v1871
        %v1874 = vcosq.f32.pop %v1872
        %v1875 = vsinq.f32.pop %v1872
        %vm1876 = vweird.f32 %v1574
        %v1877 = vadd.s32 %v1873, 3
        %v1878 = vand.u32 %v1877, 3
        %vm1879 = vcmp.lt.s32.totalorder %v1878, 2
        %vm1880 = vcmp.eq.s32.totalorder %v1878, 0
        %v1881 = vxor.u32 %v1875, 2147483648
        %v1882 = vsel %vm1880, %v1874, %v1881
        %vm1883 = vcmp.eq.s32.totalorder %v1878, 2
        %v1884 = vxor.u32 %v1874, 2147483648
        %v1885 = vsel %vm1883, %v1884, %v1875
        %v1886 = vsel %vm1879, %v1882, %v1885
        %v1887 = vsel %vm1876, nan, %v1886
        %v1888 = vand.u32 2147483647, %v1575
        %vm1889 = vcmp.le.f32.partialorder %v1888, 0.7853982
        %vm1890 = vcmp.lt.s32.totalorder %v1575, 0
        %v1891 = vand.u32 %v1575, 2139095040
        %v1892 = vshrl.u32 %v1891, 23
        %v1893 = vsub.s32 %v1892, 127
        %v1894 = vand.u32 2147483647, %v1575
        %v1895 = vand.u32 %v1894, 8388607
        %v1896 = vor.u32 %v1895, 8388608
        %v1897 = vsub.s32 0, %v1896
        %v1898 = vadd.s32 %v1893, 1
        %vm1899 = vcmp.gt.s32.totalorder %v1898, 0
        %v1900 = vsel %vm1899, %v1898, 0
        %v1901 = vshrl.u32 %v1900, 5
        %v1902 = vand.u32 %v1900, 31
        %v1903 = vsub.s32 32, %v1902
        %v1904 = vshrl.u32 683565275, %v1903
        %v1905 = vshll.u32 683565275, %v1902
        %v1906 = vshrl.u32 2475754826, %v1903
        %v1907 = vor.u32 %v1905, %v1906
        %v1908 = vshll.u32 2475754826, %v1902
        %v1909 = vshrl.u32 2131351028, %v1903
        %v1910 = vor.u32 %v1908, %v1909
        %v1911 = vshll.u32 2131351028, %v1902
        %v1912 = vshrl.u32 2102212464, %v1903
        %v1913 = vor.u32 %v1911, %v1912
        %v1914 = vshll.u32 2102212464, %v1902
        %v1915 = vshrl.u32 920167782, %v1903
        %v1916 = vor.u32 %v1914, %v1915
        %v1917 = vshll.u32 920167782, %v1902
        %v1918 = vshrl.u32 1326507024, %v1903
        %v1919 = vor.u32 %v1917, %v1918
        %vm1920 = vcmp.lt.s32.totalorder %v1901, 1
        %vm1921 = vcmp.lt.s32.totalorder %v1901, 2
        %vm1922 = vcmp.lt.s32.totalorder %v1901, 3
        %vm1923 = vcmp.lt.s32.totalorder %v1901, 4
        %v1924 = vsel %vm1920, %v1904, %v1907
        %v1925 = vsel %vm1923, %v1913, 2102212464
        %v1926 = vsel %vm1922, %v1910, %v1925
        %v1927 = vsel %vm1921, %v1924, %v1926
        %v1928 = vsel %vm1920, %v1907, %v1910
        %v1929 = vsel %vm1923, %v1916, 920167782
        %v1930 = vsel %vm1922, %v1913, %v1929
        %v1931 = vsel %vm1921, %v1928, %v1930
        %v1932 = vsel %vm1920, %v1910, %v1913
        %v1933 = vsel %vm1923, %v1919, 1326507024
        %v1934 = vsel %vm1922, %v1916, %v1933
        %v1935 = vsel %vm1921, %v1932, %v1934
        %v1936 = vshll.u32 %v1896, 8
        %v1937 = vmul.u32.u64.compose %v1936, %v1935
        %v1938 = vextract.low.u32 %v1937
        %v1939 = vextract.high.u32 %v1937
        %v1940 = vmul.u32.u64.compose %v1936, %v1931
        %v1941 = vextract.low.u32 %v1940
        %v1942 = vextract.high.u32 %v1940
        %v1943 = vmul.u32 %v1936, %v1927
        %v1944 = vadd.s32 %v1939, %v1941
        %vm1945 = vc.u32 %v1939, %v1941
        %v1946 = vadd.s32 %v1942, 1
        %v1947 = vsel %vm1945, %v1946, %v1942
        %v1948 = vadd.s32 %v1943, %v1947
        %v1949 = vadd.s32 %v1948, 536870912
        %v1950 = vshrl.u32 %v1949, 30
        %v1951 = vshll.u32 %v1950, 30
        %v1952 = vsub.s32 %v1948, %v1951
        %vm1953 = vcmp.lt.s32.totalorder %v1952, 0
        %v1954 = vsub.s32 0, %v1952
        %v1955 = vsel %vm1953, %v1954, %v1952
        %v1956 = vclz %v1955
        %v1957 = vsub.s32 %v1956, 2
        %vm1958 = vcmp.gt.s32.totalorder 0, %v1957
        %v1959 = vsel %vm1958, 0, %v1957
        %v1960 = vsub.s32 32, %v1959
        %v1961 = vshll.u32 %v1952, %v1959
        %v1962 = vshrl.u32 %v1944, %v1960
        %v1963 = vor.u32 %v1961, %v1962
        %v1964 = vsub.s32 4294967266, %v1959
        %v1965 = vadd.s32 %v1964, 127
        %v1966 = vshll.u32 %v1965, 23
        %v1967 = vor.u32 4788187, %v1966
        %v1968 = vand.u32 2147483647, %v1967
        %v1970 = vcvt.s32.f32 %v1963
        %v1971 = vmul.f32 %v1970, %v1968
        %v1972 = vxor.u32 %v1971, 2147483648
        %v1973 = vsel %vm1890, %v1972, %v1971
        %v1974 = vsub.s32 4, %v1950
        %v1975 = vsel %vm1890, %v1974, %v1950
        %v1976 = vsel %vm1889, %v1575, %v1973
        %v1977 = vsel %vm1889, 0, %v1975
        %v1978 = vcosq.f32.pop %v1976
        %v1979 = vsinq.f32.pop %v1976
        %vm1980 = vweird.f32 %v1575
        %v1981 = vadd.s32 %v1977, 3
        %v1982 = vand.u32 %v1981, 3
        %vm1983 = vcmp.lt.s32.totalorder %v1982, 2
        %vm1984 = vcmp.eq.s32.totalorder %v1982, 0
        %v1985 = vxor.u32 %v1979, 2147483648
        %v1986 = vsel %vm1984, %v1978, %v1985
        %vm1987 = vcmp.eq.s32.totalorder %v1982, 2
        %v1988 = vxor.u32 %v1978, 2147483648
        %v1989 = vsel %vm1987, %v1988, %v1979
        %v1990 = vsel %vm1983, %v1986, %v1989
        %v1991 = vsel %vm1980, nan, %v1990
        %v1992 = vstv %s1564
        %v1993 = vmul.f32 %v1992, %v1679
        %v1994 = vmul.f32 %v1992, %v1783
        %v1995 = vmul.f32 %v1992, %v1887
        %v1996 = vmul.f32 %v1992, %v1991
        %s1997 = scalar_lea.vmem %s285, 32 [#allocation2]
        %v1998 = vld [vmem:[%s1997] sm:$0xf]
        %v1999 = vld [vmem:[%s1997 + $0x4] sm:$0xf]
        %v2000 = vld [vmem:[%s1997 + $0x8] sm:$0xf]
        %v2001 = vld [vmem:[%s1997 + $0xc] sm:$0xf]
        %v2002 = vunpack.c.l.bf16 %v1998
        %v2003 = vunpack.c.l.bf16 %v1999
        %v2004 = vunpack.c.l.bf16 %v2000
        %v2005 = vunpack.c.l.bf16 %v2001
        %v2006 = vmul.f32 %v1992, %v2002
        %v2007 = vmul.f32 %v1992, %v2003
        %v2008 = vmul.f32 %v1992, %v2004
        %v2009 = vmul.f32 %v1992, %v2005
        %v2010 = vadd.f32 %v1556, %v1993
        %v2011 = vadd.f32 %v1557, %v1994
        %v2012 = vadd.f32 %v1558, %v1995
        %v2013 = vadd.f32 %v1559, %v1996
        %v2014 = vadd.f32 %v1560, %v2006
        %v2015 = vadd.f32 %v1561, %v2007
        %v2016 = vadd.f32 %v1562, %v2008
        %v2017 = vadd.f32 %v1563, %v2009
        %s2018 = sld [smem:[#allocation7 + $0x3]]
        %v2019 = vmul.f32 %v645, 25.132742
        %v2020 = vmul.f32 %v646, 25.132742
        %v2021 = vmul.f32 %v647, 25.132742
        %v2022 = vmul.f32 %v648, 25.132742
        %s2023 = sld [smem:[#allocation6 + $0x3]]
        %s2024 = smul.f32 %s2023, 6.2831855
        %v2025 = vstv %s2024
        %v2026 = vadd.f32 %v2019, %v2025
        %v2027 = vadd.f32 %v2020, %v2025
        %v2028 = vadd.f32 %v2021, %v2025
        %v2029 = vadd.f32 %v2022, %v2025
        %v2030 = vand.u32 2147483647, %v2026
        %vm2031 = vcmp.le.f32.partialorder %v2030, 0.7853982
        %vm2032 = vcmp.lt.s32.totalorder %v2026, 0
        %v2033 = vand.u32 %v2026, 2139095040
        %v2034 = vshrl.u32 %v2033, 23
        %v2035 = vsub.s32 %v2034, 127
        %v2036 = vand.u32 2147483647, %v2026
        %v2037 = vand.u32 %v2036, 8388607
        %v2038 = vor.u32 %v2037, 8388608
        %v2039 = vsub.s32 0, %v2038
        %v2040 = vadd.s32 %v2035, 1
        %vm2041 = vcmp.gt.s32.totalorder %v2040, 0
        %v2042 = vsel %vm2041, %v2040, 0
        %v2043 = vshrl.u32 %v2042, 5
        %v2044 = vand.u32 %v2042, 31
        %v2045 = vsub.s32 32, %v2044
        %v2046 = vshrl.u32 683565275, %v2045
        %v2047 = vshll.u32 683565275, %v2044
        %v2048 = vshrl.u32 2475754826, %v2045
        %v2049 = vor.u32 %v2047, %v2048
        %v2050 = vshll.u32 2475754826, %v2044
        %v2051 = vshrl.u32 2131351028, %v2045
        %v2052 = vor.u32 %v2050, %v2051
        %v2053 = vshll.u32 2131351028, %v2044
        %v2054 = vshrl.u32 2102212464, %v2045
        %v2055 = vor.u32 %v2053, %v2054
        %v2056 = vshll.u32 2102212464, %v2044
        %v2057 = vshrl.u32 920167782, %v2045
        %v2058 = vor.u32 %v2056, %v2057
        %v2059 = vshll.u32 920167782, %v2044
        %v2060 = vshrl.u32 1326507024, %v2045
        %v2061 = vor.u32 %v2059, %v2060
        %vm2062 = vcmp.lt.s32.totalorder %v2043, 1
        %vm2063 = vcmp.lt.s32.totalorder %v2043, 2
        %vm2064 = vcmp.lt.s32.totalorder %v2043, 3
        %vm2065 = vcmp.lt.s32.totalorder %v2043, 4
        %v2066 = vsel %vm2062, %v2046, %v2049
        %v2067 = vsel %vm2065, %v2055, 2102212464
        %v2068 = vsel %vm2064, %v2052, %v2067
        %v2069 = vsel %vm2063, %v2066, %v2068
        %v2070 = vsel %vm2062, %v2049, %v2052
        %v2071 = vsel %vm2065, %v2058, 920167782
        %v2072 = vsel %vm2064, %v2055, %v2071
        %v2073 = vsel %vm2063, %v2070, %v2072
        %v2074 = vsel %vm2062, %v2052, %v2055
        %v2075 = vsel %vm2065, %v2061, 1326507024
        %v2076 = vsel %vm2064, %v2058, %v2075
        %v2077 = vsel %vm2063, %v2074, %v2076
        %v2078 = vshll.u32 %v2038, 8
        %v2079 = vmul.u32.u64.compose %v2078, %v2077
        %v2080 = vextract.low.u32 %v2079
        %v2081 = vextract.high.u32 %v2079
        %v2082 = vmul.u32.u64.compose %v2078, %v2073
        %v2083 = vextract.low.u32 %v2082
        %v2084 = vextract.high.u32 %v2082
        %v2085 = vmul.u32 %v2078, %v2069
        %v2086 = vadd.s32 %v2081, %v2083
        %vm2087 = vc.u32 %v2081, %v2083
        %v2088 = vadd.s32 %v2084, 1
        %v2089 = vsel %vm2087, %v2088, %v2084
        %v2090 = vadd.s32 %v2085, %v2089
        %v2091 = vadd.s32 %v2090, 536870912
        %v2092 = vshrl.u32 %v2091, 30
        %v2093 = vshll.u32 %v2092, 30
        %v2094 = vsub.s32 %v2090, %v2093
        %vm2095 = vcmp.lt.s32.totalorder %v2094, 0
        %v2096 = vsub.s32 0, %v2094
        %v2097 = vsel %vm2095, %v2096, %v2094
        %v2098 = vclz %v2097
        %v2099 = vsub.s32 %v2098, 2
        %vm2100 = vcmp.gt.s32.totalorder 0, %v2099
        %v2101 = vsel %vm2100, 0, %v2099
        %v2102 = vsub.s32 32, %v2101
        %v2103 = vshll.u32 %v2094, %v2101
        %v2104 = vshrl.u32 %v2086, %v2102
        %v2105 = vor.u32 %v2103, %v2104
        %v2106 = vsub.s32 4294967266, %v2101
        %v2107 = vadd.s32 %v2106, 127
        %v2108 = vshll.u32 %v2107, 23
        %v2109 = vor.u32 4788187, %v2108
        %v2110 = vand.u32 2147483647, %v2109
        %v2112 = vcvt.s32.f32 %v2105
        %v2113 = vmul.f32 %v2112, %v2110
        %v2114 = vxor.u32 %v2113, 2147483648
        %v2115 = vsel %vm2032, %v2114, %v2113
        %v2116 = vsub.s32 4, %v2092
        %v2117 = vsel %vm2032, %v2116, %v2092
        %v2118 = vsel %vm2031, %v2026, %v2115
        %v2119 = vsel %vm2031, 0, %v2117
        %v2120 = vcosq.f32.pop %v2118
        %v2121 = vsinq.f32.pop %v2118
        %vm2122 = vweird.f32 %v2026
        %v2123 = vadd.s32 %v2119, 3
        %v2124 = vand.u32 %v2123, 3
        %vm2125 = vcmp.lt.s32.totalorder %v2124, 2
        %vm2126 = vcmp.eq.s32.totalorder %v2124, 0
        %v2127 = vxor.u32 %v2121, 2147483648
        %v2128 = vsel %vm2126, %v2120, %v2127
        %vm2129 = vcmp.eq.s32.totalorder %v2124, 2
        %v2130 = vxor.u32 %v2120, 2147483648
        %v2131 = vsel %vm2129, %v2130, %v2121
        %v2132 = vsel %vm2125, %v2128, %v2131
        %v2133 = vsel %vm2122, nan, %v2132
        %v2134 = vand.u32 2147483647, %v2027
        %vm2135 = vcmp.le.f32.partialorder %v2134, 0.7853982
        %vm2136 = vcmp.lt.s32.totalorder %v2027, 0
        %v2137 = vand.u32 %v2027, 2139095040
        %v2138 = vshrl.u32 %v2137, 23
        %v2139 = vsub.s32 %v2138, 127
        %v2140 = vand.u32 2147483647, %v2027
        %v2141 = vand.u32 %v2140, 8388607
        %v2142 = vor.u32 %v2141, 8388608
        %v2143 = vsub.s32 0, %v2142
        %v2144 = vadd.s32 %v2139, 1
        %vm2145 = vcmp.gt.s32.totalorder %v2144, 0
        %v2146 = vsel %vm2145, %v2144, 0
        %v2147 = vshrl.u32 %v2146, 5
        %v2148 = vand.u32 %v2146, 31
        %v2149 = vsub.s32 32, %v2148
        %v2150 = vshrl.u32 683565275, %v2149
        %v2151 = vshll.u32 683565275, %v2148
        %v2152 = vshrl.u32 2475754826, %v2149
        %v2153 = vor.u32 %v2151, %v2152
        %v2154 = vshll.u32 2475754826, %v2148
        %v2155 = vshrl.u32 2131351028, %v2149
        %v2156 = vor.u32 %v2154, %v2155
        %v2157 = vshll.u32 2131351028, %v2148
        %v2158 = vshrl.u32 2102212464, %v2149
        %v2159 = vor.u32 %v2157, %v2158
        %v2160 = vshll.u32 2102212464, %v2148
        %v2161 = vshrl.u32 920167782, %v2149
        %v2162 = vor.u32 %v2160, %v2161
        %v2163 = vshll.u32 920167782, %v2148
        %v2164 = vshrl.u32 1326507024, %v2149
        %v2165 = vor.u32 %v2163, %v2164
        %vm2166 = vcmp.lt.s32.totalorder %v2147, 1
        %vm2167 = vcmp.lt.s32.totalorder %v2147, 2
        %vm2168 = vcmp.lt.s32.totalorder %v2147, 3
        %vm2169 = vcmp.lt.s32.totalorder %v2147, 4
        %v2170 = vsel %vm2166, %v2150, %v2153
        %v2171 = vsel %vm2169, %v2159, 2102212464
        %v2172 = vsel %vm2168, %v2156, %v2171
        %v2173 = vsel %vm2167, %v2170, %v2172
        %v2174 = vsel %vm2166, %v2153, %v2156
        %v2175 = vsel %vm2169, %v2162, 920167782
        %v2176 = vsel %vm2168, %v2159, %v2175
        %v2177 = vsel %vm2167, %v2174, %v2176
        %v2178 = vsel %vm2166, %v2156, %v2159
        %v2179 = vsel %vm2169, %v2165, 1326507024
        %v2180 = vsel %vm2168, %v2162, %v2179
        %v2181 = vsel %vm2167, %v2178, %v2180
        %v2182 = vshll.u32 %v2142, 8
        %v2183 = vmul.u32.u64.compose %v2182, %v2181
        %v2184 = vextract.low.u32 %v2183
        %v2185 = vextract.high.u32 %v2183
        %v2186 = vmul.u32.u64.compose %v2182, %v2177
        %v2187 = vextract.low.u32 %v2186
        %v2188 = vextract.high.u32 %v2186
        %v2189 = vmul.u32 %v2182, %v2173
        %v2190 = vadd.s32 %v2185, %v2187
        %vm2191 = vc.u32 %v2185, %v2187
        %v2192 = vadd.s32 %v2188, 1
        %v2193 = vsel %vm2191, %v2192, %v2188
        %v2194 = vadd.s32 %v2189, %v2193
        %v2195 = vadd.s32 %v2194, 536870912
        %v2196 = vshrl.u32 %v2195, 30
        %v2197 = vshll.u32 %v2196, 30
        %v2198 = vsub.s32 %v2194, %v2197
        %vm2199 = vcmp.lt.s32.totalorder %v2198, 0
        %v2200 = vsub.s32 0, %v2198
        %v2201 = vsel %vm2199, %v2200, %v2198
        %v2202 = vclz %v2201
        %v2203 = vsub.s32 %v2202, 2
        %vm2204 = vcmp.gt.s32.totalorder 0, %v2203
        %v2205 = vsel %vm2204, 0, %v2203
        %v2206 = vsub.s32 32, %v2205
        %v2207 = vshll.u32 %v2198, %v2205
        %v2208 = vshrl.u32 %v2190, %v2206
        %v2209 = vor.u32 %v2207, %v2208
        %v2210 = vsub.s32 4294967266, %v2205
        %v2211 = vadd.s32 %v2210, 127
        %v2212 = vshll.u32 %v2211, 23
        %v2213 = vor.u32 4788187, %v2212
        %v2214 = vand.u32 2147483647, %v2213
        %v2216 = vcvt.s32.f32 %v2209
        %v2217 = vmul.f32 %v2216, %v2214
        %v2218 = vxor.u32 %v2217, 2147483648
        %v2219 = vsel %vm2136, %v2218, %v2217
        %v2220 = vsub.s32 4, %v2196
        %v2221 = vsel %vm2136, %v2220, %v2196
        %v2222 = vsel %vm2135, %v2027, %v2219
        %v2223 = vsel %vm2135, 0, %v2221
        %v2224 = vcosq.f32.pop %v2222
        %v2225 = vsinq.f32.pop %v2222
        %vm2226 = vweird.f32 %v2027
        %v2227 = vadd.s32 %v2223, 3
        %v2228 = vand.u32 %v2227, 3
        %vm2229 = vcmp.lt.s32.totalorder %v2228, 2
        %vm2230 = vcmp.eq.s32.totalorder %v2228, 0
        %v2231 = vxor.u32 %v2225, 2147483648
        %v2232 = vsel %vm2230, %v2224, %v2231
        %vm2233 = vcmp.eq.s32.totalorder %v2228, 2
        %v2234 = vxor.u32 %v2224, 2147483648
        %v2235 = vsel %vm2233, %v2234, %v2225
        %v2236 = vsel %vm2229, %v2232, %v2235
        %v2237 = vsel %vm2226, nan, %v2236
        %v2238 = vand.u32 2147483647, %v2028
        %vm2239 = vcmp.le.f32.partialorder %v2238, 0.7853982
        %vm2240 = vcmp.lt.s32.totalorder %v2028, 0
        %v2241 = vand.u32 %v2028, 2139095040
        %v2242 = vshrl.u32 %v2241, 23
        %v2243 = vsub.s32 %v2242, 127
        %v2244 = vand.u32 2147483647, %v2028
        %v2245 = vand.u32 %v2244, 8388607
        %v2246 = vor.u32 %v2245, 8388608
        %v2247 = vsub.s32 0, %v2246
        %v2248 = vadd.s32 %v2243, 1
        %vm2249 = vcmp.gt.s32.totalorder %v2248, 0
        %v2250 = vsel %vm2249, %v2248, 0
        %v2251 = vshrl.u32 %v2250, 5
        %v2252 = vand.u32 %v2250, 31
        %v2253 = vsub.s32 32, %v2252
        %v2254 = vshrl.u32 683565275, %v2253
        %v2255 = vshll.u32 683565275, %v2252
        %v2256 = vshrl.u32 2475754826, %v2253
        %v2257 = vor.u32 %v2255, %v2256
        %v2258 = vshll.u32 2475754826, %v2252
        %v2259 = vshrl.u32 2131351028, %v2253
        %v2260 = vor.u32 %v2258, %v2259
        %v2261 = vshll.u32 2131351028, %v2252
        %v2262 = vshrl.u32 2102212464, %v2253
        %v2263 = vor.u32 %v2261, %v2262
        %v2264 = vshll.u32 2102212464, %v2252
        %v2265 = vshrl.u32 920167782, %v2253
        %v2266 = vor.u32 %v2264, %v2265
        %v2267 = vshll.u32 920167782, %v2252
        %v2268 = vshrl.u32 1326507024, %v2253
        %v2269 = vor.u32 %v2267, %v2268
        %vm2270 = vcmp.lt.s32.totalorder %v2251, 1
        %vm2271 = vcmp.lt.s32.totalorder %v2251, 2
        %vm2272 = vcmp.lt.s32.totalorder %v2251, 3
        %vm2273 = vcmp.lt.s32.totalorder %v2251, 4
        %v2274 = vsel %vm2270, %v2254, %v2257
        %v2275 = vsel %vm2273, %v2263, 2102212464
        %v2276 = vsel %vm2272, %v2260, %v2275
        %v2277 = vsel %vm2271, %v2274, %v2276
        %v2278 = vsel %vm2270, %v2257, %v2260
        %v2279 = vsel %vm2273, %v2266, 920167782
        %v2280 = vsel %vm2272, %v2263, %v2279
        %v2281 = vsel %vm2271, %v2278, %v2280
        %v2282 = vsel %vm2270, %v2260, %v2263
        %v2283 = vsel %vm2273, %v2269, 1326507024
        %v2284 = vsel %vm2272, %v2266, %v2283
        %v2285 = vsel %vm2271, %v2282, %v2284
        %v2286 = vshll.u32 %v2246, 8
        %v2287 = vmul.u32.u64.compose %v2286, %v2285
        %v2288 = vextract.low.u32 %v2287
        %v2289 = vextract.high.u32 %v2287
        %v2290 = vmul.u32.u64.compose %v2286, %v2281
        %v2291 = vextract.low.u32 %v2290
        %v2292 = vextract.high.u32 %v2290
        %v2293 = vmul.u32 %v2286, %v2277
        %v2294 = vadd.s32 %v2289, %v2291
        %vm2295 = vc.u32 %v2289, %v2291
        %v2296 = vadd.s32 %v2292, 1
        %v2297 = vsel %vm2295, %v2296, %v2292
        %v2298 = vadd.s32 %v2293, %v2297
        %v2299 = vadd.s32 %v2298, 536870912
        %v2300 = vshrl.u32 %v2299, 30
        %v2301 = vshll.u32 %v2300, 30
        %v2302 = vsub.s32 %v2298, %v2301
        %vm2303 = vcmp.lt.s32.totalorder %v2302, 0
        %v2304 = vsub.s32 0, %v2302
        %v2305 = vsel %vm2303, %v2304, %v2302
        %v2306 = vclz %v2305
        %v2307 = vsub.s32 %v2306, 2
        %vm2308 = vcmp.gt.s32.totalorder 0, %v2307
        %v2309 = vsel %vm2308, 0, %v2307
        %v2310 = vsub.s32 32, %v2309
        %v2311 = vshll.u32 %v2302, %v2309
        %v2312 = vshrl.u32 %v2294, %v2310
        %v2313 = vor.u32 %v2311, %v2312
        %v2314 = vsub.s32 4294967266, %v2309
        %v2315 = vadd.s32 %v2314, 127
        %v2316 = vshll.u32 %v2315, 23
        %v2317 = vor.u32 4788187, %v2316
        %v2318 = vand.u32 2147483647, %v2317
        %v2320 = vcvt.s32.f32 %v2313
        %v2321 = vmul.f32 %v2320, %v2318
        %v2322 = vxor.u32 %v2321, 2147483648
        %v2323 = vsel %vm2240, %v2322, %v2321
        %v2324 = vsub.s32 4, %v2300
        %v2325 = vsel %vm2240, %v2324, %v2300
        %v2326 = vsel %vm2239, %v2028, %v2323
        %v2327 = vsel %vm2239, 0, %v2325
        %v2328 = vcosq.f32.pop %v2326
        %v2329 = vsinq.f32.pop %v2326
        %vm2330 = vweird.f32 %v2028
        %v2331 = vadd.s32 %v2327, 3
        %v2332 = vand.u32 %v2331, 3
        %vm2333 = vcmp.lt.s32.totalorder %v2332, 2
        %vm2334 = vcmp.eq.s32.totalorder %v2332, 0
        %v2335 = vxor.u32 %v2329, 2147483648
        %v2336 = vsel %vm2334, %v2328, %v2335
        %vm2337 = vcmp.eq.s32.totalorder %v2332, 2
        %v2338 = vxor.u32 %v2328, 2147483648
        %v2339 = vsel %vm2337, %v2338, %v2329
        %v2340 = vsel %vm2333, %v2336, %v2339
        %v2341 = vsel %vm2330, nan, %v2340
        %v2342 = vand.u32 2147483647, %v2029
        %vm2343 = vcmp.le.f32.partialorder %v2342, 0.7853982
        %vm2344 = vcmp.lt.s32.totalorder %v2029, 0
        %v2345 = vand.u32 %v2029, 2139095040
        %v2346 = vshrl.u32 %v2345, 23
        %v2347 = vsub.s32 %v2346, 127
        %v2348 = vand.u32 2147483647, %v2029
        %v2349 = vand.u32 %v2348, 8388607
        %v2350 = vor.u32 %v2349, 8388608
        %v2351 = vsub.s32 0, %v2350
        %v2352 = vadd.s32 %v2347, 1
        %vm2353 = vcmp.gt.s32.totalorder %v2352, 0
        %v2354 = vsel %vm2353, %v2352, 0
        %v2355 = vshrl.u32 %v2354, 5
        %v2356 = vand.u32 %v2354, 31
        %v2357 = vsub.s32 32, %v2356
        %v2358 = vshrl.u32 683565275, %v2357
        %v2359 = vshll.u32 683565275, %v2356
        %v2360 = vshrl.u32 2475754826, %v2357
        %v2361 = vor.u32 %v2359, %v2360
        %v2362 = vshll.u32 2475754826, %v2356
        %v2363 = vshrl.u32 2131351028, %v2357
        %v2364 = vor.u32 %v2362, %v2363
        %v2365 = vshll.u32 2131351028, %v2356
        %v2366 = vshrl.u32 2102212464, %v2357
        %v2367 = vor.u32 %v2365, %v2366
        %v2368 = vshll.u32 2102212464, %v2356
        %v2369 = vshrl.u32 920167782, %v2357
        %v2370 = vor.u32 %v2368, %v2369
        %v2371 = vshll.u32 920167782, %v2356
        %v2372 = vshrl.u32 1326507024, %v2357
        %v2373 = vor.u32 %v2371, %v2372
        %vm2374 = vcmp.lt.s32.totalorder %v2355, 1
        %vm2375 = vcmp.lt.s32.totalorder %v2355, 2
        %vm2376 = vcmp.lt.s32.totalorder %v2355, 3
        %vm2377 = vcmp.lt.s32.totalorder %v2355, 4
        %v2378 = vsel %vm2374, %v2358, %v2361
        %v2379 = vsel %vm2377, %v2367, 2102212464
        %v2380 = vsel %vm2376, %v2364, %v2379
        %v2381 = vsel %vm2375, %v2378, %v2380
        %v2382 = vsel %vm2374, %v2361, %v2364
        %v2383 = vsel %vm2377, %v2370, 920167782
        %v2384 = vsel %vm2376, %v2367, %v2383
        %v2385 = vsel %vm2375, %v2382, %v2384
        %v2386 = vsel %vm2374, %v2364, %v2367
        %v2387 = vsel %vm2377, %v2373, 1326507024
        %v2388 = vsel %vm2376, %v2370, %v2387
        %v2389 = vsel %vm2375, %v2386, %v2388
        %v2390 = vshll.u32 %v2350, 8
        %v2391 = vmul.u32.u64.compose %v2390, %v2389
        %v2392 = vextract.low.u32 %v2391
        %v2393 = vextract.high.u32 %v2391
        %v2394 = vmul.u32.u64.compose %v2390, %v2385
        %v2395 = vextract.low.u32 %v2394
        %v2396 = vextract.high.u32 %v2394
        %v2397 = vmul.u32 %v2390, %v2381
        %v2398 = vadd.s32 %v2393, %v2395
        %vm2399 = vc.u32 %v2393, %v2395
        %v2400 = vadd.s32 %v2396, 1
        %v2401 = vsel %vm2399, %v2400, %v2396
        %v2402 = vadd.s32 %v2397, %v2401
        %v2403 = vadd.s32 %v2402, 536870912
        %v2404 = vshrl.u32 %v2403, 30
        %v2405 = vshll.u32 %v2404, 30
        %v2406 = vsub.s32 %v2402, %v2405
        %vm2407 = vcmp.lt.s32.totalorder %v2406, 0
        %v2408 = vsub.s32 0, %v2406
        %v2409 = vsel %vm2407, %v2408, %v2406
        %v2410 = vclz %v2409
        %v2411 = vsub.s32 %v2410, 2
        %vm2412 = vcmp.gt.s32.totalorder 0, %v2411
        %v2413 = vsel %vm2412, 0, %v2411
        %v2414 = vsub.s32 32, %v2413
        %v2415 = vshll.u32 %v2406, %v2413
        %v2416 = vshrl.u32 %v2398, %v2414
        %v2417 = vor.u32 %v2415, %v2416
        %v2418 = vsub.s32 4294967266, %v2413
        %v2419 = vadd.s32 %v2418, 127
        %v2420 = vshll.u32 %v2419, 23
        %v2421 = vor.u32 4788187, %v2420
        %v2422 = vand.u32 2147483647, %v2421
        %v2424 = vcvt.s32.f32 %v2417
        %v2425 = vmul.f32 %v2424, %v2422
        %v2426 = vxor.u32 %v2425, 2147483648
        %v2427 = vsel %vm2344, %v2426, %v2425
        %v2428 = vsub.s32 4, %v2404
        %v2429 = vsel %vm2344, %v2428, %v2404
        %v2430 = vsel %vm2343, %v2029, %v2427
        %v2431 = vsel %vm2343, 0, %v2429
        %v2432 = vcosq.f32.pop %v2430
        %v2433 = vsinq.f32.pop %v2430
        %vm2434 = vweird.f32 %v2029
        %v2435 = vadd.s32 %v2431, 3
        %v2436 = vand.u32 %v2435, 3
        %vm2437 = vcmp.lt.s32.totalorder %v2436, 2
        %vm2438 = vcmp.eq.s32.totalorder %v2436, 0
        %v2439 = vxor.u32 %v2433, 2147483648
        %v2440 = vsel %vm2438, %v2432, %v2439
        %vm2441 = vcmp.eq.s32.totalorder %v2436, 2
        %v2442 = vxor.u32 %v2432, 2147483648
        %v2443 = vsel %vm2441, %v2442, %v2433
        %v2444 = vsel %vm2437, %v2440, %v2443
        %v2445 = vsel %vm2434, nan, %v2444
        %v2446 = vstv %s2018
        %v2447 = vmul.f32 %v2446, %v2133
        %v2448 = vmul.f32 %v2446, %v2237
        %v2449 = vmul.f32 %v2446, %v2341
        %v2450 = vmul.f32 %v2446, %v2445
        %s2451 = scalar_lea.vmem %s285, 48 [#allocation2]
        %v2452 = vld [vmem:[%s2451] sm:$0xf]
        %v2453 = vld [vmem:[%s2451 + $0x4] sm:$0xf]
        %v2454 = vld [vmem:[%s2451 + $0x8] sm:$0xf]
        %v2455 = vld [vmem:[%s2451 + $0xc] sm:$0xf]
        %v2456 = vunpack.c.l.bf16 %v2452
        %v2457 = vunpack.c.l.bf16 %v2453
        %v2458 = vunpack.c.l.bf16 %v2454
        %v2459 = vunpack.c.l.bf16 %v2455
        %v2460 = vmul.f32 %v2446, %v2456
        %v2461 = vmul.f32 %v2446, %v2457
        %v2462 = vmul.f32 %v2446, %v2458
        %v2463 = vmul.f32 %v2446, %v2459
        %v2464 = vadd.f32 %v2010, %v2447
        %v2465 = vadd.f32 %v2011, %v2448
        %v2466 = vadd.f32 %v2012, %v2449
        %v2467 = vadd.f32 %v2013, %v2450
        %v2468 = vadd.f32 %v2014, %v2460
        %v2469 = vadd.f32 %v2015, %v2461
        %v2470 = vadd.f32 %v2016, %v2462
        %v2471 = vadd.f32 %v2017, %v2463
        %s2472 = sld [smem:[#allocation7 + $0x4]]
        %v2473 = vmul.f32 %v645, 31.415926
        %v2474 = vmul.f32 %v646, 31.415926
        %v2475 = vmul.f32 %v647, 31.415926
        %v2476 = vmul.f32 %v648, 31.415926
        %s2477 = sld [smem:[#allocation6 + $0x4]]
        %s2478 = smul.f32 %s2477, 6.2831855
        %v2479 = vstv %s2478
        %v2480 = vadd.f32 %v2473, %v2479
        %v2481 = vadd.f32 %v2474, %v2479
        %v2482 = vadd.f32 %v2475, %v2479
        %v2483 = vadd.f32 %v2476, %v2479
        %v2484 = vand.u32 2147483647, %v2480
        %vm2485 = vcmp.le.f32.partialorder %v2484, 0.7853982
        %vm2486 = vcmp.lt.s32.totalorder %v2480, 0
        %v2487 = vand.u32 %v2480, 2139095040
        %v2488 = vshrl.u32 %v2487, 23
        %v2489 = vsub.s32 %v2488, 127
        %v2490 = vand.u32 2147483647, %v2480
        %v2491 = vand.u32 %v2490, 8388607
        %v2492 = vor.u32 %v2491, 8388608
        %v2493 = vsub.s32 0, %v2492
        %v2494 = vadd.s32 %v2489, 1
        %vm2495 = vcmp.gt.s32.totalorder %v2494, 0
        %v2496 = vsel %vm2495, %v2494, 0
        %v2497 = vshrl.u32 %v2496, 5
        %v2498 = vand.u32 %v2496, 31
        %v2499 = vsub.s32 32, %v2498
        %v2500 = vshrl.u32 683565275, %v2499
        %v2501 = vshll.u32 683565275, %v2498
        %v2502 = vshrl.u32 2475754826, %v2499
        %v2503 = vor.u32 %v2501, %v2502
        %v2504 = vshll.u32 2475754826, %v2498
        %v2505 = vshrl.u32 2131351028, %v2499
        %v2506 = vor.u32 %v2504, %v2505
        %v2507 = vshll.u32 2131351028, %v2498
        %v2508 = vshrl.u32 2102212464, %v2499
        %v2509 = vor.u32 %v2507, %v2508
        %v2510 = vshll.u32 2102212464, %v2498
        %v2511 = vshrl.u32 920167782, %v2499
        %v2512 = vor.u32 %v2510, %v2511
        %v2513 = vshll.u32 920167782, %v2498
        %v2514 = vshrl.u32 1326507024, %v2499
        %v2515 = vor.u32 %v2513, %v2514
        %vm2516 = vcmp.lt.s32.totalorder %v2497, 1
        %vm2517 = vcmp.lt.s32.totalorder %v2497, 2
        %vm2518 = vcmp.lt.s32.totalorder %v2497, 3
        %vm2519 = vcmp.lt.s32.totalorder %v2497, 4
        %v2520 = vsel %vm2516, %v2500, %v2503
        %v2521 = vsel %vm2519, %v2509, 2102212464
        %v2522 = vsel %vm2518, %v2506, %v2521
        %v2523 = vsel %vm2517, %v2520, %v2522
        %v2524 = vsel %vm2516, %v2503, %v2506
        %v2525 = vsel %vm2519, %v2512, 920167782
        %v2526 = vsel %vm2518, %v2509, %v2525
        %v2527 = vsel %vm2517, %v2524, %v2526
        %v2528 = vsel %vm2516, %v2506, %v2509
        %v2529 = vsel %vm2519, %v2515, 1326507024
        %v2530 = vsel %vm2518, %v2512, %v2529
        %v2531 = vsel %vm2517, %v2528, %v2530
        %v2532 = vshll.u32 %v2492, 8
        %v2533 = vmul.u32.u64.compose %v2532, %v2531
        %v2534 = vextract.low.u32 %v2533
        %v2535 = vextract.high.u32 %v2533
        %v2536 = vmul.u32.u64.compose %v2532, %v2527
        %v2537 = vextract.low.u32 %v2536
        %v2538 = vextract.high.u32 %v2536
        %v2539 = vmul.u32 %v2532, %v2523
        %v2540 = vadd.s32 %v2535, %v2537
        %vm2541 = vc.u32 %v2535, %v2537
        %v2542 = vadd.s32 %v2538, 1
        %v2543 = vsel %vm2541, %v2542, %v2538
        %v2544 = vadd.s32 %v2539, %v2543
        %v2545 = vadd.s32 %v2544, 536870912
        %v2546 = vshrl.u32 %v2545, 30
        %v2547 = vshll.u32 %v2546, 30
        %v2548 = vsub.s32 %v2544, %v2547
        %vm2549 = vcmp.lt.s32.totalorder %v2548, 0
        %v2550 = vsub.s32 0, %v2548
        %v2551 = vsel %vm2549, %v2550, %v2548
        %v2552 = vclz %v2551
        %v2553 = vsub.s32 %v2552, 2
        %vm2554 = vcmp.gt.s32.totalorder 0, %v2553
        %v2555 = vsel %vm2554, 0, %v2553
        %v2556 = vsub.s32 32, %v2555
        %v2557 = vshll.u32 %v2548, %v2555
        %v2558 = vshrl.u32 %v2540, %v2556
        %v2559 = vor.u32 %v2557, %v2558
        %v2560 = vsub.s32 4294967266, %v2555
        %v2561 = vadd.s32 %v2560, 127
        %v2562 = vshll.u32 %v2561, 23
        %v2563 = vor.u32 4788187, %v2562
        %v2564 = vand.u32 2147483647, %v2563
        %v2566 = vcvt.s32.f32 %v2559
        %v2567 = vmul.f32 %v2566, %v2564
        %v2568 = vxor.u32 %v2567, 2147483648
        %v2569 = vsel %vm2486, %v2568, %v2567
        %v2570 = vsub.s32 4, %v2546
        %v2571 = vsel %vm2486, %v2570, %v2546
        %v2572 = vsel %vm2485, %v2480, %v2569
        %v2573 = vsel %vm2485, 0, %v2571
        %v2574 = vcosq.f32.pop %v2572
        %v2575 = vsinq.f32.pop %v2572
        %vm2576 = vweird.f32 %v2480
        %v2577 = vadd.s32 %v2573, 3
        %v2578 = vand.u32 %v2577, 3
        %vm2579 = vcmp.lt.s32.totalorder %v2578, 2
        %vm2580 = vcmp.eq.s32.totalorder %v2578, 0
        %v2581 = vxor.u32 %v2575, 2147483648
        %v2582 = vsel %vm2580, %v2574, %v2581
        %vm2583 = vcmp.eq.s32.totalorder %v2578, 2
        %v2584 = vxor.u32 %v2574, 2147483648
        %v2585 = vsel %vm2583, %v2584, %v2575
        %v2586 = vsel %vm2579, %v2582, %v2585
        %v2587 = vsel %vm2576, nan, %v2586
        %v2588 = vand.u32 2147483647, %v2481
        %vm2589 = vcmp.le.f32.partialorder %v2588, 0.7853982
        %vm2590 = vcmp.lt.s32.totalorder %v2481, 0
        %v2591 = vand.u32 %v2481, 2139095040
        %v2592 = vshrl.u32 %v2591, 23
        %v2593 = vsub.s32 %v2592, 127
        %v2594 = vand.u32 2147483647, %v2481
        %v2595 = vand.u32 %v2594, 8388607
        %v2596 = vor.u32 %v2595, 8388608
        %v2597 = vsub.s32 0, %v2596
        %v2598 = vadd.s32 %v2593, 1
        %vm2599 = vcmp.gt.s32.totalorder %v2598, 0
        %v2600 = vsel %vm2599, %v2598, 0
        %v2601 = vshrl.u32 %v2600, 5
        %v2602 = vand.u32 %v2600, 31
        %v2603 = vsub.s32 32, %v2602
        %v2604 = vshrl.u32 683565275, %v2603
        %v2605 = vshll.u32 683565275, %v2602
        %v2606 = vshrl.u32 2475754826, %v2603
        %v2607 = vor.u32 %v2605, %v2606
        %v2608 = vshll.u32 2475754826, %v2602
        %v2609 = vshrl.u32 2131351028, %v2603
        %v2610 = vor.u32 %v2608, %v2609
        %v2611 = vshll.u32 2131351028, %v2602
        %v2612 = vshrl.u32 2102212464, %v2603
        %v2613 = vor.u32 %v2611, %v2612
        %v2614 = vshll.u32 2102212464, %v2602
        %v2615 = vshrl.u32 920167782, %v2603
        %v2616 = vor.u32 %v2614, %v2615
        %v2617 = vshll.u32 920167782, %v2602
        %v2618 = vshrl.u32 1326507024, %v2603
        %v2619 = vor.u32 %v2617, %v2618
        %vm2620 = vcmp.lt.s32.totalorder %v2601, 1
        %vm2621 = vcmp.lt.s32.totalorder %v2601, 2
        %vm2622 = vcmp.lt.s32.totalorder %v2601, 3
        %vm2623 = vcmp.lt.s32.totalorder %v2601, 4
        %v2624 = vsel %vm2620, %v2604, %v2607
        %v2625 = vsel %vm2623, %v2613, 2102212464
        %v2626 = vsel %vm2622, %v2610, %v2625
        %v2627 = vsel %vm2621, %v2624, %v2626
        %v2628 = vsel %vm2620, %v2607, %v2610
        %v2629 = vsel %vm2623, %v2616, 920167782
        %v2630 = vsel %vm2622, %v2613, %v2629
        %v2631 = vsel %vm2621, %v2628, %v2630
        %v2632 = vsel %vm2620, %v2610, %v2613
        %v2633 = vsel %vm2623, %v2619, 1326507024
        %v2634 = vsel %vm2622, %v2616, %v2633
        %v2635 = vsel %vm2621, %v2632, %v2634
        %v2636 = vshll.u32 %v2596, 8
        %v2637 = vmul.u32.u64.compose %v2636, %v2635
        %v2638 = vextract.low.u32 %v2637
        %v2639 = vextract.high.u32 %v2637
        %v2640 = vmul.u32.u64.compose %v2636, %v2631
        %v2641 = vextract.low.u32 %v2640
        %v2642 = vextract.high.u32 %v2640
        %v2643 = vmul.u32 %v2636, %v2627
        %v2644 = vadd.s32 %v2639, %v2641
        %vm2645 = vc.u32 %v2639, %v2641
        %v2646 = vadd.s32 %v2642, 1
        %v2647 = vsel %vm2645, %v2646, %v2642
        %v2648 = vadd.s32 %v2643, %v2647
        %v2649 = vadd.s32 %v2648, 536870912
        %v2650 = vshrl.u32 %v2649, 30
        %v2651 = vshll.u32 %v2650, 30
        %v2652 = vsub.s32 %v2648, %v2651
        %vm2653 = vcmp.lt.s32.totalorder %v2652, 0
        %v2654 = vsub.s32 0, %v2652
        %v2655 = vsel %vm2653, %v2654, %v2652
        %v2656 = vclz %v2655
        %v2657 = vsub.s32 %v2656, 2
        %vm2658 = vcmp.gt.s32.totalorder 0, %v2657
        %v2659 = vsel %vm2658, 0, %v2657
        %v2660 = vsub.s32 32, %v2659
        %v2661 = vshll.u32 %v2652, %v2659
        %v2662 = vshrl.u32 %v2644, %v2660
        %v2663 = vor.u32 %v2661, %v2662
        %v2664 = vsub.s32 4294967266, %v2659
        %v2665 = vadd.s32 %v2664, 127
        %v2666 = vshll.u32 %v2665, 23
        %v2667 = vor.u32 4788187, %v2666
        %v2668 = vand.u32 2147483647, %v2667
        %v2670 = vcvt.s32.f32 %v2663
        %v2671 = vmul.f32 %v2670, %v2668
        %v2672 = vxor.u32 %v2671, 2147483648
        %v2673 = vsel %vm2590, %v2672, %v2671
        %v2674 = vsub.s32 4, %v2650
        %v2675 = vsel %vm2590, %v2674, %v2650
        %v2676 = vsel %vm2589, %v2481, %v2673
        %v2677 = vsel %vm2589, 0, %v2675
        %v2678 = vcosq.f32.pop %v2676
        %v2679 = vsinq.f32.pop %v2676
        %vm2680 = vweird.f32 %v2481
        %v2681 = vadd.s32 %v2677, 3
        %v2682 = vand.u32 %v2681, 3
        %vm2683 = vcmp.lt.s32.totalorder %v2682, 2
        %vm2684 = vcmp.eq.s32.totalorder %v2682, 0
        %v2685 = vxor.u32 %v2679, 2147483648
        %v2686 = vsel %vm2684, %v2678, %v2685
        %vm2687 = vcmp.eq.s32.totalorder %v2682, 2
        %v2688 = vxor.u32 %v2678, 2147483648
        %v2689 = vsel %vm2687, %v2688, %v2679
        %v2690 = vsel %vm2683, %v2686, %v2689
        %v2691 = vsel %vm2680, nan, %v2690
        %v2692 = vand.u32 2147483647, %v2482
        %vm2693 = vcmp.le.f32.partialorder %v2692, 0.7853982
        %vm2694 = vcmp.lt.s32.totalorder %v2482, 0
        %v2695 = vand.u32 %v2482, 2139095040
        %v2696 = vshrl.u32 %v2695, 23
        %v2697 = vsub.s32 %v2696, 127
        %v2698 = vand.u32 2147483647, %v2482
        %v2699 = vand.u32 %v2698, 8388607
        %v2700 = vor.u32 %v2699, 8388608
        %v2701 = vsub.s32 0, %v2700
        %v2702 = vadd.s32 %v2697, 1
        %vm2703 = vcmp.gt.s32.totalorder %v2702, 0
        %v2704 = vsel %vm2703, %v2702, 0
        %v2705 = vshrl.u32 %v2704, 5
        %v2706 = vand.u32 %v2704, 31
        %v2707 = vsub.s32 32, %v2706
        %v2708 = vshrl.u32 683565275, %v2707
        %v2709 = vshll.u32 683565275, %v2706
        %v2710 = vshrl.u32 2475754826, %v2707
        %v2711 = vor.u32 %v2709, %v2710
        %v2712 = vshll.u32 2475754826, %v2706
        %v2713 = vshrl.u32 2131351028, %v2707
        %v2714 = vor.u32 %v2712, %v2713
        %v2715 = vshll.u32 2131351028, %v2706
        %v2716 = vshrl.u32 2102212464, %v2707
        %v2717 = vor.u32 %v2715, %v2716
        %v2718 = vshll.u32 2102212464, %v2706
        %v2719 = vshrl.u32 920167782, %v2707
        %v2720 = vor.u32 %v2718, %v2719
        %v2721 = vshll.u32 920167782, %v2706
        %v2722 = vshrl.u32 1326507024, %v2707
        %v2723 = vor.u32 %v2721, %v2722
        %vm2724 = vcmp.lt.s32.totalorder %v2705, 1
        %vm2725 = vcmp.lt.s32.totalorder %v2705, 2
        %vm2726 = vcmp.lt.s32.totalorder %v2705, 3
        %vm2727 = vcmp.lt.s32.totalorder %v2705, 4
        %v2728 = vsel %vm2724, %v2708, %v2711
        %v2729 = vsel %vm2727, %v2717, 2102212464
        %v2730 = vsel %vm2726, %v2714, %v2729
        %v2731 = vsel %vm2725, %v2728, %v2730
        %v2732 = vsel %vm2724, %v2711, %v2714
        %v2733 = vsel %vm2727, %v2720, 920167782
        %v2734 = vsel %vm2726, %v2717, %v2733
        %v2735 = vsel %vm2725, %v2732, %v2734
        %v2736 = vsel %vm2724, %v2714, %v2717
        %v2737 = vsel %vm2727, %v2723, 1326507024
        %v2738 = vsel %vm2726, %v2720, %v2737
        %v2739 = vsel %vm2725, %v2736, %v2738
        %v2740 = vshll.u32 %v2700, 8
        %v2741 = vmul.u32.u64.compose %v2740, %v2739
        %v2742 = vextract.low.u32 %v2741
        %v2743 = vextract.high.u32 %v2741
        %v2744 = vmul.u32.u64.compose %v2740, %v2735
        %v2745 = vextract.low.u32 %v2744
        %v2746 = vextract.high.u32 %v2744
        %v2747 = vmul.u32 %v2740, %v2731
        %v2748 = vadd.s32 %v2743, %v2745
        %vm2749 = vc.u32 %v2743, %v2745
        %v2750 = vadd.s32 %v2746, 1
        %v2751 = vsel %vm2749, %v2750, %v2746
        %v2752 = vadd.s32 %v2747, %v2751
        %v2753 = vadd.s32 %v2752, 536870912
        %v2754 = vshrl.u32 %v2753, 30
        %v2755 = vshll.u32 %v2754, 30
        %v2756 = vsub.s32 %v2752, %v2755
        %vm2757 = vcmp.lt.s32.totalorder %v2756, 0
        %v2758 = vsub.s32 0, %v2756
        %v2759 = vsel %vm2757, %v2758, %v2756
        %v2760 = vclz %v2759
        %v2761 = vsub.s32 %v2760, 2
        %vm2762 = vcmp.gt.s32.totalorder 0, %v2761
        %v2763 = vsel %vm2762, 0, %v2761
        %v2764 = vsub.s32 32, %v2763
        %v2765 = vshll.u32 %v2756, %v2763
        %v2766 = vshrl.u32 %v2748, %v2764
        %v2767 = vor.u32 %v2765, %v2766
        %v2768 = vsub.s32 4294967266, %v2763
        %v2769 = vadd.s32 %v2768, 127
        %v2770 = vshll.u32 %v2769, 23
        %v2771 = vor.u32 4788187, %v2770
        %v2772 = vand.u32 2147483647, %v2771
        %v2774 = vcvt.s32.f32 %v2767
        %v2775 = vmul.f32 %v2774, %v2772
        %v2776 = vxor.u32 %v2775, 2147483648
        %v2777 = vsel %vm2694, %v2776, %v2775
        %v2778 = vsub.s32 4, %v2754
        %v2779 = vsel %vm2694, %v2778, %v2754
        %v2780 = vsel %vm2693, %v2482, %v2777
        %v2781 = vsel %vm2693, 0, %v2779
        %v2782 = vcosq.f32.pop %v2780
        %v2783 = vsinq.f32.pop %v2780
        %vm2784 = vweird.f32 %v2482
        %v2785 = vadd.s32 %v2781, 3
        %v2786 = vand.u32 %v2785, 3
        %vm2787 = vcmp.lt.s32.totalorder %v2786, 2
        %vm2788 = vcmp.eq.s32.totalorder %v2786, 0
        %v2789 = vxor.u32 %v2783, 2147483648
        %v2790 = vsel %vm2788, %v2782, %v2789
        %vm2791 = vcmp.eq.s32.totalorder %v2786, 2
        %v2792 = vxor.u32 %v2782, 2147483648
        %v2793 = vsel %vm2791, %v2792, %v2783
        %v2794 = vsel %vm2787, %v2790, %v2793
        %v2795 = vsel %vm2784, nan, %v2794
        %v2796 = vand.u32 2147483647, %v2483
        %vm2797 = vcmp.le.f32.partialorder %v2796, 0.7853982
        %vm2798 = vcmp.lt.s32.totalorder %v2483, 0
        %v2799 = vand.u32 %v2483, 2139095040
        %v2800 = vshrl.u32 %v2799, 23
        %v2801 = vsub.s32 %v2800, 127
        %v2802 = vand.u32 2147483647, %v2483
        %v2803 = vand.u32 %v2802, 8388607
        %v2804 = vor.u32 %v2803, 8388608
        %v2805 = vsub.s32 0, %v2804
        %v2806 = vadd.s32 %v2801, 1
        %vm2807 = vcmp.gt.s32.totalorder %v2806, 0
        %v2808 = vsel %vm2807, %v2806, 0
        %v2809 = vshrl.u32 %v2808, 5
        %v2810 = vand.u32 %v2808, 31
        %v2811 = vsub.s32 32, %v2810
        %v2812 = vshrl.u32 683565275, %v2811
        %v2813 = vshll.u32 683565275, %v2810
        %v2814 = vshrl.u32 2475754826, %v2811
        %v2815 = vor.u32 %v2813, %v2814
        %v2816 = vshll.u32 2475754826, %v2810
        %v2817 = vshrl.u32 2131351028, %v2811
        %v2818 = vor.u32 %v2816, %v2817
        %v2819 = vshll.u32 2131351028, %v2810
        %v2820 = vshrl.u32 2102212464, %v2811
        %v2821 = vor.u32 %v2819, %v2820
        %v2822 = vshll.u32 2102212464, %v2810
        %v2823 = vshrl.u32 920167782, %v2811
        %v2824 = vor.u32 %v2822, %v2823
        %v2825 = vshll.u32 920167782, %v2810
        %v2826 = vshrl.u32 1326507024, %v2811
        %v2827 = vor.u32 %v2825, %v2826
        %vm2828 = vcmp.lt.s32.totalorder %v2809, 1
        %vm2829 = vcmp.lt.s32.totalorder %v2809, 2
        %vm2830 = vcmp.lt.s32.totalorder %v2809, 3
        %vm2831 = vcmp.lt.s32.totalorder %v2809, 4
        %v2832 = vsel %vm2828, %v2812, %v2815
        %v2833 = vsel %vm2831, %v2821, 2102212464
        %v2834 = vsel %vm2830, %v2818, %v2833
        %v2835 = vsel %vm2829, %v2832, %v2834
        %v2836 = vsel %vm2828, %v2815, %v2818
        %v2837 = vsel %vm2831, %v2824, 920167782
        %v2838 = vsel %vm2830, %v2821, %v2837
        %v2839 = vsel %vm2829, %v2836, %v2838
        %v2840 = vsel %vm2828, %v2818, %v2821
        %v2841 = vsel %vm2831, %v2827, 1326507024
        %v2842 = vsel %vm2830, %v2824, %v2841
        %v2843 = vsel %vm2829, %v2840, %v2842
        %v2844 = vshll.u32 %v2804, 8
        %v2845 = vmul.u32.u64.compose %v2844, %v2843
        %v2846 = vextract.low.u32 %v2845
        %v2847 = vextract.high.u32 %v2845
        %v2848 = vmul.u32.u64.compose %v2844, %v2839
        %v2849 = vextract.low.u32 %v2848
        %v2850 = vextract.high.u32 %v2848
        %v2851 = vmul.u32 %v2844, %v2835
        %v2852 = vadd.s32 %v2847, %v2849
        %vm2853 = vc.u32 %v2847, %v2849
        %v2854 = vadd.s32 %v2850, 1
        %v2855 = vsel %vm2853, %v2854, %v2850
        %v2856 = vadd.s32 %v2851, %v2855
        %v2857 = vadd.s32 %v2856, 536870912
        %v2858 = vshrl.u32 %v2857, 30
        %v2859 = vshll.u32 %v2858, 30
        %v2860 = vsub.s32 %v2856, %v2859
        %vm2861 = vcmp.lt.s32.totalorder %v2860, 0
        %v2862 = vsub.s32 0, %v2860
        %v2863 = vsel %vm2861, %v2862, %v2860
        %v2864 = vclz %v2863
        %v2865 = vsub.s32 %v2864, 2
        %vm2866 = vcmp.gt.s32.totalorder 0, %v2865
        %v2867 = vsel %vm2866, 0, %v2865
        %v2868 = vsub.s32 32, %v2867
        %v2869 = vshll.u32 %v2860, %v2867
        %v2870 = vshrl.u32 %v2852, %v2868
        %v2871 = vor.u32 %v2869, %v2870
        %v2872 = vsub.s32 4294967266, %v2867
        %v2873 = vadd.s32 %v2872, 127
        %v2874 = vshll.u32 %v2873, 23
        %v2875 = vor.u32 4788187, %v2874
        %v2876 = vand.u32 2147483647, %v2875
        %v2878 = vcvt.s32.f32 %v2871
        %v2879 = vmul.f32 %v2878, %v2876
        %v2880 = vxor.u32 %v2879, 2147483648
        %v2881 = vsel %vm2798, %v2880, %v2879
        %v2882 = vsub.s32 4, %v2858
        %v2883 = vsel %vm2798, %v2882, %v2858
        %v2884 = vsel %vm2797, %v2483, %v2881
        %v2885 = vsel %vm2797, 0, %v2883
        %v2886 = vcosq.f32.pop %v2884
        %v2887 = vsinq.f32.pop %v2884
        %vm2888 = vweird.f32 %v2483
        %v2889 = vadd.s32 %v2885, 3
        %v2890 = vand.u32 %v2889, 3
        %vm2891 = vcmp.lt.s32.totalorder %v2890, 2
        %vm2892 = vcmp.eq.s32.totalorder %v2890, 0
        %v2893 = vxor.u32 %v2887, 2147483648
        %v2894 = vsel %vm2892, %v2886, %v2893
        %vm2895 = vcmp.eq.s32.totalorder %v2890, 2
        %v2896 = vxor.u32 %v2886, 2147483648
        %v2897 = vsel %vm2895, %v2896, %v2887
        %v2898 = vsel %vm2891, %v2894, %v2897
        %v2899 = vsel %vm2888, nan, %v2898
        %v2900 = vstv %s2472
        %v2901 = vmul.f32 %v2900, %v2587
        %v2902 = vmul.f32 %v2900, %v2691
        %v2903 = vmul.f32 %v2900, %v2795
        %v2904 = vmul.f32 %v2900, %v2899
        %s2905 = scalar_lea.vmem %s285, 64 [#allocation2]
        %v2906 = vld [vmem:[%s2905] sm:$0xf]
        %v2907 = vld [vmem:[%s2905 + $0x4] sm:$0xf]
        %v2908 = vld [vmem:[%s2905 + $0x8] sm:$0xf]
        %v2909 = vld [vmem:[%s2905 + $0xc] sm:$0xf]
        %v2910 = vunpack.c.l.bf16 %v2906
        %v2911 = vunpack.c.l.bf16 %v2907
        %v2912 = vunpack.c.l.bf16 %v2908
        %v2913 = vunpack.c.l.bf16 %v2909
        %v2914 = vmul.f32 %v2900, %v2910
        %v2915 = vmul.f32 %v2900, %v2911
        %v2916 = vmul.f32 %v2900, %v2912
        %v2917 = vmul.f32 %v2900, %v2913
        %v2918 = vadd.f32 %v2464, %v2901
        %v2919 = vadd.f32 %v2465, %v2902
        %v2920 = vadd.f32 %v2466, %v2903
        %v2921 = vadd.f32 %v2467, %v2904
        %v2922 = vadd.f32 %v2468, %v2914
        %v2923 = vadd.f32 %v2469, %v2915
        %v2924 = vadd.f32 %v2470, %v2916
        %v2925 = vadd.f32 %v2471, %v2917
        %s2926 = sld [smem:[#allocation7 + $0x5]]
        %v2927 = vmul.f32 %v645, 37.699112
        %v2928 = vmul.f32 %v646, 37.699112
        %v2929 = vmul.f32 %v647, 37.699112
        %v2930 = vmul.f32 %v648, 37.699112
        %s2931 = sld [smem:[#allocation6 + $0x5]]
        %s2932 = smul.f32 %s2931, 6.2831855
        %v2933 = vstv %s2932
        %v2934 = vadd.f32 %v2927, %v2933
        %v2935 = vadd.f32 %v2928, %v2933
        %v2936 = vadd.f32 %v2929, %v2933
        %v2937 = vadd.f32 %v2930, %v2933
        %v2938 = vand.u32 2147483647, %v2934
        %vm2939 = vcmp.le.f32.partialorder %v2938, 0.7853982
        %vm2940 = vcmp.lt.s32.totalorder %v2934, 0
        %v2941 = vand.u32 %v2934, 2139095040
        %v2942 = vshrl.u32 %v2941, 23
        %v2943 = vsub.s32 %v2942, 127
        %v2944 = vand.u32 2147483647, %v2934
        %v2945 = vand.u32 %v2944, 8388607
        %v2946 = vor.u32 %v2945, 8388608
        %v2947 = vsub.s32 0, %v2946
        %v2948 = vadd.s32 %v2943, 1
        %vm2949 = vcmp.gt.s32.totalorder %v2948, 0
        %v2950 = vsel %vm2949, %v2948, 0
        %v2951 = vshrl.u32 %v2950, 5
        %v2952 = vand.u32 %v2950, 31
        %v2953 = vsub.s32 32, %v2952
        %v2954 = vshrl.u32 683565275, %v2953
        %v2955 = vshll.u32 683565275, %v2952
        %v2956 = vshrl.u32 2475754826, %v2953
        %v2957 = vor.u32 %v2955, %v2956
        %v2958 = vshll.u32 2475754826, %v2952
        %v2959 = vshrl.u32 2131351028, %v2953
        %v2960 = vor.u32 %v2958, %v2959
        %v2961 = vshll.u32 2131351028, %v2952
        %v2962 = vshrl.u32 2102212464, %v2953
        %v2963 = vor.u32 %v2961, %v2962
        %v2964 = vshll.u32 2102212464, %v2952
        %v2965 = vshrl.u32 920167782, %v2953
        %v2966 = vor.u32 %v2964, %v2965
        %v2967 = vshll.u32 920167782, %v2952
        %v2968 = vshrl.u32 1326507024, %v2953
        %v2969 = vor.u32 %v2967, %v2968
        %vm2970 = vcmp.lt.s32.totalorder %v2951, 1
        %vm2971 = vcmp.lt.s32.totalorder %v2951, 2
        %vm2972 = vcmp.lt.s32.totalorder %v2951, 3
        %vm2973 = vcmp.lt.s32.totalorder %v2951, 4
        %v2974 = vsel %vm2970, %v2954, %v2957
        %v2975 = vsel %vm2973, %v2963, 2102212464
        %v2976 = vsel %vm2972, %v2960, %v2975
        %v2977 = vsel %vm2971, %v2974, %v2976
        %v2978 = vsel %vm2970, %v2957, %v2960
        %v2979 = vsel %vm2973, %v2966, 920167782
        %v2980 = vsel %vm2972, %v2963, %v2979
        %v2981 = vsel %vm2971, %v2978, %v2980
        %v2982 = vsel %vm2970, %v2960, %v2963
        %v2983 = vsel %vm2973, %v2969, 1326507024
        %v2984 = vsel %vm2972, %v2966, %v2983
        %v2985 = vsel %vm2971, %v2982, %v2984
        %v2986 = vshll.u32 %v2946, 8
        %v2987 = vmul.u32.u64.compose %v2986, %v2985
        %v2988 = vextract.low.u32 %v2987
        %v2989 = vextract.high.u32 %v2987
        %v2990 = vmul.u32.u64.compose %v2986, %v2981
        %v2991 = vextract.low.u32 %v2990
        %v2992 = vextract.high.u32 %v2990
        %v2993 = vmul.u32 %v2986, %v2977
        %v2994 = vadd.s32 %v2989, %v2991
        %vm2995 = vc.u32 %v2989, %v2991
        %v2996 = vadd.s32 %v2992, 1
        %v2997 = vsel %vm2995, %v2996, %v2992
        %v2998 = vadd.s32 %v2993, %v2997
        %v2999 = vadd.s32 %v2998, 536870912
        %v3000 = vshrl.u32 %v2999, 30
        %v3001 = vshll.u32 %v3000, 30
        %v3002 = vsub.s32 %v2998, %v3001
        %vm3003 = vcmp.lt.s32.totalorder %v3002, 0
        %v3004 = vsub.s32 0, %v3002
        %v3005 = vsel %vm3003, %v3004, %v3002
        %v3006 = vclz %v3005
        %v3007 = vsub.s32 %v3006, 2
        %vm3008 = vcmp.gt.s32.totalorder 0, %v3007
        %v3009 = vsel %vm3008, 0, %v3007
        %v3010 = vsub.s32 32, %v3009
        %v3011 = vshll.u32 %v3002, %v3009
        %v3012 = vshrl.u32 %v2994, %v3010
        %v3013 = vor.u32 %v3011, %v3012
        %v3014 = vsub.s32 4294967266, %v3009
        %v3015 = vadd.s32 %v3014, 127
        %v3016 = vshll.u32 %v3015, 23
        %v3017 = vor.u32 4788187, %v3016
        %v3018 = vand.u32 2147483647, %v3017
        %v3020 = vcvt.s32.f32 %v3013
        %v3021 = vmul.f32 %v3020, %v3018
        %v3022 = vxor.u32 %v3021, 2147483648
        %v3023 = vsel %vm2940, %v3022, %v3021
        %v3024 = vsub.s32 4, %v3000
        %v3025 = vsel %vm2940, %v3024, %v3000
        %v3026 = vsel %vm2939, %v2934, %v3023
        %v3027 = vsel %vm2939, 0, %v3025
        %v3028 = vcosq.f32.pop %v3026
        %v3029 = vsinq.f32.pop %v3026
        %vm3030 = vweird.f32 %v2934
        %v3031 = vadd.s32 %v3027, 3
        %v3032 = vand.u32 %v3031, 3
        %vm3033 = vcmp.lt.s32.totalorder %v3032, 2
        %vm3034 = vcmp.eq.s32.totalorder %v3032, 0
        %v3035 = vxor.u32 %v3029, 2147483648
        %v3036 = vsel %vm3034, %v3028, %v3035
        %vm3037 = vcmp.eq.s32.totalorder %v3032, 2
        %v3038 = vxor.u32 %v3028, 2147483648
        %v3039 = vsel %vm3037, %v3038, %v3029
        %v3040 = vsel %vm3033, %v3036, %v3039
        %v3041 = vsel %vm3030, nan, %v3040
        %v3042 = vand.u32 2147483647, %v2935
        %vm3043 = vcmp.le.f32.partialorder %v3042, 0.7853982
        %vm3044 = vcmp.lt.s32.totalorder %v2935, 0
        %v3045 = vand.u32 %v2935, 2139095040
        %v3046 = vshrl.u32 %v3045, 23
        %v3047 = vsub.s32 %v3046, 127
        %v3048 = vand.u32 2147483647, %v2935
        %v3049 = vand.u32 %v3048, 8388607
        %v3050 = vor.u32 %v3049, 8388608
        %v3051 = vsub.s32 0, %v3050
        %v3052 = vadd.s32 %v3047, 1
        %vm3053 = vcmp.gt.s32.totalorder %v3052, 0
        %v3054 = vsel %vm3053, %v3052, 0
        %v3055 = vshrl.u32 %v3054, 5
        %v3056 = vand.u32 %v3054, 31
        %v3057 = vsub.s32 32, %v3056
        %v3058 = vshrl.u32 683565275, %v3057
        %v3059 = vshll.u32 683565275, %v3056
        %v3060 = vshrl.u32 2475754826, %v3057
        %v3061 = vor.u32 %v3059, %v3060
        %v3062 = vshll.u32 2475754826, %v3056
        %v3063 = vshrl.u32 2131351028, %v3057
        %v3064 = vor.u32 %v3062, %v3063
        %v3065 = vshll.u32 2131351028, %v3056
        %v3066 = vshrl.u32 2102212464, %v3057
        %v3067 = vor.u32 %v3065, %v3066
        %v3068 = vshll.u32 2102212464, %v3056
        %v3069 = vshrl.u32 920167782, %v3057
        %v3070 = vor.u32 %v3068, %v3069
        %v3071 = vshll.u32 920167782, %v3056
        %v3072 = vshrl.u32 1326507024, %v3057
        %v3073 = vor.u32 %v3071, %v3072
        %vm3074 = vcmp.lt.s32.totalorder %v3055, 1
        %vm3075 = vcmp.lt.s32.totalorder %v3055, 2
        %vm3076 = vcmp.lt.s32.totalorder %v3055, 3
        %vm3077 = vcmp.lt.s32.totalorder %v3055, 4
        %v3078 = vsel %vm3074, %v3058, %v3061
        %v3079 = vsel %vm3077, %v3067, 2102212464
        %v3080 = vsel %vm3076, %v3064, %v3079
        %v3081 = vsel %vm3075, %v3078, %v3080
        %v3082 = vsel %vm3074, %v3061, %v3064
        %v3083 = vsel %vm3077, %v3070, 920167782
        %v3084 = vsel %vm3076, %v3067, %v3083
        %v3085 = vsel %vm3075, %v3082, %v3084
        %v3086 = vsel %vm3074, %v3064, %v3067
        %v3087 = vsel %vm3077, %v3073, 1326507024
        %v3088 = vsel %vm3076, %v3070, %v3087
        %v3089 = vsel %vm3075, %v3086, %v3088
        %v3090 = vshll.u32 %v3050, 8
        %v3091 = vmul.u32.u64.compose %v3090, %v3089
        %v3092 = vextract.low.u32 %v3091
        %v3093 = vextract.high.u32 %v3091
        %v3094 = vmul.u32.u64.compose %v3090, %v3085
        %v3095 = vextract.low.u32 %v3094
        %v3096 = vextract.high.u32 %v3094
        %v3097 = vmul.u32 %v3090, %v3081
        %v3098 = vadd.s32 %v3093, %v3095
        %vm3099 = vc.u32 %v3093, %v3095
        %v3100 = vadd.s32 %v3096, 1
        %v3101 = vsel %vm3099, %v3100, %v3096
        %v3102 = vadd.s32 %v3097, %v3101
        %v3103 = vadd.s32 %v3102, 536870912
        %v3104 = vshrl.u32 %v3103, 30
        %v3105 = vshll.u32 %v3104, 30
        %v3106 = vsub.s32 %v3102, %v3105
        %vm3107 = vcmp.lt.s32.totalorder %v3106, 0
        %v3108 = vsub.s32 0, %v3106
        %v3109 = vsel %vm3107, %v3108, %v3106
        %v3110 = vclz %v3109
        %v3111 = vsub.s32 %v3110, 2
        %vm3112 = vcmp.gt.s32.totalorder 0, %v3111
        %v3113 = vsel %vm3112, 0, %v3111
        %v3114 = vsub.s32 32, %v3113
        %v3115 = vshll.u32 %v3106, %v3113
        %v3116 = vshrl.u32 %v3098, %v3114
        %v3117 = vor.u32 %v3115, %v3116
        %v3118 = vsub.s32 4294967266, %v3113
        %v3119 = vadd.s32 %v3118, 127
        %v3120 = vshll.u32 %v3119, 23
        %v3121 = vor.u32 4788187, %v3120
        %v3122 = vand.u32 2147483647, %v3121
        %v3124 = vcvt.s32.f32 %v3117
        %v3125 = vmul.f32 %v3124, %v3122
        %v3126 = vxor.u32 %v3125, 2147483648
        %v3127 = vsel %vm3044, %v3126, %v3125
        %v3128 = vsub.s32 4, %v3104
        %v3129 = vsel %vm3044, %v3128, %v3104
        %v3130 = vsel %vm3043, %v2935, %v3127
        %v3131 = vsel %vm3043, 0, %v3129
        %v3132 = vcosq.f32.pop %v3130
        %v3133 = vsinq.f32.pop %v3130
        %vm3134 = vweird.f32 %v2935
        %v3135 = vadd.s32 %v3131, 3
        %v3136 = vand.u32 %v3135, 3
        %vm3137 = vcmp.lt.s32.totalorder %v3136, 2
        %vm3138 = vcmp.eq.s32.totalorder %v3136, 0
        %v3139 = vxor.u32 %v3133, 2147483648
        %v3140 = vsel %vm3138, %v3132, %v3139
        %vm3141 = vcmp.eq.s32.totalorder %v3136, 2
        %v3142 = vxor.u32 %v3132, 2147483648
        %v3143 = vsel %vm3141, %v3142, %v3133
        %v3144 = vsel %vm3137, %v3140, %v3143
        %v3145 = vsel %vm3134, nan, %v3144
        %v3146 = vand.u32 2147483647, %v2936
        %vm3147 = vcmp.le.f32.partialorder %v3146, 0.7853982
        %vm3148 = vcmp.lt.s32.totalorder %v2936, 0
        %v3149 = vand.u32 %v2936, 2139095040
        %v3150 = vshrl.u32 %v3149, 23
        %v3151 = vsub.s32 %v3150, 127
        %v3152 = vand.u32 2147483647, %v2936
        %v3153 = vand.u32 %v3152, 8388607
        %v3154 = vor.u32 %v3153, 8388608
        %v3155 = vsub.s32 0, %v3154
        %v3156 = vadd.s32 %v3151, 1
        %vm3157 = vcmp.gt.s32.totalorder %v3156, 0
        %v3158 = vsel %vm3157, %v3156, 0
        %v3159 = vshrl.u32 %v3158, 5
        %v3160 = vand.u32 %v3158, 31
        %v3161 = vsub.s32 32, %v3160
        %v3162 = vshrl.u32 683565275, %v3161
        %v3163 = vshll.u32 683565275, %v3160
        %v3164 = vshrl.u32 2475754826, %v3161
        %v3165 = vor.u32 %v3163, %v3164
        %v3166 = vshll.u32 2475754826, %v3160
        %v3167 = vshrl.u32 2131351028, %v3161
        %v3168 = vor.u32 %v3166, %v3167
        %v3169 = vshll.u32 2131351028, %v3160
        %v3170 = vshrl.u32 2102212464, %v3161
        %v3171 = vor.u32 %v3169, %v3170
        %v3172 = vshll.u32 2102212464, %v3160
        %v3173 = vshrl.u32 920167782, %v3161
        %v3174 = vor.u32 %v3172, %v3173
        %v3175 = vshll.u32 920167782, %v3160
        %v3176 = vshrl.u32 1326507024, %v3161
        %v3177 = vor.u32 %v3175, %v3176
        %vm3178 = vcmp.lt.s32.totalorder %v3159, 1
        %vm3179 = vcmp.lt.s32.totalorder %v3159, 2
        %vm3180 = vcmp.lt.s32.totalorder %v3159, 3
        %vm3181 = vcmp.lt.s32.totalorder %v3159, 4
        %v3182 = vsel %vm3178, %v3162, %v3165
        %v3183 = vsel %vm3181, %v3171, 2102212464
        %v3184 = vsel %vm3180, %v3168, %v3183
        %v3185 = vsel %vm3179, %v3182, %v3184
        %v3186 = vsel %vm3178, %v3165, %v3168
        %v3187 = vsel %vm3181, %v3174, 920167782
        %v3188 = vsel %vm3180, %v3171, %v3187
        %v3189 = vsel %vm3179, %v3186, %v3188
        %v3190 = vsel %vm3178, %v3168, %v3171
        %v3191 = vsel %vm3181, %v3177, 1326507024
        %v3192 = vsel %vm3180, %v3174, %v3191
        %v3193 = vsel %vm3179, %v3190, %v3192
        %v3194 = vshll.u32 %v3154, 8
        %v3195 = vmul.u32.u64.compose %v3194, %v3193
        %v3196 = vextract.low.u32 %v3195
        %v3197 = vextract.high.u32 %v3195
        %v3198 = vmul.u32.u64.compose %v3194, %v3189
        %v3199 = vextract.low.u32 %v3198
        %v3200 = vextract.high.u32 %v3198
        %v3201 = vmul.u32 %v3194, %v3185
        %v3202 = vadd.s32 %v3197, %v3199
        %vm3203 = vc.u32 %v3197, %v3199
        %v3204 = vadd.s32 %v3200, 1
        %v3205 = vsel %vm3203, %v3204, %v3200
        %v3206 = vadd.s32 %v3201, %v3205
        %v3207 = vadd.s32 %v3206, 536870912
        %v3208 = vshrl.u32 %v3207, 30
        %v3209 = vshll.u32 %v3208, 30
        %v3210 = vsub.s32 %v3206, %v3209
        %vm3211 = vcmp.lt.s32.totalorder %v3210, 0
        %v3212 = vsub.s32 0, %v3210
        %v3213 = vsel %vm3211, %v3212, %v3210
        %v3214 = vclz %v3213
        %v3215 = vsub.s32 %v3214, 2
        %vm3216 = vcmp.gt.s32.totalorder 0, %v3215
        %v3217 = vsel %vm3216, 0, %v3215
        %v3218 = vsub.s32 32, %v3217
        %v3219 = vshll.u32 %v3210, %v3217
        %v3220 = vshrl.u32 %v3202, %v3218
        %v3221 = vor.u32 %v3219, %v3220
        %v3222 = vsub.s32 4294967266, %v3217
        %v3223 = vadd.s32 %v3222, 127
        %v3224 = vshll.u32 %v3223, 23
        %v3225 = vor.u32 4788187, %v3224
        %v3226 = vand.u32 2147483647, %v3225
        %v3228 = vcvt.s32.f32 %v3221
        %v3229 = vmul.f32 %v3228, %v3226
        %v3230 = vxor.u32 %v3229, 2147483648
        %v3231 = vsel %vm3148, %v3230, %v3229
        %v3232 = vsub.s32 4, %v3208
        %v3233 = vsel %vm3148, %v3232, %v3208
        %v3234 = vsel %vm3147, %v2936, %v3231
        %v3235 = vsel %vm3147, 0, %v3233
        %v3236 = vcosq.f32.pop %v3234
        %v3237 = vsinq.f32.pop %v3234
        %vm3238 = vweird.f32 %v2936
        %v3239 = vadd.s32 %v3235, 3
        %v3240 = vand.u32 %v3239, 3
        %vm3241 = vcmp.lt.s32.totalorder %v3240, 2
        %vm3242 = vcmp.eq.s32.totalorder %v3240, 0
        %v3243 = vxor.u32 %v3237, 2147483648
        %v3244 = vsel %vm3242, %v3236, %v3243
        %vm3245 = vcmp.eq.s32.totalorder %v3240, 2
        %v3246 = vxor.u32 %v3236, 2147483648
        %v3247 = vsel %vm3245, %v3246, %v3237
        %v3248 = vsel %vm3241, %v3244, %v3247
        %v3249 = vsel %vm3238, nan, %v3248
        %v3250 = vand.u32 2147483647, %v2937
        %vm3251 = vcmp.le.f32.partialorder %v3250, 0.7853982
        %vm3252 = vcmp.lt.s32.totalorder %v2937, 0
        %v3253 = vand.u32 %v2937, 2139095040
        %v3254 = vshrl.u32 %v3253, 23
        %v3255 = vsub.s32 %v3254, 127
        %v3256 = vand.u32 2147483647, %v2937
        %v3257 = vand.u32 %v3256, 8388607
        %v3258 = vor.u32 %v3257, 8388608
        %v3259 = vsub.s32 0, %v3258
        %v3260 = vadd.s32 %v3255, 1
        %vm3261 = vcmp.gt.s32.totalorder %v3260, 0
        %v3262 = vsel %vm3261, %v3260, 0
        %v3263 = vshrl.u32 %v3262, 5
        %v3264 = vand.u32 %v3262, 31
        %v3265 = vsub.s32 32, %v3264
        %v3266 = vshrl.u32 683565275, %v3265
        %v3267 = vshll.u32 683565275, %v3264
        %v3268 = vshrl.u32 2475754826, %v3265
        %v3269 = vor.u32 %v3267, %v3268
        %v3270 = vshll.u32 2475754826, %v3264
        %v3271 = vshrl.u32 2131351028, %v3265
        %v3272 = vor.u32 %v3270, %v3271
        %v3273 = vshll.u32 2131351028, %v3264
        %v3274 = vshrl.u32 2102212464, %v3265
        %v3275 = vor.u32 %v3273, %v3274
        %v3276 = vshll.u32 2102212464, %v3264
        %v3277 = vshrl.u32 920167782, %v3265
        %v3278 = vor.u32 %v3276, %v3277
        %v3279 = vshll.u32 920167782, %v3264
        %v3280 = vshrl.u32 1326507024, %v3265
        %v3281 = vor.u32 %v3279, %v3280
        %vm3282 = vcmp.lt.s32.totalorder %v3263, 1
        %vm3283 = vcmp.lt.s32.totalorder %v3263, 2
        %vm3284 = vcmp.lt.s32.totalorder %v3263, 3
        %vm3285 = vcmp.lt.s32.totalorder %v3263, 4
        %v3286 = vsel %vm3282, %v3266, %v3269
        %v3287 = vsel %vm3285, %v3275, 2102212464
        %v3288 = vsel %vm3284, %v3272, %v3287
        %v3289 = vsel %vm3283, %v3286, %v3288
        %v3290 = vsel %vm3282, %v3269, %v3272
        %v3291 = vsel %vm3285, %v3278, 920167782
        %v3292 = vsel %vm3284, %v3275, %v3291
        %v3293 = vsel %vm3283, %v3290, %v3292
        %v3294 = vsel %vm3282, %v3272, %v3275
        %v3295 = vsel %vm3285, %v3281, 1326507024
        %v3296 = vsel %vm3284, %v3278, %v3295
        %v3297 = vsel %vm3283, %v3294, %v3296
        %v3298 = vshll.u32 %v3258, 8
        %v3299 = vmul.u32.u64.compose %v3298, %v3297
        %v3300 = vextract.low.u32 %v3299
        %v3301 = vextract.high.u32 %v3299
        %v3302 = vmul.u32.u64.compose %v3298, %v3293
        %v3303 = vextract.low.u32 %v3302
        %v3304 = vextract.high.u32 %v3302
        %v3305 = vmul.u32 %v3298, %v3289
        %v3306 = vadd.s32 %v3301, %v3303
        %vm3307 = vc.u32 %v3301, %v3303
        %v3308 = vadd.s32 %v3304, 1
        %v3309 = vsel %vm3307, %v3308, %v3304
        %v3310 = vadd.s32 %v3305, %v3309
        %v3311 = vadd.s32 %v3310, 536870912
        %v3312 = vshrl.u32 %v3311, 30
        %v3313 = vshll.u32 %v3312, 30
        %v3314 = vsub.s32 %v3310, %v3313
        %vm3315 = vcmp.lt.s32.totalorder %v3314, 0
        %v3316 = vsub.s32 0, %v3314
        %v3317 = vsel %vm3315, %v3316, %v3314
        %v3318 = vclz %v3317
        %v3319 = vsub.s32 %v3318, 2
        %vm3320 = vcmp.gt.s32.totalorder 0, %v3319
        %v3321 = vsel %vm3320, 0, %v3319
        %v3322 = vsub.s32 32, %v3321
        %v3323 = vshll.u32 %v3314, %v3321
        %v3324 = vshrl.u32 %v3306, %v3322
        %v3325 = vor.u32 %v3323, %v3324
        %v3326 = vsub.s32 4294967266, %v3321
        %v3327 = vadd.s32 %v3326, 127
        %v3328 = vshll.u32 %v3327, 23
        %v3329 = vor.u32 4788187, %v3328
        %v3330 = vand.u32 2147483647, %v3329
        %v3332 = vcvt.s32.f32 %v3325
        %v3333 = vmul.f32 %v3332, %v3330
        %v3334 = vxor.u32 %v3333, 2147483648
        %v3335 = vsel %vm3252, %v3334, %v3333
        %v3336 = vsub.s32 4, %v3312
        %v3337 = vsel %vm3252, %v3336, %v3312
        %v3338 = vsel %vm3251, %v2937, %v3335
        %v3339 = vsel %vm3251, 0, %v3337
        %v3340 = vcosq.f32.pop %v3338
        %v3341 = vsinq.f32.pop %v3338
        %vm3342 = vweird.f32 %v2937
        %v3343 = vadd.s32 %v3339, 3
        %v3344 = vand.u32 %v3343, 3
        %vm3345 = vcmp.lt.s32.totalorder %v3344, 2
        %vm3346 = vcmp.eq.s32.totalorder %v3344, 0
        %v3347 = vxor.u32 %v3341, 2147483648
        %v3348 = vsel %vm3346, %v3340, %v3347
        %vm3349 = vcmp.eq.s32.totalorder %v3344, 2
        %v3350 = vxor.u32 %v3340, 2147483648
        %v3351 = vsel %vm3349, %v3350, %v3341
        %v3352 = vsel %vm3345, %v3348, %v3351
        %v3353 = vsel %vm3342, nan, %v3352
        %v3354 = vstv %s2926
        %v3355 = vmul.f32 %v3354, %v3041
        %v3356 = vmul.f32 %v3354, %v3145
        %v3357 = vmul.f32 %v3354, %v3249
        %v3358 = vmul.f32 %v3354, %v3353
        %s3359 = scalar_lea.vmem %s285, 80 [#allocation2]
        %v3360 = vld [vmem:[%s3359] sm:$0xf]
        %v3361 = vld [vmem:[%s3359 + $0x4] sm:$0xf]
        %v3362 = vld [vmem:[%s3359 + $0x8] sm:$0xf]
        %v3363 = vld [vmem:[%s3359 + $0xc] sm:$0xf]
        %v3364 = vunpack.c.l.bf16 %v3360
        %v3365 = vunpack.c.l.bf16 %v3361
        %v3366 = vunpack.c.l.bf16 %v3362
        %v3367 = vunpack.c.l.bf16 %v3363
        %v3368 = vmul.f32 %v3354, %v3364
        %v3369 = vmul.f32 %v3354, %v3365
        %v3370 = vmul.f32 %v3354, %v3366
        %v3371 = vmul.f32 %v3354, %v3367
        %v3372 = vadd.f32 %v2918, %v3355
        %v3373 = vadd.f32 %v2919, %v3356
        %v3374 = vadd.f32 %v2920, %v3357
        %v3375 = vadd.f32 %v2921, %v3358
        %v3376 = vadd.f32 %v2922, %v3368
        %v3377 = vadd.f32 %v2923, %v3369
        %v3378 = vadd.f32 %v2924, %v3370
        %v3379 = vadd.f32 %v2925, %v3371
        %s3380 = sld [smem:[#allocation7 + $0x6]]
        %v3381 = vmul.f32 %v645, 43.982296
        %v3382 = vmul.f32 %v646, 43.982296
        %v3383 = vmul.f32 %v647, 43.982296
        %v3384 = vmul.f32 %v648, 43.982296
        %s3385 = sld [smem:[#allocation6 + $0x6]]
        %s3386 = smul.f32 %s3385, 6.2831855
        %v3387 = vstv %s3386
        %v3388 = vadd.f32 %v3381, %v3387
        %v3389 = vadd.f32 %v3382, %v3387
        %v3390 = vadd.f32 %v3383, %v3387
        %v3391 = vadd.f32 %v3384, %v3387
        %v3392 = vand.u32 2147483647, %v3388
        %vm3393 = vcmp.le.f32.partialorder %v3392, 0.7853982
        %vm3394 = vcmp.lt.s32.totalorder %v3388, 0
        %v3395 = vand.u32 %v3388, 2139095040
        %v3396 = vshrl.u32 %v3395, 23
        %v3397 = vsub.s32 %v3396, 127
        %v3398 = vand.u32 2147483647, %v3388
        %v3399 = vand.u32 %v3398, 8388607
        %v3400 = vor.u32 %v3399, 8388608
        %v3401 = vsub.s32 0, %v3400
        %v3402 = vadd.s32 %v3397, 1
        %vm3403 = vcmp.gt.s32.totalorder %v3402, 0
        %v3404 = vsel %vm3403, %v3402, 0
        %v3405 = vshrl.u32 %v3404, 5
        %v3406 = vand.u32 %v3404, 31
        %v3407 = vsub.s32 32, %v3406
        %v3408 = vshrl.u32 683565275, %v3407
        %v3409 = vshll.u32 683565275, %v3406
        %v3410 = vshrl.u32 2475754826, %v3407
        %v3411 = vor.u32 %v3409, %v3410
        %v3412 = vshll.u32 2475754826, %v3406
        %v3413 = vshrl.u32 2131351028, %v3407
        %v3414 = vor.u32 %v3412, %v3413
        %v3415 = vshll.u32 2131351028, %v3406
        %v3416 = vshrl.u32 2102212464, %v3407
        %v3417 = vor.u32 %v3415, %v3416
        %v3418 = vshll.u32 2102212464, %v3406
        %v3419 = vshrl.u32 920167782, %v3407
        %v3420 = vor.u32 %v3418, %v3419
        %v3421 = vshll.u32 920167782, %v3406
        %v3422 = vshrl.u32 1326507024, %v3407
        %v3423 = vor.u32 %v3421, %v3422
        %vm3424 = vcmp.lt.s32.totalorder %v3405, 1
        %vm3425 = vcmp.lt.s32.totalorder %v3405, 2
        %vm3426 = vcmp.lt.s32.totalorder %v3405, 3
        %vm3427 = vcmp.lt.s32.totalorder %v3405, 4
        %v3428 = vsel %vm3424, %v3408, %v3411
        %v3429 = vsel %vm3427, %v3417, 2102212464
        %v3430 = vsel %vm3426, %v3414, %v3429
        %v3431 = vsel %vm3425, %v3428, %v3430
        %v3432 = vsel %vm3424, %v3411, %v3414
        %v3433 = vsel %vm3427, %v3420, 920167782
        %v3434 = vsel %vm3426, %v3417, %v3433
        %v3435 = vsel %vm3425, %v3432, %v3434
        %v3436 = vsel %vm3424, %v3414, %v3417
        %v3437 = vsel %vm3427, %v3423, 1326507024
        %v3438 = vsel %vm3426, %v3420, %v3437
        %v3439 = vsel %vm3425, %v3436, %v3438
        %v3440 = vshll.u32 %v3400, 8
        %v3441 = vmul.u32.u64.compose %v3440, %v3439
        %v3442 = vextract.low.u32 %v3441
        %v3443 = vextract.high.u32 %v3441
        %v3444 = vmul.u32.u64.compose %v3440, %v3435
        %v3445 = vextract.low.u32 %v3444
        %v3446 = vextract.high.u32 %v3444
        %v3447 = vmul.u32 %v3440, %v3431
        %v3448 = vadd.s32 %v3443, %v3445
        %vm3449 = vc.u32 %v3443, %v3445
        %v3450 = vadd.s32 %v3446, 1
        %v3451 = vsel %vm3449, %v3450, %v3446
        %v3452 = vadd.s32 %v3447, %v3451
        %v3453 = vadd.s32 %v3452, 536870912
        %v3454 = vshrl.u32 %v3453, 30
        %v3455 = vshll.u32 %v3454, 30
        %v3456 = vsub.s32 %v3452, %v3455
        %vm3457 = vcmp.lt.s32.totalorder %v3456, 0
        %v3458 = vsub.s32 0, %v3456
        %v3459 = vsel %vm3457, %v3458, %v3456
        %v3460 = vclz %v3459
        %v3461 = vsub.s32 %v3460, 2
        %vm3462 = vcmp.gt.s32.totalorder 0, %v3461
        %v3463 = vsel %vm3462, 0, %v3461
        %v3464 = vsub.s32 32, %v3463
        %v3465 = vshll.u32 %v3456, %v3463
        %v3466 = vshrl.u32 %v3448, %v3464
        %v3467 = vor.u32 %v3465, %v3466
        %v3468 = vsub.s32 4294967266, %v3463
        %v3469 = vadd.s32 %v3468, 127
        %v3470 = vshll.u32 %v3469, 23
        %v3471 = vor.u32 4788187, %v3470
        %v3472 = vand.u32 2147483647, %v3471
        %v3474 = vcvt.s32.f32 %v3467
        %v3475 = vmul.f32 %v3474, %v3472
        %v3476 = vxor.u32 %v3475, 2147483648
        %v3477 = vsel %vm3394, %v3476, %v3475
        %v3478 = vsub.s32 4, %v3454
        %v3479 = vsel %vm3394, %v3478, %v3454
        %v3480 = vsel %vm3393, %v3388, %v3477
        %v3481 = vsel %vm3393, 0, %v3479
        %v3482 = vcosq.f32.pop %v3480
        %v3483 = vsinq.f32.pop %v3480
        %vm3484 = vweird.f32 %v3388
        %v3485 = vadd.s32 %v3481, 3
        %v3486 = vand.u32 %v3485, 3
        %vm3487 = vcmp.lt.s32.totalorder %v3486, 2
        %vm3488 = vcmp.eq.s32.totalorder %v3486, 0
        %v3489 = vxor.u32 %v3483, 2147483648
        %v3490 = vsel %vm3488, %v3482, %v3489
        %vm3491 = vcmp.eq.s32.totalorder %v3486, 2
        %v3492 = vxor.u32 %v3482, 2147483648
        %v3493 = vsel %vm3491, %v3492, %v3483
        %v3494 = vsel %vm3487, %v3490, %v3493
        %v3495 = vsel %vm3484, nan, %v3494
        %v3496 = vand.u32 2147483647, %v3389
        %vm3497 = vcmp.le.f32.partialorder %v3496, 0.7853982
        %vm3498 = vcmp.lt.s32.totalorder %v3389, 0
        %v3499 = vand.u32 %v3389, 2139095040
        %v3500 = vshrl.u32 %v3499, 23
        %v3501 = vsub.s32 %v3500, 127
        %v3502 = vand.u32 2147483647, %v3389
        %v3503 = vand.u32 %v3502, 8388607
        %v3504 = vor.u32 %v3503, 8388608
        %v3505 = vsub.s32 0, %v3504
        %v3506 = vadd.s32 %v3501, 1
        %vm3507 = vcmp.gt.s32.totalorder %v3506, 0
        %v3508 = vsel %vm3507, %v3506, 0
        %v3509 = vshrl.u32 %v3508, 5
        %v3510 = vand.u32 %v3508, 31
        %v3511 = vsub.s32 32, %v3510
        %v3512 = vshrl.u32 683565275, %v3511
        %v3513 = vshll.u32 683565275, %v3510
        %v3514 = vshrl.u32 2475754826, %v3511
        %v3515 = vor.u32 %v3513, %v3514
        %v3516 = vshll.u32 2475754826, %v3510
        %v3517 = vshrl.u32 2131351028, %v3511
        %v3518 = vor.u32 %v3516, %v3517
        %v3519 = vshll.u32 2131351028, %v3510
        %v3520 = vshrl.u32 2102212464, %v3511
        %v3521 = vor.u32 %v3519, %v3520
        %v3522 = vshll.u32 2102212464, %v3510
        %v3523 = vshrl.u32 920167782, %v3511
        %v3524 = vor.u32 %v3522, %v3523
        %v3525 = vshll.u32 920167782, %v3510
        %v3526 = vshrl.u32 1326507024, %v3511
        %v3527 = vor.u32 %v3525, %v3526
        %vm3528 = vcmp.lt.s32.totalorder %v3509, 1
        %vm3529 = vcmp.lt.s32.totalorder %v3509, 2
        %vm3530 = vcmp.lt.s32.totalorder %v3509, 3
        %vm3531 = vcmp.lt.s32.totalorder %v3509, 4
        %v3532 = vsel %vm3528, %v3512, %v3515
        %v3533 = vsel %vm3531, %v3521, 2102212464
        %v3534 = vsel %vm3530, %v3518, %v3533
        %v3535 = vsel %vm3529, %v3532, %v3534
        %v3536 = vsel %vm3528, %v3515, %v3518
        %v3537 = vsel %vm3531, %v3524, 920167782
        %v3538 = vsel %vm3530, %v3521, %v3537
        %v3539 = vsel %vm3529, %v3536, %v3538
        %v3540 = vsel %vm3528, %v3518, %v3521
        %v3541 = vsel %vm3531, %v3527, 1326507024
        %v3542 = vsel %vm3530, %v3524, %v3541
        %v3543 = vsel %vm3529, %v3540, %v3542
        %v3544 = vshll.u32 %v3504, 8
        %v3545 = vmul.u32.u64.compose %v3544, %v3543
        %v3546 = vextract.low.u32 %v3545
        %v3547 = vextract.high.u32 %v3545
        %v3548 = vmul.u32.u64.compose %v3544, %v3539
        %v3549 = vextract.low.u32 %v3548
        %v3550 = vextract.high.u32 %v3548
        %v3551 = vmul.u32 %v3544, %v3535
        %v3552 = vadd.s32 %v3547, %v3549
        %vm3553 = vc.u32 %v3547, %v3549
        %v3554 = vadd.s32 %v3550, 1
        %v3555 = vsel %vm3553, %v3554, %v3550
        %v3556 = vadd.s32 %v3551, %v3555
        %v3557 = vadd.s32 %v3556, 536870912
        %v3558 = vshrl.u32 %v3557, 30
        %v3559 = vshll.u32 %v3558, 30
        %v3560 = vsub.s32 %v3556, %v3559
        %vm3561 = vcmp.lt.s32.totalorder %v3560, 0
        %v3562 = vsub.s32 0, %v3560
        %v3563 = vsel %vm3561, %v3562, %v3560
        %v3564 = vclz %v3563
        %v3565 = vsub.s32 %v3564, 2
        %vm3566 = vcmp.gt.s32.totalorder 0, %v3565
        %v3567 = vsel %vm3566, 0, %v3565
        %v3568 = vsub.s32 32, %v3567
        %v3569 = vshll.u32 %v3560, %v3567
        %v3570 = vshrl.u32 %v3552, %v3568
        %v3571 = vor.u32 %v3569, %v3570
        %v3572 = vsub.s32 4294967266, %v3567
        %v3573 = vadd.s32 %v3572, 127
        %v3574 = vshll.u32 %v3573, 23
        %v3575 = vor.u32 4788187, %v3574
        %v3576 = vand.u32 2147483647, %v3575
        %v3578 = vcvt.s32.f32 %v3571
        %v3579 = vmul.f32 %v3578, %v3576
        %v3580 = vxor.u32 %v3579, 2147483648
        %v3581 = vsel %vm3498, %v3580, %v3579
        %v3582 = vsub.s32 4, %v3558
        %v3583 = vsel %vm3498, %v3582, %v3558
        %v3584 = vsel %vm3497, %v3389, %v3581
        %v3585 = vsel %vm3497, 0, %v3583
        %v3586 = vcosq.f32.pop %v3584
        %v3587 = vsinq.f32.pop %v3584
        %vm3588 = vweird.f32 %v3389
        %v3589 = vadd.s32 %v3585, 3
        %v3590 = vand.u32 %v3589, 3
        %vm3591 = vcmp.lt.s32.totalorder %v3590, 2
        %vm3592 = vcmp.eq.s32.totalorder %v3590, 0
        %v3593 = vxor.u32 %v3587, 2147483648
        %v3594 = vsel %vm3592, %v3586, %v3593
        %vm3595 = vcmp.eq.s32.totalorder %v3590, 2
        %v3596 = vxor.u32 %v3586, 2147483648
        %v3597 = vsel %vm3595, %v3596, %v3587
        %v3598 = vsel %vm3591, %v3594, %v3597
        %v3599 = vsel %vm3588, nan, %v3598
        %v3600 = vand.u32 2147483647, %v3390
        %vm3601 = vcmp.le.f32.partialorder %v3600, 0.7853982
        %vm3602 = vcmp.lt.s32.totalorder %v3390, 0
        %v3603 = vand.u32 %v3390, 2139095040
        %v3604 = vshrl.u32 %v3603, 23
        %v3605 = vsub.s32 %v3604, 127
        %v3606 = vand.u32 2147483647, %v3390
        %v3607 = vand.u32 %v3606, 8388607
        %v3608 = vor.u32 %v3607, 8388608
        %v3609 = vsub.s32 0, %v3608
        %v3610 = vadd.s32 %v3605, 1
        %vm3611 = vcmp.gt.s32.totalorder %v3610, 0
        %v3612 = vsel %vm3611, %v3610, 0
        %v3613 = vshrl.u32 %v3612, 5
        %v3614 = vand.u32 %v3612, 31
        %v3615 = vsub.s32 32, %v3614
        %v3616 = vshrl.u32 683565275, %v3615
        %v3617 = vshll.u32 683565275, %v3614
        %v3618 = vshrl.u32 2475754826, %v3615
        %v3619 = vor.u32 %v3617, %v3618
        %v3620 = vshll.u32 2475754826, %v3614
        %v3621 = vshrl.u32 2131351028, %v3615
        %v3622 = vor.u32 %v3620, %v3621
        %v3623 = vshll.u32 2131351028, %v3614
        %v3624 = vshrl.u32 2102212464, %v3615
        %v3625 = vor.u32 %v3623, %v3624
        %v3626 = vshll.u32 2102212464, %v3614
        %v3627 = vshrl.u32 920167782, %v3615
        %v3628 = vor.u32 %v3626, %v3627
        %v3629 = vshll.u32 920167782, %v3614
        %v3630 = vshrl.u32 1326507024, %v3615
        %v3631 = vor.u32 %v3629, %v3630
        %vm3632 = vcmp.lt.s32.totalorder %v3613, 1
        %vm3633 = vcmp.lt.s32.totalorder %v3613, 2
        %vm3634 = vcmp.lt.s32.totalorder %v3613, 3
        %vm3635 = vcmp.lt.s32.totalorder %v3613, 4
        %v3636 = vsel %vm3632, %v3616, %v3619
        %v3637 = vsel %vm3635, %v3625, 2102212464
        %v3638 = vsel %vm3634, %v3622, %v3637
        %v3639 = vsel %vm3633, %v3636, %v3638
        %v3640 = vsel %vm3632, %v3619, %v3622
        %v3641 = vsel %vm3635, %v3628, 920167782
        %v3642 = vsel %vm3634, %v3625, %v3641
        %v3643 = vsel %vm3633, %v3640, %v3642
        %v3644 = vsel %vm3632, %v3622, %v3625
        %v3645 = vsel %vm3635, %v3631, 1326507024
        %v3646 = vsel %vm3634, %v3628, %v3645
        %v3647 = vsel %vm3633, %v3644, %v3646
        %v3648 = vshll.u32 %v3608, 8
        %v3649 = vmul.u32.u64.compose %v3648, %v3647
        %v3650 = vextract.low.u32 %v3649
        %v3651 = vextract.high.u32 %v3649
        %v3652 = vmul.u32.u64.compose %v3648, %v3643
        %v3653 = vextract.low.u32 %v3652
        %v3654 = vextract.high.u32 %v3652
        %v3655 = vmul.u32 %v3648, %v3639
        %v3656 = vadd.s32 %v3651, %v3653
        %vm3657 = vc.u32 %v3651, %v3653
        %v3658 = vadd.s32 %v3654, 1
        %v3659 = vsel %vm3657, %v3658, %v3654
        %v3660 = vadd.s32 %v3655, %v3659
        %v3661 = vadd.s32 %v3660, 536870912
        %v3662 = vshrl.u32 %v3661, 30
        %v3663 = vshll.u32 %v3662, 30
        %v3664 = vsub.s32 %v3660, %v3663
        %vm3665 = vcmp.lt.s32.totalorder %v3664, 0
        %v3666 = vsub.s32 0, %v3664
        %v3667 = vsel %vm3665, %v3666, %v3664
        %v3668 = vclz %v3667
        %v3669 = vsub.s32 %v3668, 2
        %vm3670 = vcmp.gt.s32.totalorder 0, %v3669
        %v3671 = vsel %vm3670, 0, %v3669
        %v3672 = vsub.s32 32, %v3671
        %v3673 = vshll.u32 %v3664, %v3671
        %v3674 = vshrl.u32 %v3656, %v3672
        %v3675 = vor.u32 %v3673, %v3674
        %v3676 = vsub.s32 4294967266, %v3671
        %v3677 = vadd.s32 %v3676, 127
        %v3678 = vshll.u32 %v3677, 23
        %v3679 = vor.u32 4788187, %v3678
        %v3680 = vand.u32 2147483647, %v3679
        %v3682 = vcvt.s32.f32 %v3675
        %v3683 = vmul.f32 %v3682, %v3680
        %v3684 = vxor.u32 %v3683, 2147483648
        %v3685 = vsel %vm3602, %v3684, %v3683
        %v3686 = vsub.s32 4, %v3662
        %v3687 = vsel %vm3602, %v3686, %v3662
        %v3688 = vsel %vm3601, %v3390, %v3685
        %v3689 = vsel %vm3601, 0, %v3687
        %v3690 = vcosq.f32.pop %v3688
        %v3691 = vsinq.f32.pop %v3688
        %vm3692 = vweird.f32 %v3390
        %v3693 = vadd.s32 %v3689, 3
        %v3694 = vand.u32 %v3693, 3
        %vm3695 = vcmp.lt.s32.totalorder %v3694, 2
        %vm3696 = vcmp.eq.s32.totalorder %v3694, 0
        %v3697 = vxor.u32 %v3691, 2147483648
        %v3698 = vsel %vm3696, %v3690, %v3697
        %vm3699 = vcmp.eq.s32.totalorder %v3694, 2
        %v3700 = vxor.u32 %v3690, 2147483648
        %v3701 = vsel %vm3699, %v3700, %v3691
        %v3702 = vsel %vm3695, %v3698, %v3701
        %v3703 = vsel %vm3692, nan, %v3702
        %v3704 = vand.u32 2147483647, %v3391
        %vm3705 = vcmp.le.f32.partialorder %v3704, 0.7853982
        %vm3706 = vcmp.lt.s32.totalorder %v3391, 0
        %v3707 = vand.u32 %v3391, 2139095040
        %v3708 = vshrl.u32 %v3707, 23
        %v3709 = vsub.s32 %v3708, 127
        %v3710 = vand.u32 2147483647, %v3391
        %v3711 = vand.u32 %v3710, 8388607
        %v3712 = vor.u32 %v3711, 8388608
        %v3713 = vsub.s32 0, %v3712
        %v3714 = vadd.s32 %v3709, 1
        %vm3715 = vcmp.gt.s32.totalorder %v3714, 0
        %v3716 = vsel %vm3715, %v3714, 0
        %v3717 = vshrl.u32 %v3716, 5
        %v3718 = vand.u32 %v3716, 31
        %v3719 = vsub.s32 32, %v3718
        %v3720 = vshrl.u32 683565275, %v3719
        %v3721 = vshll.u32 683565275, %v3718
        %v3722 = vshrl.u32 2475754826, %v3719
        %v3723 = vor.u32 %v3721, %v3722
        %v3724 = vshll.u32 2475754826, %v3718
        %v3725 = vshrl.u32 2131351028, %v3719
        %v3726 = vor.u32 %v3724, %v3725
        %v3727 = vshll.u32 2131351028, %v3718
        %v3728 = vshrl.u32 2102212464, %v3719
        %v3729 = vor.u32 %v3727, %v3728
        %v3730 = vshll.u32 2102212464, %v3718
        %v3731 = vshrl.u32 920167782, %v3719
        %v3732 = vor.u32 %v3730, %v3731
        %v3733 = vshll.u32 920167782, %v3718
        %v3734 = vshrl.u32 1326507024, %v3719
        %v3735 = vor.u32 %v3733, %v3734
        %vm3736 = vcmp.lt.s32.totalorder %v3717, 1
        %vm3737 = vcmp.lt.s32.totalorder %v3717, 2
        %vm3738 = vcmp.lt.s32.totalorder %v3717, 3
        %vm3739 = vcmp.lt.s32.totalorder %v3717, 4
        %v3740 = vsel %vm3736, %v3720, %v3723
        %v3741 = vsel %vm3739, %v3729, 2102212464
        %v3742 = vsel %vm3738, %v3726, %v3741
        %v3743 = vsel %vm3737, %v3740, %v3742
        %v3744 = vsel %vm3736, %v3723, %v3726
        %v3745 = vsel %vm3739, %v3732, 920167782
        %v3746 = vsel %vm3738, %v3729, %v3745
        %v3747 = vsel %vm3737, %v3744, %v3746
        %v3748 = vsel %vm3736, %v3726, %v3729
        %v3749 = vsel %vm3739, %v3735, 1326507024
        %v3750 = vsel %vm3738, %v3732, %v3749
        %v3751 = vsel %vm3737, %v3748, %v3750
        %v3752 = vshll.u32 %v3712, 8
        %v3753 = vmul.u32.u64.compose %v3752, %v3751
        %v3754 = vextract.low.u32 %v3753
        %v3755 = vextract.high.u32 %v3753
        %v3756 = vmul.u32.u64.compose %v3752, %v3747
        %v3757 = vextract.low.u32 %v3756
        %v3758 = vextract.high.u32 %v3756
        %v3759 = vmul.u32 %v3752, %v3743
        %v3760 = vadd.s32 %v3755, %v3757
        %vm3761 = vc.u32 %v3755, %v3757
        %v3762 = vadd.s32 %v3758, 1
        %v3763 = vsel %vm3761, %v3762, %v3758
        %v3764 = vadd.s32 %v3759, %v3763
        %v3765 = vadd.s32 %v3764, 536870912
        %v3766 = vshrl.u32 %v3765, 30
        %v3767 = vshll.u32 %v3766, 30
        %v3768 = vsub.s32 %v3764, %v3767
        %vm3769 = vcmp.lt.s32.totalorder %v3768, 0
        %v3770 = vsub.s32 0, %v3768
        %v3771 = vsel %vm3769, %v3770, %v3768
        %v3772 = vclz %v3771
        %v3773 = vsub.s32 %v3772, 2
        %vm3774 = vcmp.gt.s32.totalorder 0, %v3773
        %v3775 = vsel %vm3774, 0, %v3773
        %v3776 = vsub.s32 32, %v3775
        %v3777 = vshll.u32 %v3768, %v3775
        %v3778 = vshrl.u32 %v3760, %v3776
        %v3779 = vor.u32 %v3777, %v3778
        %v3780 = vsub.s32 4294967266, %v3775
        %v3781 = vadd.s32 %v3780, 127
        %v3782 = vshll.u32 %v3781, 23
        %v3783 = vor.u32 4788187, %v3782
        %v3784 = vand.u32 2147483647, %v3783
        %v3786 = vcvt.s32.f32 %v3779
        %v3787 = vmul.f32 %v3786, %v3784
        %v3788 = vxor.u32 %v3787, 2147483648
        %v3789 = vsel %vm3706, %v3788, %v3787
        %v3790 = vsub.s32 4, %v3766
        %v3791 = vsel %vm3706, %v3790, %v3766
        %v3792 = vsel %vm3705, %v3391, %v3789
        %v3793 = vsel %vm3705, 0, %v3791
        %v3794 = vcosq.f32.pop %v3792
        %v3795 = vsinq.f32.pop %v3792
        %vm3796 = vweird.f32 %v3391
        %v3797 = vadd.s32 %v3793, 3
        %v3798 = vand.u32 %v3797, 3
        %vm3799 = vcmp.lt.s32.totalorder %v3798, 2
        %vm3800 = vcmp.eq.s32.totalorder %v3798, 0
        %v3801 = vxor.u32 %v3795, 2147483648
        %v3802 = vsel %vm3800, %v3794, %v3801
        %vm3803 = vcmp.eq.s32.totalorder %v3798, 2
        %v3804 = vxor.u32 %v3794, 2147483648
        %v3805 = vsel %vm3803, %v3804, %v3795
        %v3806 = vsel %vm3799, %v3802, %v3805
        %v3807 = vsel %vm3796, nan, %v3806
        %v3808 = vstv %s3380
        %v3809 = vmul.f32 %v3808, %v3495
        %v3810 = vmul.f32 %v3808, %v3599
        %v3811 = vmul.f32 %v3808, %v3703
        %v3812 = vmul.f32 %v3808, %v3807
        %s3813 = scalar_lea.vmem %s285, 96 [#allocation2]
        %v3814 = vld [vmem:[%s3813] sm:$0xf]
        %v3815 = vld [vmem:[%s3813 + $0x4] sm:$0xf]
        %v3816 = vld [vmem:[%s3813 + $0x8] sm:$0xf]
        %v3817 = vld [vmem:[%s3813 + $0xc] sm:$0xf]
        %v3818 = vunpack.c.l.bf16 %v3814
        %v3819 = vunpack.c.l.bf16 %v3815
        %v3820 = vunpack.c.l.bf16 %v3816
        %v3821 = vunpack.c.l.bf16 %v3817
        %v3822 = vmul.f32 %v3808, %v3818
        %v3823 = vmul.f32 %v3808, %v3819
        %v3824 = vmul.f32 %v3808, %v3820
        %v3825 = vmul.f32 %v3808, %v3821
        %v3826 = vadd.f32 %v3372, %v3809
        %v3827 = vadd.f32 %v3373, %v3810
        %v3828 = vadd.f32 %v3374, %v3811
        %v3829 = vadd.f32 %v3375, %v3812
        %v3830 = vadd.f32 %v3376, %v3822
        %v3831 = vadd.f32 %v3377, %v3823
        %v3832 = vadd.f32 %v3378, %v3824
        %v3833 = vadd.f32 %v3379, %v3825
        %s3834 = sld [smem:[#allocation7 + $0x7]]
        %v3835 = vmul.f32 %v645, 50.265484
        %v3836 = vmul.f32 %v646, 50.265484
        %v3837 = vmul.f32 %v647, 50.265484
        %v3838 = vmul.f32 %v648, 50.265484
        %s3839 = sld [smem:[#allocation6 + $0x7]]
        %s3840 = smul.f32 %s3839, 6.2831855
        %v3841 = vstv %s3840
        %v3842 = vadd.f32 %v3835, %v3841
        %v3843 = vadd.f32 %v3836, %v3841
        %v3844 = vadd.f32 %v3837, %v3841
        %v3845 = vadd.f32 %v3838, %v3841
        %v3846 = vand.u32 2147483647, %v3842
        %vm3847 = vcmp.le.f32.partialorder %v3846, 0.7853982
        %vm3848 = vcmp.lt.s32.totalorder %v3842, 0
        %v3849 = vand.u32 %v3842, 2139095040
        %v3850 = vshrl.u32 %v3849, 23
        %v3851 = vsub.s32 %v3850, 127
        %v3852 = vand.u32 2147483647, %v3842
        %v3853 = vand.u32 %v3852, 8388607
        %v3854 = vor.u32 %v3853, 8388608
        %v3855 = vsub.s32 0, %v3854
        %v3856 = vadd.s32 %v3851, 1
        %vm3857 = vcmp.gt.s32.totalorder %v3856, 0
        %v3858 = vsel %vm3857, %v3856, 0
        %v3859 = vshrl.u32 %v3858, 5
        %v3860 = vand.u32 %v3858, 31
        %v3861 = vsub.s32 32, %v3860
        %v3862 = vshrl.u32 683565275, %v3861
        %v3863 = vshll.u32 683565275, %v3860
        %v3864 = vshrl.u32 2475754826, %v3861
        %v3865 = vor.u32 %v3863, %v3864
        %v3866 = vshll.u32 2475754826, %v3860
        %v3867 = vshrl.u32 2131351028, %v3861
        %v3868 = vor.u32 %v3866, %v3867
        %v3869 = vshll.u32 2131351028, %v3860
        %v3870 = vshrl.u32 2102212464, %v3861
        %v3871 = vor.u32 %v3869, %v3870
        %v3872 = vshll.u32 2102212464, %v3860
        %v3873 = vshrl.u32 920167782, %v3861
        %v3874 = vor.u32 %v3872, %v3873
        %v3875 = vshll.u32 920167782, %v3860
        %v3876 = vshrl.u32 1326507024, %v3861
        %v3877 = vor.u32 %v3875, %v3876
        %vm3878 = vcmp.lt.s32.totalorder %v3859, 1
        %vm3879 = vcmp.lt.s32.totalorder %v3859, 2
        %vm3880 = vcmp.lt.s32.totalorder %v3859, 3
        %vm3881 = vcmp.lt.s32.totalorder %v3859, 4
        %v3882 = vsel %vm3878, %v3862, %v3865
        %v3883 = vsel %vm3881, %v3871, 2102212464
        %v3884 = vsel %vm3880, %v3868, %v3883
        %v3885 = vsel %vm3879, %v3882, %v3884
        %v3886 = vsel %vm3878, %v3865, %v3868
        %v3887 = vsel %vm3881, %v3874, 920167782
        %v3888 = vsel %vm3880, %v3871, %v3887
        %v3889 = vsel %vm3879, %v3886, %v3888
        %v3890 = vsel %vm3878, %v3868, %v3871
        %v3891 = vsel %vm3881, %v3877, 1326507024
        %v3892 = vsel %vm3880, %v3874, %v3891
        %v3893 = vsel %vm3879, %v3890, %v3892
        %v3894 = vshll.u32 %v3854, 8
        %v3895 = vmul.u32.u64.compose %v3894, %v3893
        %v3896 = vextract.low.u32 %v3895
        %v3897 = vextract.high.u32 %v3895
        %v3898 = vmul.u32.u64.compose %v3894, %v3889
        %v3899 = vextract.low.u32 %v3898
        %v3900 = vextract.high.u32 %v3898
        %v3901 = vmul.u32 %v3894, %v3885
        %v3902 = vadd.s32 %v3897, %v3899
        %vm3903 = vc.u32 %v3897, %v3899
        %v3904 = vadd.s32 %v3900, 1
        %v3905 = vsel %vm3903, %v3904, %v3900
        %v3906 = vadd.s32 %v3901, %v3905
        %v3907 = vadd.s32 %v3906, 536870912
        %v3908 = vshrl.u32 %v3907, 30
        %v3909 = vshll.u32 %v3908, 30
        %v3910 = vsub.s32 %v3906, %v3909
        %vm3911 = vcmp.lt.s32.totalorder %v3910, 0
        %v3912 = vsub.s32 0, %v3910
        %v3913 = vsel %vm3911, %v3912, %v3910
        %v3914 = vclz %v3913
        %v3915 = vsub.s32 %v3914, 2
        %vm3916 = vcmp.gt.s32.totalorder 0, %v3915
        %v3917 = vsel %vm3916, 0, %v3915
        %v3918 = vsub.s32 32, %v3917
        %v3919 = vshll.u32 %v3910, %v3917
        %v3920 = vshrl.u32 %v3902, %v3918
        %v3921 = vor.u32 %v3919, %v3920
        %v3922 = vsub.s32 4294967266, %v3917
        %v3923 = vadd.s32 %v3922, 127
        %v3924 = vshll.u32 %v3923, 23
        %v3925 = vor.u32 4788187, %v3924
        %v3926 = vand.u32 2147483647, %v3925
        %v3928 = vcvt.s32.f32 %v3921
        %v3929 = vmul.f32 %v3928, %v3926
        %v3930 = vxor.u32 %v3929, 2147483648
        %v3931 = vsel %vm3848, %v3930, %v3929
        %v3932 = vsub.s32 4, %v3908
        %v3933 = vsel %vm3848, %v3932, %v3908
        %v3934 = vsel %vm3847, %v3842, %v3931
        %v3935 = vsel %vm3847, 0, %v3933
        %v3936 = vcosq.f32.pop %v3934
        %v3937 = vsinq.f32.pop %v3934
        %vm3938 = vweird.f32 %v3842
        %v3939 = vadd.s32 %v3935, 3
        %v3940 = vand.u32 %v3939, 3
        %vm3941 = vcmp.lt.s32.totalorder %v3940, 2
        %vm3942 = vcmp.eq.s32.totalorder %v3940, 0
        %v3943 = vxor.u32 %v3937, 2147483648
        %v3944 = vsel %vm3942, %v3936, %v3943
        %vm3945 = vcmp.eq.s32.totalorder %v3940, 2
        %v3946 = vxor.u32 %v3936, 2147483648
        %v3947 = vsel %vm3945, %v3946, %v3937
        %v3948 = vsel %vm3941, %v3944, %v3947
        %v3949 = vsel %vm3938, nan, %v3948
        %v3950 = vand.u32 2147483647, %v3843
        %vm3951 = vcmp.le.f32.partialorder %v3950, 0.7853982
        %vm3952 = vcmp.lt.s32.totalorder %v3843, 0
        %v3953 = vand.u32 %v3843, 2139095040
        %v3954 = vshrl.u32 %v3953, 23
        %v3955 = vsub.s32 %v3954, 127
        %v3956 = vand.u32 2147483647, %v3843
        %v3957 = vand.u32 %v3956, 8388607
        %v3958 = vor.u32 %v3957, 8388608
        %v3959 = vsub.s32 0, %v3958
        %v3960 = vadd.s32 %v3955, 1
        %vm3961 = vcmp.gt.s32.totalorder %v3960, 0
        %v3962 = vsel %vm3961, %v3960, 0
        %v3963 = vshrl.u32 %v3962, 5
        %v3964 = vand.u32 %v3962, 31
        %v3965 = vsub.s32 32, %v3964
        %v3966 = vshrl.u32 683565275, %v3965
        %v3967 = vshll.u32 683565275, %v3964
        %v3968 = vshrl.u32 2475754826, %v3965
        %v3969 = vor.u32 %v3967, %v3968
        %v3970 = vshll.u32 2475754826, %v3964
        %v3971 = vshrl.u32 2131351028, %v3965
        %v3972 = vor.u32 %v3970, %v3971
        %v3973 = vshll.u32 2131351028, %v3964
        %v3974 = vshrl.u32 2102212464, %v3965
        %v3975 = vor.u32 %v3973, %v3974
        %v3976 = vshll.u32 2102212464, %v3964
        %v3977 = vshrl.u32 920167782, %v3965
        %v3978 = vor.u32 %v3976, %v3977
        %v3979 = vshll.u32 920167782, %v3964
        %v3980 = vshrl.u32 1326507024, %v3965
        %v3981 = vor.u32 %v3979, %v3980
        %vm3982 = vcmp.lt.s32.totalorder %v3963, 1
        %vm3983 = vcmp.lt.s32.totalorder %v3963, 2
        %vm3984 = vcmp.lt.s32.totalorder %v3963, 3
        %vm3985 = vcmp.lt.s32.totalorder %v3963, 4
        %v3986 = vsel %vm3982, %v3966, %v3969
        %v3987 = vsel %vm3985, %v3975, 2102212464
        %v3988 = vsel %vm3984, %v3972, %v3987
        %v3989 = vsel %vm3983, %v3986, %v3988
        %v3990 = vsel %vm3982, %v3969, %v3972
        %v3991 = vsel %vm3985, %v3978, 920167782
        %v3992 = vsel %vm3984, %v3975, %v3991
        %v3993 = vsel %vm3983, %v3990, %v3992
        %v3994 = vsel %vm3982, %v3972, %v3975
        %v3995 = vsel %vm3985, %v3981, 1326507024
        %v3996 = vsel %vm3984, %v3978, %v3995
        %v3997 = vsel %vm3983, %v3994, %v3996
        %v3998 = vshll.u32 %v3958, 8
        %v3999 = vmul.u32.u64.compose %v3998, %v3997
        %v4000 = vextract.low.u32 %v3999
        %v4001 = vextract.high.u32 %v3999
        %v4002 = vmul.u32.u64.compose %v3998, %v3993
        %v4003 = vextract.low.u32 %v4002
        %v4004 = vextract.high.u32 %v4002
        %v4005 = vmul.u32 %v3998, %v3989
        %v4006 = vadd.s32 %v4001, %v4003
        %vm4007 = vc.u32 %v4001, %v4003
        %v4008 = vadd.s32 %v4004, 1
        %v4009 = vsel %vm4007, %v4008, %v4004
        %v4010 = vadd.s32 %v4005, %v4009
        %v4011 = vadd.s32 %v4010, 536870912
        %v4012 = vshrl.u32 %v4011, 30
        %v4013 = vshll.u32 %v4012, 30
        %v4014 = vsub.s32 %v4010, %v4013
        %vm4015 = vcmp.lt.s32.totalorder %v4014, 0
        %v4016 = vsub.s32 0, %v4014
        %v4017 = vsel %vm4015, %v4016, %v4014
        %v4018 = vclz %v4017
        %v4019 = vsub.s32 %v4018, 2
        %vm4020 = vcmp.gt.s32.totalorder 0, %v4019
        %v4021 = vsel %vm4020, 0, %v4019
        %v4022 = vsub.s32 32, %v4021
        %v4023 = vshll.u32 %v4014, %v4021
        %v4024 = vshrl.u32 %v4006, %v4022
        %v4025 = vor.u32 %v4023, %v4024
        %v4026 = vsub.s32 4294967266, %v4021
        %v4027 = vadd.s32 %v4026, 127
        %v4028 = vshll.u32 %v4027, 23
        %v4029 = vor.u32 4788187, %v4028
        %v4030 = vand.u32 2147483647, %v4029
        %v4032 = vcvt.s32.f32 %v4025
        %v4033 = vmul.f32 %v4032, %v4030
        %v4034 = vxor.u32 %v4033, 2147483648
        %v4035 = vsel %vm3952, %v4034, %v4033
        %v4036 = vsub.s32 4, %v4012
        %v4037 = vsel %vm3952, %v4036, %v4012
        %v4038 = vsel %vm3951, %v3843, %v4035
        %v4039 = vsel %vm3951, 0, %v4037
        %v4040 = vcosq.f32.pop %v4038
        %v4041 = vsinq.f32.pop %v4038
        %vm4042 = vweird.f32 %v3843
        %v4043 = vadd.s32 %v4039, 3
        %v4044 = vand.u32 %v4043, 3
        %vm4045 = vcmp.lt.s32.totalorder %v4044, 2
        %vm4046 = vcmp.eq.s32.totalorder %v4044, 0
        %v4047 = vxor.u32 %v4041, 2147483648
        %v4048 = vsel %vm4046, %v4040, %v4047
        %vm4049 = vcmp.eq.s32.totalorder %v4044, 2
        %v4050 = vxor.u32 %v4040, 2147483648
        %v4051 = vsel %vm4049, %v4050, %v4041
        %v4052 = vsel %vm4045, %v4048, %v4051
        %v4053 = vsel %vm4042, nan, %v4052
        %v4054 = vand.u32 2147483647, %v3844
        %vm4055 = vcmp.le.f32.partialorder %v4054, 0.7853982
        %vm4056 = vcmp.lt.s32.totalorder %v3844, 0
        %v4057 = vand.u32 %v3844, 2139095040
        %v4058 = vshrl.u32 %v4057, 23
        %v4059 = vsub.s32 %v4058, 127
        %v4060 = vand.u32 2147483647, %v3844
        %v4061 = vand.u32 %v4060, 8388607
        %v4062 = vor.u32 %v4061, 8388608
        %v4063 = vsub.s32 0, %v4062
        %v4064 = vadd.s32 %v4059, 1
        %vm4065 = vcmp.gt.s32.totalorder %v4064, 0
        %v4066 = vsel %vm4065, %v4064, 0
        %v4067 = vshrl.u32 %v4066, 5
        %v4068 = vand.u32 %v4066, 31
        %v4069 = vsub.s32 32, %v4068
        %v4070 = vshrl.u32 683565275, %v4069
        %v4071 = vshll.u32 683565275, %v4068
        %v4072 = vshrl.u32 2475754826, %v4069
        %v4073 = vor.u32 %v4071, %v4072
        %v4074 = vshll.u32 2475754826, %v4068
        %v4075 = vshrl.u32 2131351028, %v4069
        %v4076 = vor.u32 %v4074, %v4075
        %v4077 = vshll.u32 2131351028, %v4068
        %v4078 = vshrl.u32 2102212464, %v4069
        %v4079 = vor.u32 %v4077, %v4078
        %v4080 = vshll.u32 2102212464, %v4068
        %v4081 = vshrl.u32 920167782, %v4069
        %v4082 = vor.u32 %v4080, %v4081
        %v4083 = vshll.u32 920167782, %v4068
        %v4084 = vshrl.u32 1326507024, %v4069
        %v4085 = vor.u32 %v4083, %v4084
        %vm4086 = vcmp.lt.s32.totalorder %v4067, 1
        %vm4087 = vcmp.lt.s32.totalorder %v4067, 2
        %vm4088 = vcmp.lt.s32.totalorder %v4067, 3
        %vm4089 = vcmp.lt.s32.totalorder %v4067, 4
        %v4090 = vsel %vm4086, %v4070, %v4073
        %v4091 = vsel %vm4089, %v4079, 2102212464
        %v4092 = vsel %vm4088, %v4076, %v4091
        %v4093 = vsel %vm4087, %v4090, %v4092
        %v4094 = vsel %vm4086, %v4073, %v4076
        %v4095 = vsel %vm4089, %v4082, 920167782
        %v4096 = vsel %vm4088, %v4079, %v4095
        %v4097 = vsel %vm4087, %v4094, %v4096
        %v4098 = vsel %vm4086, %v4076, %v4079
        %v4099 = vsel %vm4089, %v4085, 1326507024
        %v4100 = vsel %vm4088, %v4082, %v4099
        %v4101 = vsel %vm4087, %v4098, %v4100
        %v4102 = vshll.u32 %v4062, 8
        %v4103 = vmul.u32.u64.compose %v4102, %v4101
        %v4104 = vextract.low.u32 %v4103
        %v4105 = vextract.high.u32 %v4103
        %v4106 = vmul.u32.u64.compose %v4102, %v4097
        %v4107 = vextract.low.u32 %v4106
        %v4108 = vextract.high.u32 %v4106
        %v4109 = vmul.u32 %v4102, %v4093
        %v4110 = vadd.s32 %v4105, %v4107
        %vm4111 = vc.u32 %v4105, %v4107
        %v4112 = vadd.s32 %v4108, 1
        %v4113 = vsel %vm4111, %v4112, %v4108
        %v4114 = vadd.s32 %v4109, %v4113
        %v4115 = vadd.s32 %v4114, 536870912
        %v4116 = vshrl.u32 %v4115, 30
        %v4117 = vshll.u32 %v4116, 30
        %v4118 = vsub.s32 %v4114, %v4117
        %vm4119 = vcmp.lt.s32.totalorder %v4118, 0
        %v4120 = vsub.s32 0, %v4118
        %v4121 = vsel %vm4119, %v4120, %v4118
        %v4122 = vclz %v4121
        %v4123 = vsub.s32 %v4122, 2
        %vm4124 = vcmp.gt.s32.totalorder 0, %v4123
        %v4125 = vsel %vm4124, 0, %v4123
        %v4126 = vsub.s32 32, %v4125
        %v4127 = vshll.u32 %v4118, %v4125
        %v4128 = vshrl.u32 %v4110, %v4126
        %v4129 = vor.u32 %v4127, %v4128
        %v4130 = vsub.s32 4294967266, %v4125
        %v4131 = vadd.s32 %v4130, 127
        %v4132 = vshll.u32 %v4131, 23
        %v4133 = vor.u32 4788187, %v4132
        %v4134 = vand.u32 2147483647, %v4133
        %v4136 = vcvt.s32.f32 %v4129
        %v4137 = vmul.f32 %v4136, %v4134
        %v4138 = vxor.u32 %v4137, 2147483648
        %v4139 = vsel %vm4056, %v4138, %v4137
        %v4140 = vsub.s32 4, %v4116
        %v4141 = vsel %vm4056, %v4140, %v4116
        %v4142 = vsel %vm4055, %v3844, %v4139
        %v4143 = vsel %vm4055, 0, %v4141
        %v4144 = vcosq.f32.pop %v4142
        %v4145 = vsinq.f32.pop %v4142
        %vm4146 = vweird.f32 %v3844
        %v4147 = vadd.s32 %v4143, 3
        %v4148 = vand.u32 %v4147, 3
        %vm4149 = vcmp.lt.s32.totalorder %v4148, 2
        %vm4150 = vcmp.eq.s32.totalorder %v4148, 0
        %v4151 = vxor.u32 %v4145, 2147483648
        %v4152 = vsel %vm4150, %v4144, %v4151
        %vm4153 = vcmp.eq.s32.totalorder %v4148, 2
        %v4154 = vxor.u32 %v4144, 2147483648
        %v4155 = vsel %vm4153, %v4154, %v4145
        %v4156 = vsel %vm4149, %v4152, %v4155
        %v4157 = vsel %vm4146, nan, %v4156
        %v4158 = vand.u32 2147483647, %v3845
        %vm4159 = vcmp.le.f32.partialorder %v4158, 0.7853982
        %vm4160 = vcmp.lt.s32.totalorder %v3845, 0
        %v4161 = vand.u32 %v3845, 2139095040
        %v4162 = vshrl.u32 %v4161, 23
        %v4163 = vsub.s32 %v4162, 127
        %v4164 = vand.u32 2147483647, %v3845
        %v4165 = vand.u32 %v4164, 8388607
        %v4166 = vor.u32 %v4165, 8388608
        %v4167 = vsub.s32 0, %v4166
        %v4168 = vadd.s32 %v4163, 1
        %vm4169 = vcmp.gt.s32.totalorder %v4168, 0
        %v4170 = vsel %vm4169, %v4168, 0
        %v4171 = vshrl.u32 %v4170, 5
        %v4172 = vand.u32 %v4170, 31
        %v4173 = vsub.s32 32, %v4172
        %v4174 = vshrl.u32 683565275, %v4173
        %v4175 = vshll.u32 683565275, %v4172
        %v4176 = vshrl.u32 2475754826, %v4173
        %v4177 = vor.u32 %v4175, %v4176
        %v4178 = vshll.u32 2475754826, %v4172
        %v4179 = vshrl.u32 2131351028, %v4173
        %v4180 = vor.u32 %v4178, %v4179
        %v4181 = vshll.u32 2131351028, %v4172
        %v4182 = vshrl.u32 2102212464, %v4173
        %v4183 = vor.u32 %v4181, %v4182
        %v4184 = vshll.u32 2102212464, %v4172
        %v4185 = vshrl.u32 920167782, %v4173
        %v4186 = vor.u32 %v4184, %v4185
        %v4187 = vshll.u32 920167782, %v4172
        %v4188 = vshrl.u32 1326507024, %v4173
        %v4189 = vor.u32 %v4187, %v4188
        %vm4190 = vcmp.lt.s32.totalorder %v4171, 1
        %vm4191 = vcmp.lt.s32.totalorder %v4171, 2
        %vm4192 = vcmp.lt.s32.totalorder %v4171, 3
        %vm4193 = vcmp.lt.s32.totalorder %v4171, 4
        %v4194 = vsel %vm4190, %v4174, %v4177
        %v4195 = vsel %vm4193, %v4183, 2102212464
        %v4196 = vsel %vm4192, %v4180, %v4195
        %v4197 = vsel %vm4191, %v4194, %v4196
        %v4198 = vsel %vm4190, %v4177, %v4180
        %v4199 = vsel %vm4193, %v4186, 920167782
        %v4200 = vsel %vm4192, %v4183, %v4199
        %v4201 = vsel %vm4191, %v4198, %v4200
        %v4202 = vsel %vm4190, %v4180, %v4183
        %v4203 = vsel %vm4193, %v4189, 1326507024
        %v4204 = vsel %vm4192, %v4186, %v4203
        %v4205 = vsel %vm4191, %v4202, %v4204
        %v4206 = vshll.u32 %v4166, 8
        %v4207 = vmul.u32.u64.compose %v4206, %v4205
        %v4208 = vextract.low.u32 %v4207
        %v4209 = vextract.high.u32 %v4207
        %v4210 = vmul.u32.u64.compose %v4206, %v4201
        %v4211 = vextract.low.u32 %v4210
        %v4212 = vextract.high.u32 %v4210
        %v4213 = vmul.u32 %v4206, %v4197
        %v4214 = vadd.s32 %v4209, %v4211
        %vm4215 = vc.u32 %v4209, %v4211
        %v4216 = vadd.s32 %v4212, 1
        %v4217 = vsel %vm4215, %v4216, %v4212
        %v4218 = vadd.s32 %v4213, %v4217
        %v4219 = vadd.s32 %v4218, 536870912
        %v4220 = vshrl.u32 %v4219, 30
        %v4221 = vshll.u32 %v4220, 30
        %v4222 = vsub.s32 %v4218, %v4221
        %vm4223 = vcmp.lt.s32.totalorder %v4222, 0
        %v4224 = vsub.s32 0, %v4222
        %v4225 = vsel %vm4223, %v4224, %v4222
        %v4226 = vclz %v4225
        %v4227 = vsub.s32 %v4226, 2
        %vm4228 = vcmp.gt.s32.totalorder 0, %v4227
        %v4229 = vsel %vm4228, 0, %v4227
        %v4230 = vsub.s32 32, %v4229
        %v4231 = vshll.u32 %v4222, %v4229
        %v4232 = vshrl.u32 %v4214, %v4230
        %v4233 = vor.u32 %v4231, %v4232
        %v4234 = vsub.s32 4294967266, %v4229
        %v4235 = vadd.s32 %v4234, 127
        %v4236 = vshll.u32 %v4235, 23
        %v4237 = vor.u32 4788187, %v4236
        %v4238 = vand.u32 2147483647, %v4237
        %v4240 = vcvt.s32.f32 %v4233
        %v4241 = vmul.f32 %v4240, %v4238
        %v4242 = vxor.u32 %v4241, 2147483648
        %v4243 = vsel %vm4160, %v4242, %v4241
        %v4244 = vsub.s32 4, %v4220
        %v4245 = vsel %vm4160, %v4244, %v4220
        %v4246 = vsel %vm4159, %v3845, %v4243
        %v4247 = vsel %vm4159, 0, %v4245
        %v4248 = vcosq.f32.pop %v4246
        %v4249 = vsinq.f32.pop %v4246
        %vm4250 = vweird.f32 %v3845
        %v4251 = vadd.s32 %v4247, 3
        %v4252 = vand.u32 %v4251, 3
        %vm4253 = vcmp.lt.s32.totalorder %v4252, 2
        %vm4254 = vcmp.eq.s32.totalorder %v4252, 0
        %v4255 = vxor.u32 %v4249, 2147483648
        %v4256 = vsel %vm4254, %v4248, %v4255
        %vm4257 = vcmp.eq.s32.totalorder %v4252, 2
        %v4258 = vxor.u32 %v4248, 2147483648
        %v4259 = vsel %vm4257, %v4258, %v4249
        %v4260 = vsel %vm4253, %v4256, %v4259
        %v4261 = vsel %vm4250, nan, %v4260
        %v4262 = vstv %s3834
        %v4263 = vmul.f32 %v4262, %v3949
        %v4264 = vmul.f32 %v4262, %v4053
        %v4265 = vmul.f32 %v4262, %v4157
        %v4266 = vmul.f32 %v4262, %v4261
        %s4267 = scalar_lea.vmem %s285, 112 [#allocation2]
        %v4268 = vld [vmem:[%s4267] sm:$0xf]
        %v4269 = vld [vmem:[%s4267 + $0x4] sm:$0xf]
        %v4270 = vld [vmem:[%s4267 + $0x8] sm:$0xf]
        %v4271 = vld [vmem:[%s4267 + $0xc] sm:$0xf]
        %v4272 = vunpack.c.l.bf16 %v4268
        %v4273 = vunpack.c.l.bf16 %v4269
        %v4274 = vunpack.c.l.bf16 %v4270
        %v4275 = vunpack.c.l.bf16 %v4271
        %v4276 = vmul.f32 %v4262, %v4272
        %v4277 = vmul.f32 %v4262, %v4273
        %v4278 = vmul.f32 %v4262, %v4274
        %v4279 = vmul.f32 %v4262, %v4275
        %v4280 = vadd.f32 %v3826, %v4263
        %v4281 = vadd.f32 %v3827, %v4264
        %v4282 = vadd.f32 %v3828, %v4265
        %v4283 = vadd.f32 %v3829, %v4266
        %v4284 = vadd.f32 %v3830, %v4276
        %v4285 = vadd.f32 %v3831, %v4277
        %v4286 = vadd.f32 %v3832, %v4278
        %v4287 = vadd.f32 %v3833, %v4279
        %v4288 = vmul.f32 %v657, %v4280
        %v4289 = vmul.f32 %v658, %v4281
        %v4290 = vmul.f32 %v659, %v4282
        %v4291 = vmul.f32 %v660, %v4283
        %v4292 = vmul.f32 %v661, %v4284
        %v4293 = vmul.f32 %v662, %v4285
        %v4294 = vmul.f32 %v663, %v4286
        %v4295 = vmul.f32 %v664, %v4287
        %v4296 = vadd.f32 %v4288, %v4292
        %v4297 = vadd.f32 %v4289, %v4293
        %v4298 = vadd.f32 %v4290, %v4294
        %v4299 = vadd.f32 %v4291, %v4295
        %4300 = vst [vmem:[%s338] sm:$0xff] %v4296
        %4301 = vst [vmem:[%s338 + $0x8] sm:$0xff] %v4297
        %4302 = vst [vmem:[%s338 + $0x10] sm:$0xff] %v4298
        %4303 = vst [vmem:[%s338 + $0x18] sm:$0xff] %v4299
        %s4304 = sand.u32 %s172, 1
        %s4305 = scalar_lea.sflag [#allocation4], %s4304
        %s4306 = sand.u32 %s172, 1
        %s4307 = smul.addr %s4306, 32
        %s4308 = scalar_lea.vmem [#allocation9], %s4307
        // Predicated region
        $region53: #{tpu_custom_call.1} parent=39 // pred_check
          %p4309 = pneg %p182
        $region54: #{tpu_custom_call.1} parent=39 // pred_check_branch
          %4311 = sbr.rel (%p4309) target = $region56
        $region55: #{tpu_custom_call.1} parent=39 // pred_region
          %s4313 = ssub.s32 512, 512
          %4314 = vsyncadd %s4305, %s4313
          %s4315 = smul.addr %s29, 4
          %s4316 = smul.addr %s28, 4
          %s4317 = sadd.s32 %s4315, %s4316
          %s4318 = smul.addr %s4317, 128
          %s4319 = scalar_lea.hbm %s5, %s4318
          %s4320 = sshll.u32 %s4308, 4
          %s4321 = int_to_ptr.vmem [resolvable:$true] %s4320
          %4326 = dma.vmem_to_hbm [thread:$0]  %s4321, 512, %s4319, %s4305, 128, 128, 8
        $region56: #{tpu_custom_call.1} parent=39 // pred_fallthru
          _
      $region40: #{tpu_custom_call.1} parent=5 // pred_fallthru
        _
      %p4327 = scmp.le.s32.totalorder 2, %s19
      // Predicated region
      $region57: #{tpu_custom_call.1} parent=5 // pred_check
        %p4328 = pneg %p4327
      $region58: #{tpu_custom_call.1} parent=5 // pred_check_branch
        %4330 = sbr.rel (%p4328) target = $region60
      $region59: #{tpu_custom_call.1} parent=5 // pred_region
        %s4331 = ssub.s32 %s19, 2
        // Predicated region
        $region61: #{tpu_custom_call.1} parent=59 // pred_check
          %p4332 = pneg %p188
        $region62: #{tpu_custom_call.1} parent=59 // pred_check_branch
          %4334 = sbr.rel (%p4332) target = $region64
        $region63: #{tpu_custom_call.1} parent=59 // pred_region
          %s4335 = sand.u32 %s173, 1
          %s4336 = scalar_lea.sflag [#allocation4], %s4335
          %s4337 = sand.u32 %s173, 1
          %s4338 = smul.addr %s4337, 32
          %s4339 = scalar_lea.vmem [#allocation9], %s4338
          %4340 = dma.done %s4336, 512
        $region64: #{tpu_custom_call.1} parent=59 // pred_fallthru
          _
      $region60: #{tpu_custom_call.1} parent=5 // pred_fallthru
        _
    $region6: #{tpu_custom_call.1} parent=1 // loop_footer
      %s23 = sadd.s32 1, %s19
    $region7: #{tpu_custom_call.1} parent=1 // loop_footer_branch
      %18 = sbr.rel target = $region3
    $region8: #{tpu_custom_call.1} parent=1 // loop_exit
      _
    %4341 = vsyncpa [#allocation3], 1
    %s4342 = scalar_lea.sflag [#allocation3], 1
    %4343 = vsyncpa %s4342, 1
    %4344 = vsyncpa [#allocation4], 1
    %s4345 = scalar_lea.sflag [#allocation4], 1
    %4346 = vsyncpa %s4345, 1
    %4347 = vsyncpa [#allocation5], 1
    %s4348 = scalar_lea.sflag [#allocation5], 1
    %4349 = vsyncpa %s4348, 1
    %4350 = vsyncpa [#allocation8], 1

</llo_original>
